<compile_context>
chip_gen: v5e
topology: v5e:2x2
jax: 0.10.0
libtpu: 0.0.40
codegen_flags: <defaults>
</compile_context>

<pallas_src>
import functools

import jax
import jax.numpy as jnp
from jax.experimental import pallas as pl
from jax.experimental.pallas import tpu as pltpu


def _pick_vmem_limit():
    # Size the per-call VMEM budget from the actual chip:
    #   v7x: 64 MiB physical -> ~48 MiB;  v5e/v6e: 128 MiB -> ~96 MiB.
    try:
        info = pltpu.get_tpu_info()
        cap = getattr(info, "vmem_capacity_bytes", None)
        if cap:
            return int(min(cap * 3 // 4, 100 * 1024 * 1024))
    except Exception:
        pass
    return 48 * 1024 * 1024


_VMEM_LIMIT = _pick_vmem_limit()


# ----------------------------------------------------------------------------
# In-kernel helpers
# ----------------------------------------------------------------------------
def _layernorm(x, g, b, eps=1e-5):
    # x: (rows, D); g, b: (1, D) -- matches torch.nn.LayerNorm(D, eps=1e-5)
    mu = jnp.mean(x, axis=-1, keepdims=True)
    var = jnp.mean((x - mu) ** 2, axis=-1, keepdims=True)
    return (x - mu) * jax.lax.rsqrt(var + eps) * g + b


# ----------------------------------------------------------------------------
# Kernel 1: fused transformer tower (CLIP ResidualAttentionBlock x n_layers)
#   grid = (cdiv(B, Bb), n_layers); batch-block axis "parallel", layers "arbitrary".
#   Stacked per-layer weights stream through VMEM (auto double-buffered); the
#   residual stream for the Bb-row batch block stays resident in the output block
#   across the layer axis (input/output HBM buffers aliased).
# ----------------------------------------------------------------------------
def tower_layer_kernel(x_ref, ln1g_ref, ln1b_ref, wqkv_ref, bqkv_ref,
                       wo_ref, bo_ref, ln2g_ref, ln2b_ref,
                       w1_ref, b1_ref, w2_ref, b2_ref,
                       o_ref, *, num_heads, causal, valid_len):
    layer = pl.program_id(1)

    @pl.when(layer == 0)
    def _():
        o_ref[...] = x_ref[...]            # load residual stream for this batch block

    x = o_ref[...]                         # (Bb, L, D) f32 residual stream (resident)
    Bb, L, D = x.shape
    hd = D // num_heads
    scale = 1.0 / float(hd) ** 0.5
    R = Bb * L

    x2 = x.reshape(R, D)                   # L is padded to a multiple of 8 -> cheap relayout

    # ---- multi-head self-attention on ln_1(x) ----
    h = _layernorm(x2, ln1g_ref[...], ln1b_ref[...])
    qkv = jnp.dot(h.astype(jnp.bfloat16), wqkv_ref[...],
                  preferred_element_type=jnp.float32) + bqkv_ref[...]   # (R, 3D) f32
    q3 = (qkv[:, :D] * scale).reshape(Bb, L, D).astype(jnp.bfloat16)    # fold 1/sqrt(hd) into q
    k3 = qkv[:, D:2 * D].reshape(Bb, L, D).astype(jnp.bfloat16)
    v3 = qkv[:, 2 * D:].reshape(Bb, L, D).astype(jnp.bfloat16)

    bias = None
    if causal or valid_len < L:            # generated in-kernel, no DMA
        rows = jax.lax.broadcasted_iota(jnp.int32, (L, L), 0)
        cols = jax.lax.broadcasted_iota(jnp.int32, (L, L), 1)
        ok = cols < valid_len              # key-padding mask for padded sequence length
        if causal:
            ok = jnp.logical_and(ok, cols <= rows)
        bias = jnp.where(ok, 0.0, -1e9).astype(jnp.float32)[None]       # (1, L, L)

    # Per-head attention, batched over the Bb rows (single-batch-dim einsums).
    ctx_parts = []
    for hh in range(num_heads):            # static unroll (num_heads is a python int)
        lo = hh * hd
        s = jnp.einsum('bqd,bkd->bqk', q3[:, :, lo:lo + hd], k3[:, :, lo:lo + hd],
                       preferred_element_type=jnp.float32)              # (Bb, L, L) f32
        if bias is not None:
            s = s + bias
        m = jnp.max(s, axis=-1, keepdims=True)
        e = jnp.exp(s - m)
        p = e / jnp.sum(e, axis=-1, keepdims=True)                      # exact divide
        ctx_parts.append(jnp.einsum('bqk,bkd->bqd', p.astype(jnp.bfloat16),
                                    v3[:, :, lo:lo + hd],
                                    preferred_element_type=jnp.float32))  # (Bb, L, hd)
    # Lane-concat the heads and do ONE full-D-deep output projection on the MXU.
    ctx = jnp.concatenate(ctx_parts, axis=-1).reshape(R, D)
    attn = jnp.dot(ctx.astype(jnp.bfloat16), wo_ref[...],
                   preferred_element_type=jnp.float32) + bo_ref[...]
    x2 = x2 + attn

    # ---- MLP on ln_2(x) ----
    # TODO(synk): at CLIP scale (D>=768) chunk w_1/w_2 along K and tile the row
    # dim to bound the (rows, 4D) f32 intermediate for the v7x 64 MiB VMEM budget.
    h2 = _layernorm(x2, ln2g_ref[...], ln2b_ref[...]).astype(jnp.bfloat16)
    y = jnp.dot(h2, w1_ref[...], preferred_element_type=jnp.float32) + b1_ref[...]
    # TODO(synk): torch nn.GELU defaults to exact erf; tanh approximation used for TPU lowering.
    y = jax.nn.gelu(y, approximate=True)
    y = jnp.dot(y.astype(jnp.bfloat16), w2_ref[...],
                preferred_element_type=jnp.float32) + b2_ref[...]
    o_ref[...] = (x2 + y).reshape(Bb, L, D)


def transformer_tower(x, layers, *, num_heads, causal, valid_len, batch_block=32):
    B, L, D = x.shape
    n_layers = layers['w_qkv'].shape[0]
    Bb = min(batch_block, B)               # amortize weight streaming over Bb rows

    x_spec = pl.BlockSpec((Bb, L, D), lambda b, l: (b, 0, 0))   # constant across layers

    def wspec(arr):
        return pl.BlockSpec((None,) + arr.shape[1:], lambda b, l: (l, 0, 0))

    order = ('ln1_g', 'ln1_b', 'w_qkv', 'b_qkv', 'w_o', 'b_o',
             'ln2_g', 'ln2_b', 'w_1', 'b_1', 'w_2', 'b_2')

    kern = functools.partial(tower_layer_kernel, num_heads=num_heads,
                             causal=causal, valid_len=valid_len)
    grid_spec = pltpu.PrefetchScalarGridSpec(
        num_scalar_prefetch=0,
        grid=(pl.cdiv(B, Bb), n_layers),
        in_specs=[x_spec] + [wspec(layers[k]) for k in order],
        out_specs=x_spec,
    )
    return pl.pallas_call(
        kern,
        out_shape=jax.ShapeDtypeStruct((B, L, D), jnp.float32),
        grid_spec=grid_spec,
        input_output_aliases={0: 0},       # residual stream updated in place (no 2nd HBM buffer)
        compiler_params=pltpu.CompilerParams(
            dimension_semantics=("parallel", "arbitrary"),
            vmem_limit_bytes=_VMEM_LIMIT),
    )(x, *(layers[k] for k in order))


# ----------------------------------------------------------------------------
# Kernel 2: LayerNorm + output projection on the already-pooled (B, D) token
#   (pooling before LN is equivalent since LN is per-token; the gather happens
#    in the JAX wrapper so only (B, D) is DMA'd in, not (B, L, D)).
# ----------------------------------------------------------------------------
def final_proj_kernel(x_ref, g_ref, b_ref, w_ref, o_ref):
    h = _layernorm(x_ref[...], g_ref[...], b_ref[...])
    o_ref[...] = jnp.dot(h.astype(jnp.bfloat16), w_ref[...],
                         preferred_element_type=jnp.float32)


def final_proj(pooled, ln_g, ln_b, proj):
    B = pooled.shape[0]
    E = proj.shape[1]
    return pl.pallas_call(
        final_proj_kernel,
        out_shape=jax.ShapeDtypeStruct((B, E), jnp.float32),
        in_specs=[pl.BlockSpec(memory_space=pltpu.MemorySpace.VMEM)] * 4,
        out_specs=pl.BlockSpec(memory_space=pltpu.MemorySpace.VMEM),
        compiler_params=pltpu.CompilerParams(vmem_limit_bytes=_VMEM_LIMIT),
    )(pooled, ln_g, ln_b, proj)


# ----------------------------------------------------------------------------
# Kernel 3: patch embedding (Conv2d(stride=patch, bias=False) as a tiled matmul)
#   grid over row blocks so realistic (B*Np, C*P*P) never has to fit in VMEM.
# ----------------------------------------------------------------------------
def patch_embed_kernel(x_ref, w_ref, o_ref):
    o_ref[...] = jnp.dot(x_ref[...].astype(jnp.bfloat16), w_ref[...],
                         preferred_element_type=jnp.float32)


def patch_embed(patches2d, w, *, block_rows=512):
    R, CPP = patches2d.shape
    D = w.shape[1]
    tr = R if R <= block_rows else block_rows
    grid_spec = pltpu.PrefetchScalarGridSpec(
        num_scalar_prefetch=0,
        grid=(pl.cdiv(R, tr),),
        in_specs=[pl.BlockSpec((tr, CPP), lambda i: (i, 0)),
                  pl.BlockSpec((CPP, D), lambda i: (0, 0))],
        out_specs=pl.BlockSpec((tr, D), lambda i: (i, 0)),
    )
    return pl.pallas_call(
        patch_embed_kernel,
        out_shape=jax.ShapeDtypeStruct((R, D), jnp.float32),
        grid_spec=grid_spec,
        compiler_params=pltpu.CompilerParams(
            dimension_semantics=("parallel",),
            vmem_limit_bytes=_VMEM_LIMIT),
    )(patches2d, w)


# ----------------------------------------------------------------------------
# Parameter construction (deterministic, synthetic; per-layer weights stacked)
# ----------------------------------------------------------------------------
def _tower_params(key, n_layers, width, mlp):
    ks = jax.random.split(key, 4)
    f32, bf16 = jnp.float32, jnp.bfloat16

    def w(k, shape):
        return (0.02 * jax.random.normal(k, (n_layers,) + shape)).astype(bf16)

    return dict(
        ln1_g=jnp.ones((n_layers, 1, width), f32),
        ln1_b=jnp.zeros((n_layers, 1, width), f32),
        w_qkv=w(ks[0], (width, 3 * width)),
        b_qkv=jnp.zeros((n_layers, 1, 3 * width), f32),
        w_o=w(ks[1], (width, width)),
        b_o=jnp.zeros((n_layers, 1, width), f32),
        ln2_g=jnp.ones((n_layers, 1, width), f32),
        ln2_b=jnp.zeros((n_layers, 1, width), f32),
        w_1=w(ks[2], (width, mlp)),
        b_1=jnp.zeros((n_layers, 1, mlp), f32),
        w_2=w(ks[3], (mlp, width)),
        b_2=jnp.zeros((n_layers, 1, width), f32),
    )


def make_params(key, *, vocab, l_text, d_text, n_layers,
                c, img_hw, patch, d_vis, embed_dim):
    f32, bf16 = jnp.float32, jnp.bfloat16
    keys = jax.random.split(key, 9)
    n_patch = (img_hw // patch) ** 2
    l_img = n_patch + 1
    return dict(
        text=dict(
            token_embedding=(0.02 * jax.random.normal(keys[0], (vocab, d_text))).astype(f32),
            positional_embedding=(0.01 * jax.random.normal(keys[1], (l_text, d_text))).astype(f32),
            layers=_tower_params(keys[2], n_layers, d_text, 4 * d_text),
            lnf_g=jnp.ones((1, d_text), f32), lnf_b=jnp.zeros((1, d_text), f32),
            text_projection=(0.02 * jax.random.normal(keys[3], (d_text, embed_dim))).astype(bf16),
        ),
        visual=dict(
            patch_w=(0.02 * jax.random.normal(keys[4], (c * patch * patch, d_vis))).astype(bf16),
            cls=(0.02 * jax.random.normal(keys[5], (1, 1, d_vis))).astype(f32),
            positional_embedding=(0.01 * jax.random.normal(keys[6], (l_img, d_vis))).astype(f32),
            layers=_tower_params(keys[7], n_layers, d_vis, 4 * d_vis),
            lnp_g=jnp.ones((1, d_vis), f32), lnp_b=jnp.zeros((1, d_vis), f32),
            proj=(0.02 * jax.random.normal(keys[8], (d_vis, embed_dim))).astype(bf16),
        ),
        logit_scale=jnp.full((1,), jnp.log(1.0 / 0.07), f32),   # CLIP init
    )


# ----------------------------------------------------------------------------
# ItraModel.forward
# ----------------------------------------------------------------------------
def encode_text(params, texts, *, num_heads):
    tp = params['text']
    B, L = texts.shape
    # token_embedding lookup + positional embedding (glue; gather)
    x = jnp.take(tp['token_embedding'], texts, axis=0) + tp['positional_embedding'][None]
    # NOTE: the (L, B, D) permutes in open_clip_forward are layout-only; kernels are batch-first.
    Lp = -(-L // 8) * 8                    # pad seq to multiple of 8 (masked as keys in-kernel)
    if Lp != L:
        x = jnp.pad(x, ((0, 0), (0, Lp - L), (0, 0)))
    x = transformer_tower(x, tp['layers'], num_heads=num_heads, causal=True, valid_len=L)
    # EOT pooling: gather x[arange(B), texts.argmax(-1)] -> ln_final -> @ text_projection
    pooled = x[jnp.arange(B), jnp.argmax(texts, axis=-1)]               # (B, D) glue gather
    feats = final_proj(pooled, tp['lnf_g'], tp['lnf_b'], tp['text_projection'])
    # text_projection_head is nn.Identity() (text_head_n_layers == 0)
    return feats


def encode_image(params, images, *, num_heads, patch):
    vp = params['visual']
    P = patch
    B, C, H, W = images.shape                         # NCHW, as in PyTorch
    Np = (H // P) * (W // P)
    # NCHW -> (B*num_patches, C*P*P), patch rows ordered (c, ph, pw) to match Conv2d
    patches = images.reshape(B, C, H // P, P, W // P, P)
    patches = patches.transpose(0, 2, 4, 1, 3, 5).reshape(B * Np, C * P * P)
    emb = patch_embed(patches, vp['patch_w'])         # tiled Pallas matmul -> (B*Np, D)
    D = emb.shape[-1]
    emb = emb.reshape(B, Np, D)
    cls = jnp.broadcast_to(vp['cls'], (B, 1, D))
    x = jnp.concatenate([cls, emb], axis=1) + vp['positional_embedding'][None]
    L = Np + 1
    Lp = -(-L // 8) * 8                    # e.g. ViT L=197/257 -> 200/264
    if Lp != L:
        x = jnp.pad(x, ((0, 0), (0, Lp - L), (0, 0)))
    x = transformer_tower(x, vp['layers'], num_heads=num_heads, causal=False, valid_len=L)
    pooled = x[:, 0]                                   # CLS token, (B, D)
    feats = final_proj(pooled, vp['lnp_g'], vp['lnp_b'], vp['proj'])
    # image_projection_head is nn.Identity() (image_head_n_layers == 0)
    return feats.astype(jnp.float32)                   # .float()


@functools.partial(jax.jit, static_argnames=('num_heads', 'patch', 'text_only'))
def itra_forward(params, images, texts, *, num_heads, patch, text_only=False):
    text_features = encode_text(params, texts, num_heads=num_heads)
    if text_only:
        image_features = text_features
    else:
        image_features = encode_image(params, images, num_heads=num_heads, patch=patch)
    logit_scale = jnp.exp(params['logit_scale'])
    return image_features, text_features, logit_scale


# ----------------------------------------------------------------------------
if __name__ == "__main__":
    key = jax.random.PRNGKey(0)
    k_param, k_img, k_txt = jax.random.split(key, 3)

    # Small shapes: batch=2, channels=4, spatial=16x16, seq=8, hidden=32
    B, C, HW = 2, 4, 16
    VOCAB, L_TEXT, D_TEXT = 64, 8, 32
    PATCH, D_VIS, EMBED = 8, 32, 32
    N_LAYERS, N_HEADS = 2, 2

    params = make_params(k_param, vocab=VOCAB, l_text=L_TEXT, d_text=D_TEXT,
                         n_layers=N_LAYERS, c=C, img_hw=HW, patch=PATCH,
                         d_vis=D_VIS, embed_dim=EMBED)

    images = jax.random.normal(k_img, (B, C, HW, HW), dtype=jnp.float32)   # NCHW
    texts = jax.random.randint(k_txt, (B, L_TEXT), 1, VOCAB - 2, dtype=jnp.int32)
    # place EOT (largest token id) so texts.argmax(-1) is a meaningful pooling index
    texts = texts.at[0, 5].set(VOCAB - 1).at[1, 7].set(VOCAB - 1)

    image_features, text_features, logit_scale = itra_forward(
        params, images, texts, num_heads=N_HEADS, patch=PATCH, text_only=False)
    jax.block_until_ready((image_features, text_features, logit_scale))

    assert image_features.shape == (B, EMBED)
    assert text_features.shape == (B, EMBED)
    assert logit_scale.shape == (1,)
    print("KERNEL_OK")
</pallas_src>

<mosaic_0001>
module attributes {stable_mosaic.version = 11 : i64} {
  func.func @patch_embed_kernel(%arg0: i32, %arg1: memref<8x256xf32, #tpu.memory_space<vmem>>, %arg2: memref<256x32xbf16, #tpu.memory_space<vmem>>, %arg3: memref<8x32xf32, #tpu.memory_space<vmem>>) attributes {dimension_semantics = [#tpu.dimension_semantics<parallel>], iteration_bounds = array<i64: 1>, scalar_prefetch = 0 : i64, scratch_operands = 0 : i64, tpu.core_type = #tpu.core_type<tc>, window_params = [{transform_indices = @transform_0, window_bounds = array<i64: 8, 256>}, {pipeline_mode = #tpu.pipeline_mode<synchronous>, transform_indices = @transform_1, window_bounds = array<i64: 256, 32>}, {transform_indices = @transform_2, window_bounds = array<i64: 8, 32>}]} {
    %c0 = arith.constant 0 : index
    %c0_0 = arith.constant 0 : index
    %0 = vector.load %arg1[%c0, %c0_0] : memref<8x256xf32, #tpu.memory_space<vmem>>, vector<8x256xf32>
    %1 = arith.truncf %0 : vector<8x256xf32> to vector<8x256xbf16>
    %c0_1 = arith.constant 0 : index
    %c0_2 = arith.constant 0 : index
    %2 = vector.load %arg2[%c0_1, %c0_2] : memref<256x32xbf16, #tpu.memory_space<vmem>>, vector<256x32xbf16>
    %cst = arith.constant dense<0.000000e+00> : vector<8x32xf32>
    %3 = tpu.matmul %1, %2, %cst {dimension_numbers = #tpu.dot_dimension_numbers<[1], [0], [0], [1], [0, 0, 1, 1], [], []>} : vector<8x256xbf16>, vector<256x32xbf16>, vector<8x32xf32> -> vector<8x32xf32>
    %c0_3 = arith.constant 0 : index
    %c0_4 = arith.constant 0 : index
    %4 = vector.load %arg3[%c0_3, %c0_4] : memref<8x32xf32, #tpu.memory_space<vmem>>, vector<8x32xf32>
    tpu.vector_store %arg3[%c0_3, %c0_4], %3 {strides = array<i32>} : memref<8x32xf32, #tpu.memory_space<vmem>>, vector<8x32xf32>,
    return
  }
  func.func @transform_0(%arg0: i32) -> (i32, i32) {
    %c0_i32 = arith.constant 0 : i32
    %c0_i32_0 = arith.constant 0 : i32
    return %arg0, %c0_i32 : i32, i32
  }
  func.func @transform_1(%arg0: i32) -> (i32, i32) {
    %c0_i32 = arith.constant 0 : i32
    %c0_i32_0 = arith.constant 0 : i32
    %c0_i32_1 = arith.constant 0 : i32
    return %c0_i32, %c0_i32_0 : i32, i32
  }
  func.func @transform_2(%arg0: i32) -> (i32, i32) {
    %c0_i32 = arith.constant 0 : i32
    %c0_i32_0 = arith.constant 0 : i32
    return %arg0, %c0_i32 : i32, i32
  }
}

module attributes {stable_mosaic.version = 11 : i64} {
  func.func @final_proj_kernel(%arg0: memref<2x32xf32, #tpu.memory_space<vmem>>, %arg1: memref<1x32xf32, #tpu.memory_space<vmem>>, %arg2: memref<1x32xf32, #tpu.memory_space<vmem>>, %arg3: memref<32x32xbf16, #tpu.memory_space<vmem>>, %arg4: memref<2x32xf32, #tpu.memory_space<vmem>>) attributes {dimension_semantics = [], scalar_prefetch = 0 : i64, scratch_operands = 0 : i64, tpu.core_type = #tpu.core_type<tc>} {
    %c0 = arith.constant 0 : index
    %c0_0 = arith.constant 0 : index
    %0 = vector.load %arg0[%c0, %c0_0] : memref<2x32xf32, #tpu.memory_space<vmem>>, vector<2x32xf32>
    %c0_1 = arith.constant 0 : index
    %c0_2 = arith.constant 0 : index
    %1 = vector.load %arg1[%c0_1, %c0_2] : memref<1x32xf32, #tpu.memory_space<vmem>>, vector<1x32xf32>
    %c0_3 = arith.constant 0 : index
    %c0_4 = arith.constant 0 : index
    %2 = vector.load %arg2[%c0_3, %c0_4] : memref<1x32xf32, #tpu.memory_space<vmem>>, vector<1x32xf32>
    %cst = arith.constant dense<0.000000e+00> : vector<2xf32>
    %3 = vector.multi_reduction <add>, %0, %cst [1] : vector<2x32xf32> to vector<2xf32>
    %4 = vector.shape_cast %3 : vector<2xf32> to vector<2x1xf32>
    %cst_5 = arith.constant 3.200000e+01 : f32
    %5 = vector.broadcast %cst_5 : f32 to vector<2x1xf32>
    %6 = arith.divf %4, %5 : vector<2x1xf32>
    %7 = vector.broadcast %6 : vector<2x1xf32> to vector<2x32xf32>
    %8 = arith.subf %0, %7 : vector<2x32xf32>
    %9 = arith.mulf %8, %8 : vector<2x32xf32>
    %cst_6 = arith.constant dense<0.000000e+00> : vector<2xf32>
    %10 = vector.multi_reduction <add>, %9, %cst_6 [1] : vector<2x32xf32> to vector<2xf32>
    %11 = vector.shape_cast %10 : vector<2xf32> to vector<2x1xf32>
    %cst_7 = arith.constant 3.200000e+01 : f32
    %12 = vector.broadcast %cst_7 : f32 to vector<2x1xf32>
    %13 = arith.divf %11, %12 : vector<2x1xf32>
    %14 = vector.broadcast %6 : vector<2x1xf32> to vector<2x32xf32>
    %15 = arith.subf %0, %14 : vector<2x32xf32>
    %cst_8 = arith.constant 9.99999974E-6 : f32
    %16 = vector.broadcast %cst_8 : f32 to vector<2x1xf32>
    %17 = arith.addf %13, %16 : vector<2x1xf32>
    %18 = math.rsqrt %17 : vector<2x1xf32>
    %19 = vector.broadcast %18 : vector<2x1xf32> to vector<2x32xf32>
    %20 = arith.mulf %15, %19 : vector<2x32xf32>
    %21 = vector.broadcast %1 : vector<1x32xf32> to vector<2x32xf32>
    %22 = arith.mulf %20, %21 : vector<2x32xf32>
    %23 = vector.broadcast %2 : vector<1x32xf32> to vector<2x32xf32>
    %24 = arith.addf %22, %23 : vector<2x32xf32>
    %25 = arith.truncf %24 : vector<2x32xf32> to vector<2x32xbf16>
    %c0_9 = arith.constant 0 : index
    %c0_10 = arith.constant 0 : index
    %26 = vector.load %arg3[%c0_9, %c0_10] : memref<32x32xbf16, #tpu.memory_space<vmem>>, vector<32x32xbf16>
    %cst_11 = arith.constant dense<0.000000e+00> : vector<2x32xf32>
    %27 = tpu.matmul %25, %26, %cst_11 {dimension_numbers = #tpu.dot_dimension_numbers<[1], [0], [0], [1], [0, 0, 1, 1], [], []>} : vector<2x32xbf16>, vector<32x32xbf16>, vector<2x32xf32> -> vector<2x32xf32>
    %c0_12 = arith.constant 0 : index
    %c0_13 = arith.constant 0 : index
    %28 = vector.load %arg4[%c0_12, %c0_13] : memref<2x32xf32, #tpu.memory_space<vmem>>, vector<2x32xf32>
    tpu.vector_store %arg4[%c0_12, %c0_13], %27 {strides = array<i32>} : memref<2x32xf32, #tpu.memory_space<vmem>>, vector<2x32xf32>,
    return
  }
}

module attributes {stable_mosaic.version = 11 : i64} {
  func.func @tower_layer_kernel(%arg0: i32, %arg1: i32, %arg2: memref<2x8x32xf32, #tpu.memory_space<vmem>>, %arg3: memref<1x1x32xf32, #tpu.memory_space<vmem>>, %arg4: memref<1x1x32xf32, #tpu.memory_space<vmem>>, %arg5: memref<1x32x96xbf16, #tpu.memory_space<vmem>>, %arg6: memref<1x1x96xf32, #tpu.memory_space<vmem>>, %arg7: memref<1x32x32xbf16, #tpu.memory_space<vmem>>, %arg8: memref<1x1x32xf32, #tpu.memory_space<vmem>>, %arg9: memref<1x1x32xf32, #tpu.memory_space<vmem>>, %arg10: memref<1x1x32xf32, #tpu.memory_space<vmem>>, %arg11: memref<1x32x128xbf16, #tpu.memory_space<vmem>>, %arg12: memref<1x1x128xf32, #tpu.memory_space<vmem>>, %arg13: memref<1x128x32xbf16, #tpu.memory_space<vmem>>, %arg14: memref<1x1x32xf32, #tpu.memory_space<vmem>>, %arg15: memref<2x8x32xf32, #tpu.memory_space<vmem>>) attributes {dimension_semantics = [#tpu.dimension_semantics<parallel>, #tpu.dimension_semantics<arbitrary>], iteration_bounds = array<i64: 1, 2>, scalar_prefetch = 0 : i64, scratch_operands = 0 : i64, tpu.core_type = #tpu.core_type<tc>, window_params = [{transform_indices = @transform_0, window_bounds = array<i64: 2, 8, 32>}, {transform_indices = @transform_1, window_bounds = array<i64: 1, 1, 32>}, {transform_indices = @transform_2, window_bounds = array<i64: 1, 1, 32>}, {transform_indices = @transform_3, window_bounds = array<i64: 1, 32, 96>}, {transform_indices = @transform_4, window_bounds = array<i64: 1, 1, 96>}, {transform_indices = @transform_5, window_bounds = array<i64: 1, 32, 32>}, {transform_indices = @transform_6, window_bounds = array<i64: 1, 1, 32>}, {transform_indices = @transform_7, window_bounds = array<i64: 1, 1, 32>}, {transform_indices = @transform_8, window_bounds = array<i64: 1, 1, 32>}, {transform_indices = @transform_9, window_bounds = array<i64: 1, 32, 128>}, {transform_indices = @transform_10, window_bounds = array<i64: 1, 1, 128>}, {transform_indices = @transform_11, window_bounds = array<i64: 1, 128, 32>}, {transform_indices = @transform_12, window_bounds = array<i64: 1, 1, 32>}, {transform_indices = @transform_13, window_bounds = array<i64: 2, 8, 32>}]} {
    %c0_i32 = arith.constant 0 : i32
    %0 = arith.cmpi eq, %arg1, %c0_i32 : i32
    %1 = arith.extui %0 : i1 to i32
    %c0_i32_0 = arith.constant 0 : i32
    %2 = arith.cmpi ne, %1, %c0_i32_0 : i32
    scf.if %2 {
      %c0_70 = arith.constant 0 : index
      %c0_71 = arith.constant 0 : index
      %c0_72 = arith.constant 0 : index
      %160 = vector.load %arg2[%c0_70, %c0_71, %c0_72] : memref<2x8x32xf32, #tpu.memory_space<vmem>>, vector<2x8x32xf32>
      %c0_73 = arith.constant 0 : index
      %c0_74 = arith.constant 0 : index
      %c0_75 = arith.constant 0 : index
      %161 = vector.load %arg15[%c0_73, %c0_74, %c0_75] : memref<2x8x32xf32, #tpu.memory_space<vmem>>, vector<2x8x32xf32>
      tpu.vector_store %arg15[%c0_73, %c0_74, %c0_75], %160 {strides = array<i32>} : memref<2x8x32xf32, #tpu.memory_space<vmem>>, vector<2x8x32xf32>,
    } else {
    }
    %c0 = arith.constant 0 : index
    %c0_1 = arith.constant 0 : index
    %c0_2 = arith.constant 0 : index
    %3 = vector.load %arg15[%c0, %c0_1, %c0_2] : memref<2x8x32xf32, #tpu.memory_space<vmem>>, vector<2x8x32xf32>
    %4 = vector.shape_cast %3 : vector<2x8x32xf32> to vector<16x32xf32>
    %c0_3 = arith.constant 0 : index
    %c0_4 = arith.constant 0 : index
    %c0_5 = arith.constant 0 : index
    %5 = vector.load %arg3[%c0_3, %c0_4, %c0_5] : memref<1x1x32xf32, #tpu.memory_space<vmem>>, vector<1x1x32xf32>
    %6 = vector.shape_cast %5 : vector<1x1x32xf32> to vector<1x32xf32>
    %c0_6 = arith.constant 0 : index
    %c0_7 = arith.constant 0 : index
    %c0_8 = arith.constant 0 : index
    %7 = vector.load %arg4[%c0_6, %c0_7, %c0_8] : memref<1x1x32xf32, #tpu.memory_space<vmem>>, vector<1x1x32xf32>
    %8 = vector.shape_cast %7 : vector<1x1x32xf32> to vector<1x32xf32>
    %cst = arith.constant dense<0.000000e+00> : vector<16xf32>
    %9 = vector.multi_reduction <add>, %4, %cst [1] : vector<16x32xf32> to vector<16xf32>
    %10 = vector.shape_cast %9 : vector<16xf32> to vector<16x1xf32>
    %cst_9 = arith.constant 3.200000e+01 : f32
    %11 = vector.broadcast %cst_9 : f32 to vector<16x1xf32>
    %12 = arith.divf %10, %11 : vector<16x1xf32>
    %13 = vector.broadcast %12 : vector<16x1xf32> to vector<16x32xf32>
    %14 = arith.subf %4, %13 : vector<16x32xf32>
    %15 = arith.mulf %14, %14 : vector<16x32xf32>
    %cst_10 = arith.constant dense<0.000000e+00> : vector<16xf32>
    %16 = vector.multi_reduction <add>, %15, %cst_10 [1] : vector<16x32xf32> to vector<16xf32>
    %17 = vector.shape_cast %16 : vector<16xf32> to vector<16x1xf32>
    %cst_11 = arith.constant 3.200000e+01 : f32
    %18 = vector.broadcast %cst_11 : f32 to vector<16x1xf32>
    %19 = arith.divf %17, %18 : vector<16x1xf32>
    %20 = vector.broadcast %12 : vector<16x1xf32> to vector<16x32xf32>
    %21 = arith.subf %4, %20 : vector<16x32xf32>
    %cst_12 = arith.constant 9.99999974E-6 : f32
    %22 = vector.broadcast %cst_12 : f32 to vector<16x1xf32>
    %23 = arith.addf %19, %22 : vector<16x1xf32>
    %24 = math.rsqrt %23 : vector<16x1xf32>
    %25 = vector.broadcast %24 : vector<16x1xf32> to vector<16x32xf32>
    %26 = arith.mulf %21, %25 : vector<16x32xf32>
    %27 = vector.broadcast %6 : vector<1x32xf32> to vector<16x32xf32>
    %28 = arith.mulf %26, %27 : vector<16x32xf32>
    %29 = vector.broadcast %8 : vector<1x32xf32> to vector<16x32xf32>
    %30 = arith.addf %28, %29 : vector<16x32xf32>
    %31 = arith.truncf %30 : vector<16x32xf32> to vector<16x32xbf16>
    %c0_13 = arith.constant 0 : index
    %c0_14 = arith.constant 0 : index
    %c0_15 = arith.constant 0 : index
    %32 = vector.load %arg5[%c0_13, %c0_14, %c0_15] : memref<1x32x96xbf16, #tpu.memory_space<vmem>>, vector<1x32x96xbf16>
    %33 = vector.shape_cast %32 : vector<1x32x96xbf16> to vector<32x96xbf16>
    %cst_16 = arith.constant dense<0.000000e+00> : vector<16x96xf32>
    %34 = tpu.matmul %31, %33, %cst_16 {dimension_numbers = #tpu.dot_dimension_numbers<[1], [0], [0], [1], [0, 0, 1, 1], [], []>} : vector<16x32xbf16>, vector<32x96xbf16>, vector<16x96xf32> -> vector<16x96xf32>
    %c0_17 = arith.constant 0 : index
    %c0_18 = arith.constant 0 : index
    %c0_19 = arith.constant 0 : index
    %35 = vector.load %arg6[%c0_17, %c0_18, %c0_19] : memref<1x1x96xf32, #tpu.memory_space<vmem>>, vector<1x1x96xf32>
    %36 = vector.shape_cast %35 : vector<1x1x96xf32> to vector<1x96xf32>
    %37 = vector.broadcast %36 : vector<1x96xf32> to vector<16x96xf32>
    %38 = arith.addf %34, %37 : vector<16x96xf32>
    %39 = vector.extract_strided_slice %38 {offsets = [0, 0], sizes = [16, 32], strides = [1, 1]} : vector<16x96xf32> to vector<16x32xf32>
    %cst_20 = arith.constant 2.500000e-01 : f32
    %40 = vector.broadcast %cst_20 : f32 to vector<16x32xf32>
    %41 = arith.mulf %39, %40 : vector<16x32xf32>
    %42 = vector.shape_cast %41 : vector<16x32xf32> to vector<2x8x32xf32>
    %43 = arith.truncf %42 : vector<2x8x32xf32> to vector<2x8x32xbf16>
    %44 = vector.extract_strided_slice %38 {offsets = [0, 32], sizes = [16, 32], strides = [1, 1]} : vector<16x96xf32> to vector<16x32xf32>
    %45 = vector.shape_cast %44 : vector<16x32xf32> to vector<2x8x32xf32>
    %46 = arith.truncf %45 : vector<2x8x32xf32> to vector<2x8x32xbf16>
    %47 = vector.extract_strided_slice %38 {offsets = [0, 64], sizes = [16, 32], strides = [1, 1]} : vector<16x96xf32> to vector<16x32xf32>
    %48 = vector.shape_cast %47 : vector<16x32xf32> to vector<2x8x32xf32>
    %49 = arith.truncf %48 : vector<2x8x32xf32> to vector<2x8x32xbf16>
    %50 = tpu.iota {dimensions = array<i32: 1>} : vector<8x8xi32>
    %c5_i32 = arith.constant 5 : i32
    %51 = vector.broadcast %c5_i32 : i32 to vector<8x8xi32>
    %52 = arith.cmpi slt, %50, %51 : vector<8x8xi32>
    %cst_21 = arith.constant 0.000000e+00 : f32
    %cst_22 = arith.constant -1.000000e+09 : f32
    %53 = vector.broadcast %cst_21 : f32 to vector<8x8xf32>
    %54 = vector.broadcast %cst_22 : f32 to vector<8x8xf32>
    %55 = arith.select %52, %53, %54 : vector<8x8xi1>, vector<8x8xf32>
    %56 = vector.shape_cast %55 : vector<8x8xf32> to vector<1x8x8xf32>
    %57 = vector.extract_strided_slice %43 {offsets = [0, 0, 0], sizes = [2, 8, 16], strides = [1, 1, 1]} : vector<2x8x32xbf16> to vector<2x8x16xbf16>
    %58 = vector.extract_strided_slice %46 {offsets = [0, 0, 0], sizes = [2, 8, 16], strides = [1, 1, 1]} : vector<2x8x32xbf16> to vector<2x8x16xbf16>
    "tpu.trace_start"() <{level = 10 : i32, message = "bqd,bkd->bqk"}> : () -> ()
    %cst_23 = arith.constant dense<0.000000e+00> : vector<2x8x8xf32>
    %59 = tpu.matmul %57, %58, %cst_23 {dimension_numbers = #tpu.dot_dimension_numbers<[2], [2], [1], [1], [0, 0, 0, 1, 1, 1], [0], [0]>} : vector<2x8x16xbf16>, vector<2x8x16xbf16>, vector<2x8x8xf32> -> vector<2x8x8xf32>
    "tpu.trace_stop"() : () -> ()
    %60 = vector.broadcast %56 : vector<1x8x8xf32> to vector<2x8x8xf32>
    %61 = arith.addf %59, %60 : vector<2x8x8xf32>
    %cst_24 = arith.constant dense<0xFF800000> : vector<2x8xf32>
    %62 = vector.multi_reduction <maximumf>, %61, %cst_24 [2] : vector<2x8x8xf32> to vector<2x8xf32>
    %63 = vector.shape_cast %62 : vector<2x8xf32> to vector<2x8x1xf32>
    %64 = vector.broadcast %63 : vector<2x8x1xf32> to vector<2x8x8xf32>
    %65 = arith.subf %61, %64 : vector<2x8x8xf32>
    %66 = math.exp %65 : vector<2x8x8xf32>
    %cst_25 = arith.constant dense<0.000000e+00> : vector<2x8xf32>
    %67 = vector.multi_reduction <add>, %66, %cst_25 [2] : vector<2x8x8xf32> to vector<2x8xf32>
    %68 = vector.shape_cast %67 : vector<2x8xf32> to vector<2x8x1xf32>
    %69 = vector.broadcast %68 : vector<2x8x1xf32> to vector<2x8x8xf32>
    %70 = arith.divf %66, %69 : vector<2x8x8xf32>
    %71 = arith.truncf %70 : vector<2x8x8xf32> to vector<2x8x8xbf16>
    %72 = vector.extract_strided_slice %49 {offsets = [0, 0, 0], sizes = [2, 8, 16], strides = [1, 1, 1]} : vector<2x8x32xbf16> to vector<2x8x16xbf16>
    "tpu.trace_start"() <{level = 10 : i32, message = "bqk,bkd->bqd"}> : () -> ()
    %cst_26 = arith.constant dense<0.000000e+00> : vector<2x8x16xf32>
    %73 = tpu.matmul %71, %72, %cst_26 {dimension_numbers = #tpu.dot_dimension_numbers<[2], [1], [1], [2], [0, 0, 0, 1, 1, 2], [0], [0]>} : vector<2x8x8xbf16>, vector<2x8x16xbf16>, vector<2x8x16xf32> -> vector<2x8x16xf32>
    "tpu.trace_stop"() : () -> ()
    %74 = vector.extract_strided_slice %43 {offsets = [0, 0, 16], sizes = [2, 8, 16], strides = [1, 1, 1]} : vector<2x8x32xbf16> to vector<2x8x16xbf16>
    %75 = vector.extract_strided_slice %46 {offsets = [0, 0, 16], sizes = [2, 8, 16], strides = [1, 1, 1]} : vector<2x8x32xbf16> to vector<2x8x16xbf16>
    "tpu.trace_start"() <{level = 10 : i32, message = "bqd,bkd->bqk"}> : () -> ()
    %cst_27 = arith.constant dense<0.000000e+00> : vector<2x8x8xf32>
    %76 = tpu.matmul %74, %75, %cst_27 {dimension_numbers = #tpu.dot_dimension_numbers<[2], [2], [1], [1], [0, 0, 0, 1, 1, 1], [0], [0]>} : vector<2x8x16xbf16>, vector<2x8x16xbf16>, vector<2x8x8xf32> -> vector<2x8x8xf32>
    "tpu.trace_stop"() : () -> ()
    %77 = vector.broadcast %56 : vector<1x8x8xf32> to vector<2x8x8xf32>
    %78 = arith.addf %76, %77 : vector<2x8x8xf32>
    %cst_28 = arith.constant dense<0xFF800000> : vector<2x8xf32>
    %79 = vector.multi_reduction <maximumf>, %78, %cst_28 [2] : vector<2x8x8xf32> to vector<2x8xf32>
    %80 = vector.shape_cast %79 : vector<2x8xf32> to vector<2x8x1xf32>
    %81 = vector.broadcast %80 : vector<2x8x1xf32> to vector<2x8x8xf32>
    %82 = arith.subf %78, %81 : vector<2x8x8xf32>
    %83 = math.exp %82 : vector<2x8x8xf32>
    %cst_29 = arith.constant dense<0.000000e+00> : vector<2x8xf32>
    %84 = vector.multi_reduction <add>, %83, %cst_29 [2] : vector<2x8x8xf32> to vector<2x8xf32>
    %85 = vector.shape_cast %84 : vector<2x8xf32> to vector<2x8x1xf32>
    %86 = vector.broadcast %85 : vector<2x8x1xf32> to vector<2x8x8xf32>
    %87 = arith.divf %83, %86 : vector<2x8x8xf32>
    %88 = arith.truncf %87 : vector<2x8x8xf32> to vector<2x8x8xbf16>
    %89 = vector.extract_strided_slice %49 {offsets = [0, 0, 16], sizes = [2, 8, 16], strides = [1, 1, 1]} : vector<2x8x32xbf16> to vector<2x8x16xbf16>
    "tpu.trace_start"() <{level = 10 : i32, message = "bqk,bkd->bqd"}> : () -> ()
    %cst_30 = arith.constant dense<0.000000e+00> : vector<2x8x16xf32>
    %90 = tpu.matmul %88, %89, %cst_30 {dimension_numbers = #tpu.dot_dimension_numbers<[2], [1], [1], [2], [0, 0, 0, 1, 1, 2], [0], [0]>} : vector<2x8x8xbf16>, vector<2x8x16xbf16>, vector<2x8x16xf32> -> vector<2x8x16xf32>
    "tpu.trace_stop"() : () -> ()
    %91 = tpu.concatenate %73, %90 in 2 : vector<2x8x16xf32>, vector<2x8x16xf32> -> vector<2x8x32xf32>
    %92 = vector.shape_cast %91 : vector<2x8x32xf32> to vector<16x32xf32>
    %93 = arith.truncf %92 : vector<16x32xf32> to vector<16x32xbf16>
    %c0_31 = arith.constant 0 : index
    %c0_32 = arith.constant 0 : index
    %c0_33 = arith.constant 0 : index
    %94 = vector.load %arg7[%c0_31, %c0_32, %c0_33] : memref<1x32x32xbf16, #tpu.memory_space<vmem>>, vector<1x32x32xbf16>
    %95 = vector.shape_cast %94 : vector<1x32x32xbf16> to vector<32x32xbf16>
    %cst_34 = arith.constant dense<0.000000e+00> : vector<16x32xf32>
    %96 = tpu.matmul %93, %95, %cst_34 {dimension_numbers = #tpu.dot_dimension_numbers<[1], [0], [0], [1], [0, 0, 1, 1], [], []>} : vector<16x32xbf16>, vector<32x32xbf16>, vector<16x32xf32> -> vector<16x32xf32>
    %c0_35 = arith.constant 0 : index
    %c0_36 = arith.constant 0 : index
    %c0_37 = arith.constant 0 : index
    %97 = vector.load %arg8[%c0_35, %c0_36, %c0_37] : memref<1x1x32xf32, #tpu.memory_space<vmem>>, vector<1x1x32xf32>
    %98 = vector.shape_cast %97 : vector<1x1x32xf32> to vector<1x32xf32>
    %99 = vector.broadcast %98 : vector<1x32xf32> to vector<16x32xf32>
    %100 = arith.addf %96, %99 : vector<16x32xf32>
    %101 = arith.addf %4, %100 : vector<16x32xf32>
    %c0_38 = arith.constant 0 : index
    %c0_39 = arith.constant 0 : index
    %c0_40 = arith.constant 0 : index
    %102 = vector.load %arg9[%c0_38, %c0_39, %c0_40] : memref<1x1x32xf32, #tpu.memory_space<vmem>>, vector<1x1x32xf32>
    %103 = vector.shape_cast %102 : vector<1x1x32xf32> to vector<1x32xf32>
    %c0_41 = arith.constant 0 : index
    %c0_42 = arith.constant 0 : index
    %c0_43 = arith.constant 0 : index
    %104 = vector.load %arg10[%c0_41, %c0_42, %c0_43] : memref<1x1x32xf32, #tpu.memory_space<vmem>>, vector<1x1x32xf32>
    %105 = vector.shape_cast %104 : vector<1x1x32xf32> to vector<1x32xf32>
    %cst_44 = arith.constant dense<0.000000e+00> : vector<16xf32>
    %106 = vector.multi_reduction <add>, %101, %cst_44 [1] : vector<16x32xf32> to vector<16xf32>
    %107 = vector.shape_cast %106 : vector<16xf32> to vector<16x1xf32>
    %cst_45 = arith.constant 3.200000e+01 : f32
    %108 = vector.broadcast %cst_45 : f32 to vector<16x1xf32>
    %109 = arith.divf %107, %108 : vector<16x1xf32>
    %110 = vector.broadcast %109 : vector<16x1xf32> to vector<16x32xf32>
    %111 = arith.subf %101, %110 : vector<16x32xf32>
    %112 = arith.mulf %111, %111 : vector<16x32xf32>
    %cst_46 = arith.constant dense<0.000000e+00> : vector<16xf32>
    %113 = vector.multi_reduction <add>, %112, %cst_46 [1] : vector<16x32xf32> to vector<16xf32>
    %114 = vector.shape_cast %113 : vector<16xf32> to vector<16x1xf32>
    %cst_47 = arith.constant 3.200000e+01 : f32
    %115 = vector.broadcast %cst_47 : f32 to vector<16x1xf32>
    %116 = arith.divf %114, %115 : vector<16x1xf32>
    %117 = vector.broadcast %109 : vector<16x1xf32> to vector<16x32xf32>
    %118 = arith.subf %101, %117 : vector<16x32xf32>
    %cst_48 = arith.constant 9.99999974E-6 : f32
    %119 = vector.broadcast %cst_48 : f32 to vector<16x1xf32>
    %120 = arith.addf %116, %119 : vector<16x1xf32>
    %121 = math.rsqrt %120 : vector<16x1xf32>
    %122 = vector.broadcast %121 : vector<16x1xf32> to vector<16x32xf32>
    %123 = arith.mulf %118, %122 : vector<16x32xf32>
    %124 = vector.broadcast %103 : vector<1x32xf32> to vector<16x32xf32>
    %125 = arith.mulf %123, %124 : vector<16x32xf32>
    %126 = vector.broadcast %105 : vector<1x32xf32> to vector<16x32xf32>
    %127 = arith.addf %125, %126 : vector<16x32xf32>
    %128 = arith.truncf %127 : vector<16x32xf32> to vector<16x32xbf16>
    %c0_49 = arith.constant 0 : index
    %c0_50 = arith.constant 0 : index
    %c0_51 = arith.constant 0 : index
    %129 = vector.load %arg11[%c0_49, %c0_50, %c0_51] : memref<1x32x128xbf16, #tpu.memory_space<vmem>>, vector<1x32x128xbf16>
    %130 = vector.shape_cast %129 : vector<1x32x128xbf16> to vector<32x128xbf16>
    %cst_52 = arith.constant dense<0.000000e+00> : vector<16x128xf32>
    %131 = tpu.matmul %128, %130, %cst_52 {dimension_numbers = #tpu.dot_dimension_numbers<[1], [0], [0], [1], [0, 0, 1, 1], [], []>} : vector<16x32xbf16>, vector<32x128xbf16>, vector<16x128xf32> -> vector<16x128xf32>
    %c0_53 = arith.constant 0 : index
    %c0_54 = arith.constant 0 : index
    %c0_55 = arith.constant 0 : index
    %132 = vector.load %arg12[%c0_53, %c0_54, %c0_55] : memref<1x1x128xf32, #tpu.memory_space<vmem>>, vector<1x1x128xf32>
    %133 = vector.shape_cast %132 : vector<1x1x128xf32> to vector<1x128xf32>
    %134 = vector.broadcast %133 : vector<1x128xf32> to vector<16x128xf32>
    %135 = arith.addf %131, %134 : vector<16x128xf32>
    %136 = arith.mulf %135, %135 : vector<16x128xf32>
    %137 = arith.mulf %135, %136 : vector<16x128xf32>
    %cst_56 = arith.constant 4.471500e-02 : f32
    %138 = vector.broadcast %cst_56 : f32 to vector<16x128xf32>
    %139 = arith.mulf %138, %137 : vector<16x128xf32>
    %140 = arith.addf %135, %139 : vector<16x128xf32>
    %cst_57 = arith.constant 0.797884583 : f32
    %141 = vector.broadcast %cst_57 : f32 to vector<16x128xf32>
    %142 = arith.mulf %141, %140 : vector<16x128xf32>
    %143 = math.tanh %142 : vector<16x128xf32>
    %cst_58 = arith.constant 1.000000e+00 : f32
    %144 = vector.broadcast %cst_58 : f32 to vector<16x128xf32>
    %145 = arith.addf %144, %143 : vector<16x128xf32>
    %cst_59 = arith.constant 5.000000e-01 : f32
    %146 = vector.broadcast %cst_59 : f32 to vector<16x128xf32>
    %147 = arith.mulf %146, %145 : vector<16x128xf32>
    %148 = arith.mulf %135, %147 : vector<16x128xf32>
    %149 = arith.truncf %148 : vector<16x128xf32> to vector<16x128xbf16>
    %c0_60 = arith.constant 0 : index
    %c0_61 = arith.constant 0 : index
    %c0_62 = arith.constant 0 : index
    %150 = vector.load %arg13[%c0_60, %c0_61, %c0_62] : memref<1x128x32xbf16, #tpu.memory_space<vmem>>, vector<1x128x32xbf16>
    %151 = vector.shape_cast %150 : vector<1x128x32xbf16> to vector<128x32xbf16>
    %cst_63 = arith.constant dense<0.000000e+00> : vector<16x32xf32>
    %152 = tpu.matmul %149, %151, %cst_63 {dimension_numbers = #tpu.dot_dimension_numbers<[1], [0], [0], [1], [0, 0, 1, 1], [], []>} : vector<16x128xbf16>, vector<128x32xbf16>, vector<16x32xf32> -> vector<16x32xf32>
    %c0_64 = arith.constant 0 : index
    %c0_65 = arith.constant 0 : index
    %c0_66 = arith.constant 0 : index
    %153 = vector.load %arg14[%c0_64, %c0_65, %c0_66] : memref<1x1x32xf32, #tpu.memory_space<vmem>>, vector<1x1x32xf32>
    %154 = vector.shape_cast %153 : vector<1x1x32xf32> to vector<1x32xf32>
    %155 = vector.broadcast %154 : vector<1x32xf32> to vector<16x32xf32>
    %156 = arith.addf %152, %155 : vector<16x32xf32>
    %157 = arith.addf %101, %156 : vector<16x32xf32>
    %158 = vector.shape_cast %157 : vector<16x32xf32> to vector<2x8x32xf32>
    %c0_67 = arith.constant 0 : index
    %c0_68 = arith.constant 0 : index
    %c0_69 = arith.constant 0 : index
    %159 = vector.load %arg15[%c0_67, %c0_68, %c0_69] : memref<2x8x32xf32, #tpu.memory_space<vmem>>, vector<2x8x32xf32>
    tpu.vector_store %arg15[%c0_67, %c0_68, %c0_69], %158 {strides = array<i32>} : memref<2x8x32xf32, #tpu.memory_space<vmem>>, vector<2x8x32xf32>,
    return
  }
  func.func @transform_0(%arg0: i32, %arg1: i32) -> (i32, i32, i32) {
    %c0_i32 = arith.constant 0 : i32
    %c0_i32_0 = arith.constant 0 : i32
    %c0_i32_1 = arith.constant 0 : i32
    return %arg0, %c0_i32, %c0_i32_0 : i32, i32, i32
  }
  func.func @transform_1(%arg0: i32, %arg1: i32) -> (i32, i32, i32) {
    %c0_i32 = arith.constant 0 : i32
    %c0_i32_0 = arith.constant 0 : i32
    %c0_i32_1 = arith.constant 0 : i32
    return %arg1, %c0_i32, %c0_i32_0 : i32, i32, i32
  }
  func.func @transform_2(%arg0: i32, %arg1: i32) -> (i32, i32, i32) {
    %c0_i32 = arith.constant 0 : i32
    %c0_i32_0 = arith.constant 0 : i32
    %c0_i32_1 = arith.constant 0 : i32
    return %arg1, %c0_i32, %c0_i32_0 : i32, i32, i32
  }
  func.func @transform_3(%arg0: i32, %arg1: i32) -> (i32, i32, i32) {
    %c0_i32 = arith.constant 0 : i32
    %c0_i32_0 = arith.constant 0 : i32
    %c0_i32_1 = arith.constant 0 : i32
    return %arg1, %c0_i32, %c0_i32_0 : i32, i32, i32
  }
  func.func @transform_4(%arg0: i32, %arg1: i32) -> (i32, i32, i32) {
    %c0_i32 = arith.constant 0 : i32
    %c0_i32_0 = arith.constant 0 : i32
    %c0_i32_1 = arith.constant 0 : i32
    return %arg1, %c0_i32, %c0_i32_0 : i32, i32, i32
  }
  func.func @transform_5(%arg0: i32, %arg1: i32) -> (i32, i32, i32) {
    %c0_i32 = arith.constant 0 : i32
    %c0_i32_0 = arith.constant 0 : i32
    %c0_i32_1 = arith.constant 0 : i32
    return %arg1, %c0_i32, %c0_i32_0 : i32, i32, i32
  }
  func.func @transform_6(%arg0: i32, %arg1: i32) -> (i32, i32, i32) {
    %c0_i32 = arith.constant 0 : i32
    %c0_i32_0 = arith.constant 0 : i32
    %c0_i32_1 = arith.constant 0 : i32
    return %arg1, %c0_i32, %c0_i32_0 : i32, i32, i32
  }
  func.func @transform_7(%arg0: i32, %arg1: i32) -> (i32, i32, i32) {
    %c0_i32 = arith.constant 0 : i32
    %c0_i32_0 = arith.constant 0 : i32
    %c0_i32_1 = arith.constant 0 : i32
    return %arg1, %c0_i32, %c0_i32_0 : i32, i32, i32
  }
  func.func @transform_8(%arg0: i32, %arg1: i32) -> (i32, i32, i32) {
    %c0_i32 = arith.constant 0 : i32
    %c0_i32_0 = arith.constant 0 : i32
    %c0_i32_1 = arith.constant 0 : i32
    return %arg1, %c0_i32, %c0_i32_0 : i32, i32, i32
  }
  func.func @transform_9(%arg0: i32, %arg1: i32) -> (i32, i32, i32) {
    %c0_i32 = arith.constant 0 : i32
    %c0_i32_0 = arith.constant 0 : i32
    %c0_i32_1 = arith.constant 0 : i32
    return %arg1, %c0_i32, %c0_i32_0 : i32, i32, i32
  }
  func.func @transform_10(%arg0: i32, %arg1: i32) -> (i32, i32, i32) {
    %c0_i32 = arith.constant 0 : i32
    %c0_i32_0 = arith.constant 0 : i32
    %c0_i32_1 = arith.constant 0 : i32
    return %arg1, %c0_i32, %c0_i32_0 : i32, i32, i32
  }
  func.func @transform_11(%arg0: i32, %arg1: i32) -> (i32, i32, i32) {
    %c0_i32 = arith.constant 0 : i32
    %c0_i32_0 = arith.constant 0 : i32
    %c0_i32_1 = arith.constant 0 : i32
    return %arg1, %c0_i32, %c0_i32_0 : i32, i32, i32
  }
  func.func @transform_12(%arg0: i32, %arg1: i32) -> (i32, i32, i32) {
    %c0_i32 = arith.constant 0 : i32
    %c0_i32_0 = arith.constant 0 : i32
    %c0_i32_1 = arith.constant 0 : i32
    return %arg1, %c0_i32, %c0_i32_0 : i32, i32, i32
  }
  func.func @transform_13(%arg0: i32, %arg1: i32) -> (i32, i32, i32) {
    %c0_i32 = arith.constant 0 : i32
    %c0_i32_0 = arith.constant 0 : i32
    %c0_i32_1 = arith.constant 0 : i32
    return %arg0, %c0_i32, %c0_i32_0 : i32, i32, i32
  }
}

module attributes {stable_mosaic.version = 11 : i64} {
  func.func @tower_layer_kernel(%arg0: i32, %arg1: i32, %arg2: memref<2x8x32xf32, #tpu.memory_space<vmem>>, %arg3: memref<1x1x32xf32, #tpu.memory_space<vmem>>, %arg4: memref<1x1x32xf32, #tpu.memory_space<vmem>>, %arg5: memref<1x32x96xbf16, #tpu.memory_space<vmem>>, %arg6: memref<1x1x96xf32, #tpu.memory_space<vmem>>, %arg7: memref<1x32x32xbf16, #tpu.memory_space<vmem>>, %arg8: memref<1x1x32xf32, #tpu.memory_space<vmem>>, %arg9: memref<1x1x32xf32, #tpu.memory_space<vmem>>, %arg10: memref<1x1x32xf32, #tpu.memory_space<vmem>>, %arg11: memref<1x32x128xbf16, #tpu.memory_space<vmem>>, %arg12: memref<1x1x128xf32, #tpu.memory_space<vmem>>, %arg13: memref<1x128x32xbf16, #tpu.memory_space<vmem>>, %arg14: memref<1x1x32xf32, #tpu.memory_space<vmem>>, %arg15: memref<2x8x32xf32, #tpu.memory_space<vmem>>) attributes {dimension_semantics = [#tpu.dimension_semantics<parallel>, #tpu.dimension_semantics<arbitrary>], iteration_bounds = array<i64: 1, 2>, scalar_prefetch = 0 : i64, scratch_operands = 0 : i64, tpu.core_type = #tpu.core_type<tc>, window_params = [{transform_indices = @transform_0, window_bounds = array<i64: 2, 8, 32>}, {transform_indices = @transform_1, window_bounds = array<i64: 1, 1, 32>}, {transform_indices = @transform_2, window_bounds = array<i64: 1, 1, 32>}, {transform_indices = @transform_3, window_bounds = array<i64: 1, 32, 96>}, {transform_indices = @transform_4, window_bounds = array<i64: 1, 1, 96>}, {transform_indices = @transform_5, window_bounds = array<i64: 1, 32, 32>}, {transform_indices = @transform_6, window_bounds = array<i64: 1, 1, 32>}, {transform_indices = @transform_7, window_bounds = array<i64: 1, 1, 32>}, {transform_indices = @transform_8, window_bounds = array<i64: 1, 1, 32>}, {transform_indices = @transform_9, window_bounds = array<i64: 1, 32, 128>}, {transform_indices = @transform_10, window_bounds = array<i64: 1, 1, 128>}, {transform_indices = @transform_11, window_bounds = array<i64: 1, 128, 32>}, {transform_indices = @transform_12, window_bounds = array<i64: 1, 1, 32>}, {transform_indices = @transform_13, window_bounds = array<i64: 2, 8, 32>}]} {
    %c0_i32 = arith.constant 0 : i32
    %0 = arith.cmpi eq, %arg1, %c0_i32 : i32
    %1 = arith.extui %0 : i1 to i32
    %c0_i32_0 = arith.constant 0 : i32
    %2 = arith.cmpi ne, %1, %c0_i32_0 : i32
    scf.if %2 {
      %c0_70 = arith.constant 0 : index
      %c0_71 = arith.constant 0 : index
      %c0_72 = arith.constant 0 : index
      %163 = vector.load %arg2[%c0_70, %c0_71, %c0_72] : memref<2x8x32xf32, #tpu.memory_space<vmem>>, vector<2x8x32xf32>
      %c0_73 = arith.constant 0 : index
      %c0_74 = arith.constant 0 : index
      %c0_75 = arith.constant 0 : index
      %164 = vector.load %arg15[%c0_73, %c0_74, %c0_75] : memref<2x8x32xf32, #tpu.memory_space<vmem>>, vector<2x8x32xf32>
      tpu.vector_store %arg15[%c0_73, %c0_74, %c0_75], %163 {strides = array<i32>} : memref<2x8x32xf32, #tpu.memory_space<vmem>>, vector<2x8x32xf32>,
    } else {
    }
    %c0 = arith.constant 0 : index
    %c0_1 = arith.constant 0 : index
    %c0_2 = arith.constant 0 : index
    %3 = vector.load %arg15[%c0, %c0_1, %c0_2] : memref<2x8x32xf32, #tpu.memory_space<vmem>>, vector<2x8x32xf32>
    %4 = vector.shape_cast %3 : vector<2x8x32xf32> to vector<16x32xf32>
    %c0_3 = arith.constant 0 : index
    %c0_4 = arith.constant 0 : index
    %c0_5 = arith.constant 0 : index
    %5 = vector.load %arg3[%c0_3, %c0_4, %c0_5] : memref<1x1x32xf32, #tpu.memory_space<vmem>>, vector<1x1x32xf32>
    %6 = vector.shape_cast %5 : vector<1x1x32xf32> to vector<1x32xf32>
    %c0_6 = arith.constant 0 : index
    %c0_7 = arith.constant 0 : index
    %c0_8 = arith.constant 0 : index
    %7 = vector.load %arg4[%c0_6, %c0_7, %c0_8] : memref<1x1x32xf32, #tpu.memory_space<vmem>>, vector<1x1x32xf32>
    %8 = vector.shape_cast %7 : vector<1x1x32xf32> to vector<1x32xf32>
    %cst = arith.constant dense<0.000000e+00> : vector<16xf32>
    %9 = vector.multi_reduction <add>, %4, %cst [1] : vector<16x32xf32> to vector<16xf32>
    %10 = vector.shape_cast %9 : vector<16xf32> to vector<16x1xf32>
    %cst_9 = arith.constant 3.200000e+01 : f32
    %11 = vector.broadcast %cst_9 : f32 to vector<16x1xf32>
    %12 = arith.divf %10, %11 : vector<16x1xf32>
    %13 = vector.broadcast %12 : vector<16x1xf32> to vector<16x32xf32>
    %14 = arith.subf %4, %13 : vector<16x32xf32>
    %15 = arith.mulf %14, %14 : vector<16x32xf32>
    %cst_10 = arith.constant dense<0.000000e+00> : vector<16xf32>
    %16 = vector.multi_reduction <add>, %15, %cst_10 [1] : vector<16x32xf32> to vector<16xf32>
    %17 = vector.shape_cast %16 : vector<16xf32> to vector<16x1xf32>
    %cst_11 = arith.constant 3.200000e+01 : f32
    %18 = vector.broadcast %cst_11 : f32 to vector<16x1xf32>
    %19 = arith.divf %17, %18 : vector<16x1xf32>
    %20 = vector.broadcast %12 : vector<16x1xf32> to vector<16x32xf32>
    %21 = arith.subf %4, %20 : vector<16x32xf32>
    %cst_12 = arith.constant 9.99999974E-6 : f32
    %22 = vector.broadcast %cst_12 : f32 to vector<16x1xf32>
    %23 = arith.addf %19, %22 : vector<16x1xf32>
    %24 = math.rsqrt %23 : vector<16x1xf32>
    %25 = vector.broadcast %24 : vector<16x1xf32> to vector<16x32xf32>
    %26 = arith.mulf %21, %25 : vector<16x32xf32>
    %27 = vector.broadcast %6 : vector<1x32xf32> to vector<16x32xf32>
    %28 = arith.mulf %26, %27 : vector<16x32xf32>
    %29 = vector.broadcast %8 : vector<1x32xf32> to vector<16x32xf32>
    %30 = arith.addf %28, %29 : vector<16x32xf32>
    %31 = arith.truncf %30 : vector<16x32xf32> to vector<16x32xbf16>
    %c0_13 = arith.constant 0 : index
    %c0_14 = arith.constant 0 : index
    %c0_15 = arith.constant 0 : index
    %32 = vector.load %arg5[%c0_13, %c0_14, %c0_15] : memref<1x32x96xbf16, #tpu.memory_space<vmem>>, vector<1x32x96xbf16>
    %33 = vector.shape_cast %32 : vector<1x32x96xbf16> to vector<32x96xbf16>
    %cst_16 = arith.constant dense<0.000000e+00> : vector<16x96xf32>
    %34 = tpu.matmul %31, %33, %cst_16 {dimension_numbers = #tpu.dot_dimension_numbers<[1], [0], [0], [1], [0, 0, 1, 1], [], []>} : vector<16x32xbf16>, vector<32x96xbf16>, vector<16x96xf32> -> vector<16x96xf32>
    %c0_17 = arith.constant 0 : index
    %c0_18 = arith.constant 0 : index
    %c0_19 = arith.constant 0 : index
    %35 = vector.load %arg6[%c0_17, %c0_18, %c0_19] : memref<1x1x96xf32, #tpu.memory_space<vmem>>, vector<1x1x96xf32>
    %36 = vector.shape_cast %35 : vector<1x1x96xf32> to vector<1x96xf32>
    %37 = vector.broadcast %36 : vector<1x96xf32> to vector<16x96xf32>
    %38 = arith.addf %34, %37 : vector<16x96xf32>
    %39 = vector.extract_strided_slice %38 {offsets = [0, 0], sizes = [16, 32], strides = [1, 1]} : vector<16x96xf32> to vector<16x32xf32>
    %cst_20 = arith.constant 2.500000e-01 : f32
    %40 = vector.broadcast %cst_20 : f32 to vector<16x32xf32>
    %41 = arith.mulf %39, %40 : vector<16x32xf32>
    %42 = vector.shape_cast %41 : vector<16x32xf32> to vector<2x8x32xf32>
    %43 = arith.truncf %42 : vector<2x8x32xf32> to vector<2x8x32xbf16>
    %44 = vector.extract_strided_slice %38 {offsets = [0, 32], sizes = [16, 32], strides = [1, 1]} : vector<16x96xf32> to vector<16x32xf32>
    %45 = vector.shape_cast %44 : vector<16x32xf32> to vector<2x8x32xf32>
    %46 = arith.truncf %45 : vector<2x8x32xf32> to vector<2x8x32xbf16>
    %47 = vector.extract_strided_slice %38 {offsets = [0, 64], sizes = [16, 32], strides = [1, 1]} : vector<16x96xf32> to vector<16x32xf32>
    %48 = vector.shape_cast %47 : vector<16x32xf32> to vector<2x8x32xf32>
    %49 = arith.truncf %48 : vector<2x8x32xf32> to vector<2x8x32xbf16>
    %50 = tpu.iota {dimensions = array<i32: 0>} : vector<8x8xi32>
    %51 = tpu.iota {dimensions = array<i32: 1>} : vector<8x8xi32>
    %c8_i32 = arith.constant 8 : i32
    %52 = vector.broadcast %c8_i32 : i32 to vector<8x8xi32>
    %53 = arith.cmpi slt, %51, %52 : vector<8x8xi32>
    %54 = arith.cmpi sle, %51, %50 : vector<8x8xi32>
    %55 = arith.andi %53, %54 : vector<8x8xi1>
    %cst_21 = arith.constant 0.000000e+00 : f32
    %cst_22 = arith.constant -1.000000e+09 : f32
    %56 = vector.broadcast %cst_21 : f32 to vector<8x8xf32>
    %57 = vector.broadcast %cst_22 : f32 to vector<8x8xf32>
    %58 = arith.select %55, %56, %57 : vector<8x8xi1>, vector<8x8xf32>
    %59 = vector.shape_cast %58 : vector<8x8xf32> to vector<1x8x8xf32>
    %60 = vector.extract_strided_slice %43 {offsets = [0, 0, 0], sizes = [2, 8, 16], strides = [1, 1, 1]} : vector<2x8x32xbf16> to vector<2x8x16xbf16>
    %61 = vector.extract_strided_slice %46 {offsets = [0, 0, 0], sizes = [2, 8, 16], strides = [1, 1, 1]} : vector<2x8x32xbf16> to vector<2x8x16xbf16>
    "tpu.trace_start"() <{level = 10 : i32, message = "bqd,bkd->bqk"}> : () -> ()
    %cst_23 = arith.constant dense<0.000000e+00> : vector<2x8x8xf32>
    %62 = tpu.matmul %60, %61, %cst_23 {dimension_numbers = #tpu.dot_dimension_numbers<[2], [2], [1], [1], [0, 0, 0, 1, 1, 1], [0], [0]>} : vector<2x8x16xbf16>, vector<2x8x16xbf16>, vector<2x8x8xf32> -> vector<2x8x8xf32>
    "tpu.trace_stop"() : () -> ()
    %63 = vector.broadcast %59 : vector<1x8x8xf32> to vector<2x8x8xf32>
    %64 = arith.addf %62, %63 : vector<2x8x8xf32>
    %cst_24 = arith.constant dense<0xFF800000> : vector<2x8xf32>
    %65 = vector.multi_reduction <maximumf>, %64, %cst_24 [2] : vector<2x8x8xf32> to vector<2x8xf32>
    %66 = vector.shape_cast %65 : vector<2x8xf32> to vector<2x8x1xf32>
    %67 = vector.broadcast %66 : vector<2x8x1xf32> to vector<2x8x8xf32>
    %68 = arith.subf %64, %67 : vector<2x8x8xf32>
    %69 = math.exp %68 : vector<2x8x8xf32>
    %cst_25 = arith.constant dense<0.000000e+00> : vector<2x8xf32>
    %70 = vector.multi_reduction <add>, %69, %cst_25 [2] : vector<2x8x8xf32> to vector<2x8xf32>
    %71 = vector.shape_cast %70 : vector<2x8xf32> to vector<2x8x1xf32>
    %72 = vector.broadcast %71 : vector<2x8x1xf32> to vector<2x8x8xf32>
    %73 = arith.divf %69, %72 : vector<2x8x8xf32>
    %74 = arith.truncf %73 : vector<2x8x8xf32> to vector<2x8x8xbf16>
    %75 = vector.extract_strided_slice %49 {offsets = [0, 0, 0], sizes = [2, 8, 16], strides = [1, 1, 1]} : vector<2x8x32xbf16> to vector<2x8x16xbf16>
    "tpu.trace_start"() <{level = 10 : i32, message = "bqk,bkd->bqd"}> : () -> ()
    %cst_26 = arith.constant dense<0.000000e+00> : vector<2x8x16xf32>
    %76 = tpu.matmul %74, %75, %cst_26 {dimension_numbers = #tpu.dot_dimension_numbers<[2], [1], [1], [2], [0, 0, 0, 1, 1, 2], [0], [0]>} : vector<2x8x8xbf16>, vector<2x8x16xbf16>, vector<2x8x16xf32> -> vector<2x8x16xf32>
    "tpu.trace_stop"() : () -> ()
    %77 = vector.extract_strided_slice %43 {offsets = [0, 0, 16], sizes = [2, 8, 16], strides = [1, 1, 1]} : vector<2x8x32xbf16> to vector<2x8x16xbf16>
    %78 = vector.extract_strided_slice %46 {offsets = [0, 0, 16], sizes = [2, 8, 16], strides = [1, 1, 1]} : vector<2x8x32xbf16> to vector<2x8x16xbf16>
    "tpu.trace_start"() <{level = 10 : i32, message = "bqd,bkd->bqk"}> : () -> ()
    %cst_27 = arith.constant dense<0.000000e+00> : vector<2x8x8xf32>
    %79 = tpu.matmul %77, %78, %cst_27 {dimension_numbers = #tpu.dot_dimension_numbers<[2], [2], [1], [1], [0, 0, 0, 1, 1, 1], [0], [0]>} : vector<2x8x16xbf16>, vector<2x8x16xbf16>, vector<2x8x8xf32> -> vector<2x8x8xf32>
    "tpu.trace_stop"() : () -> ()
    %80 = vector.broadcast %59 : vector<1x8x8xf32> to vector<2x8x8xf32>
    %81 = arith.addf %79, %80 : vector<2x8x8xf32>
    %cst_28 = arith.constant dense<0xFF800000> : vector<2x8xf32>
    %82 = vector.multi_reduction <maximumf>, %81, %cst_28 [2] : vector<2x8x8xf32> to vector<2x8xf32>
    %83 = vector.shape_cast %82 : vector<2x8xf32> to vector<2x8x1xf32>
    %84 = vector.broadcast %83 : vector<2x8x1xf32> to vector<2x8x8xf32>
    %85 = arith.subf %81, %84 : vector<2x8x8xf32>
    %86 = math.exp %85 : vector<2x8x8xf32>
    %cst_29 = arith.constant dense<0.000000e+00> : vector<2x8xf32>
    %87 = vector.multi_reduction <add>, %86, %cst_29 [2] : vector<2x8x8xf32> to vector<2x8xf32>
    %88 = vector.shape_cast %87 : vector<2x8xf32> to vector<2x8x1xf32>
    %89 = vector.broadcast %88 : vector<2x8x1xf32> to vector<2x8x8xf32>
    %90 = arith.divf %86, %89 : vector<2x8x8xf32>
    %91 = arith.truncf %90 : vector<2x8x8xf32> to vector<2x8x8xbf16>
    %92 = vector.extract_strided_slice %49 {offsets = [0, 0, 16], sizes = [2, 8, 16], strides = [1, 1, 1]} : vector<2x8x32xbf16> to vector<2x8x16xbf16>
    "tpu.trace_start"() <{level = 10 : i32, message = "bqk,bkd->bqd"}> : () -> ()
    %cst_30 = arith.constant dense<0.000000e+00> : vector<2x8x16xf32>
    %93 = tpu.matmul %91, %92, %cst_30 {dimension_numbers = #tpu.dot_dimension_numbers<[2], [1], [1], [2], [0, 0, 0, 1, 1, 2], [0], [0]>} : vector<2x8x8xbf16>, vector<2x8x16xbf16>, vector<2x8x16xf32> -> vector<2x8x16xf32>
    "tpu.trace_stop"() : () -> ()
    %94 = tpu.concatenate %76, %93 in 2 : vector<2x8x16xf32>, vector<2x8x16xf32> -> vector<2x8x32xf32>
    %95 = vector.shape_cast %94 : vector<2x8x32xf32> to vector<16x32xf32>
    %96 = arith.truncf %95 : vector<16x32xf32> to vector<16x32xbf16>
    %c0_31 = arith.constant 0 : index
    %c0_32 = arith.constant 0 : index
    %c0_33 = arith.constant 0 : index
    %97 = vector.load %arg7[%c0_31, %c0_32, %c0_33] : memref<1x32x32xbf16, #tpu.memory_space<vmem>>, vector<1x32x32xbf16>
    %98 = vector.shape_cast %97 : vector<1x32x32xbf16> to vector<32x32xbf16>
    %cst_34 = arith.constant dense<0.000000e+00> : vector<16x32xf32>
    %99 = tpu.matmul %96, %98, %cst_34 {dimension_numbers = #tpu.dot_dimension_numbers<[1], [0], [0], [1], [0, 0, 1, 1], [], []>} : vector<16x32xbf16>, vector<32x32xbf16>, vector<16x32xf32> -> vector<16x32xf32>
    %c0_35 = arith.constant 0 : index
    %c0_36 = arith.constant 0 : index
    %c0_37 = arith.constant 0 : index
    %100 = vector.load %arg8[%c0_35, %c0_36, %c0_37] : memref<1x1x32xf32, #tpu.memory_space<vmem>>, vector<1x1x32xf32>
    %101 = vector.shape_cast %100 : vector<1x1x32xf32> to vector<1x32xf32>
    %102 = vector.broadcast %101 : vector<1x32xf32> to vector<16x32xf32>
    %103 = arith.addf %99, %102 : vector<16x32xf32>
    %104 = arith.addf %4, %103 : vector<16x32xf32>
    %c0_38 = arith.constant 0 : index
    %c0_39 = arith.constant 0 : index
    %c0_40 = arith.constant 0 : index
    %105 = vector.load %arg9[%c0_38, %c0_39, %c0_40] : memref<1x1x32xf32, #tpu.memory_space<vmem>>, vector<1x1x32xf32>
    %106 = vector.shape_cast %105 : vector<1x1x32xf32> to vector<1x32xf32>
    %c0_41 = arith.constant 0 : index
    %c0_42 = arith.constant 0 : index
    %c0_43 = arith.constant 0 : index
    %107 = vector.load %arg10[%c0_41, %c0_42, %c0_43] : memref<1x1x32xf32, #tpu.memory_space<vmem>>, vector<1x1x32xf32>
    %108 = vector.shape_cast %107 : vector<1x1x32xf32> to vector<1x32xf32>
    %cst_44 = arith.constant dense<0.000000e+00> : vector<16xf32>
    %109 = vector.multi_reduction <add>, %104, %cst_44 [1] : vector<16x32xf32> to vector<16xf32>
    %110 = vector.shape_cast %109 : vector<16xf32> to vector<16x1xf32>
    %cst_45 = arith.constant 3.200000e+01 : f32
    %111 = vector.broadcast %cst_45 : f32 to vector<16x1xf32>
    %112 = arith.divf %110, %111 : vector<16x1xf32>
    %113 = vector.broadcast %112 : vector<16x1xf32> to vector<16x32xf32>
    %114 = arith.subf %104, %113 : vector<16x32xf32>
    %115 = arith.mulf %114, %114 : vector<16x32xf32>
    %cst_46 = arith.constant dense<0.000000e+00> : vector<16xf32>
    %116 = vector.multi_reduction <add>, %115, %cst_46 [1] : vector<16x32xf32> to vector<16xf32>
    %117 = vector.shape_cast %116 : vector<16xf32> to vector<16x1xf32>
    %cst_47 = arith.constant 3.200000e+01 : f32
    %118 = vector.broadcast %cst_47 : f32 to vector<16x1xf32>
    %119 = arith.divf %117, %118 : vector<16x1xf32>
    %120 = vector.broadcast %112 : vector<16x1xf32> to vector<16x32xf32>
    %121 = arith.subf %104, %120 : vector<16x32xf32>
    %cst_48 = arith.constant 9.99999974E-6 : f32
    %122 = vector.broadcast %cst_48 : f32 to vector<16x1xf32>
    %123 = arith.addf %119, %122 : vector<16x1xf32>
    %124 = math.rsqrt %123 : vector<16x1xf32>
    %125 = vector.broadcast %124 : vector<16x1xf32> to vector<16x32xf32>
    %126 = arith.mulf %121, %125 : vector<16x32xf32>
    %127 = vector.broadcast %106 : vector<1x32xf32> to vector<16x32xf32>
    %128 = arith.mulf %126, %127 : vector<16x32xf32>
    %129 = vector.broadcast %108 : vector<1x32xf32> to vector<16x32xf32>
    %130 = arith.addf %128, %129 : vector<16x32xf32>
    %131 = arith.truncf %130 : vector<16x32xf32> to vector<16x32xbf16>
    %c0_49 = arith.constant 0 : index
    %c0_50 = arith.constant 0 : index
    %c0_51 = arith.constant 0 : index
    %132 = vector.load %arg11[%c0_49, %c0_50, %c0_51] : memref<1x32x128xbf16, #tpu.memory_space<vmem>>, vector<1x32x128xbf16>
    %133 = vector.shape_cast %132 : vector<1x32x128xbf16> to vector<32x128xbf16>
    %cst_52 = arith.constant dense<0.000000e+00> : vector<16x128xf32>
    %134 = tpu.matmul %131, %133, %cst_52 {dimension_numbers = #tpu.dot_dimension_numbers<[1], [0], [0], [1], [0, 0, 1, 1], [], []>} : vector<16x32xbf16>, vector<32x128xbf16>, vector<16x128xf32> -> vector<16x128xf32>
    %c0_53 = arith.constant 0 : index
    %c0_54 = arith.constant 0 : index
    %c0_55 = arith.constant 0 : index
    %135 = vector.load %arg12[%c0_53, %c0_54, %c0_55] : memref<1x1x128xf32, #tpu.memory_space<vmem>>, vector<1x1x128xf32>
    %136 = vector.shape_cast %135 : vector<1x1x128xf32> to vector<1x128xf32>
    %137 = vector.broadcast %136 : vector<1x128xf32> to vector<16x128xf32>
    %138 = arith.addf %134, %137 : vector<16x128xf32>
    %139 = arith.mulf %138, %138 : vector<16x128xf32>
    %140 = arith.mulf %138, %139 : vector<16x128xf32>
    %cst_56 = arith.constant 4.471500e-02 : f32
    %141 = vector.broadcast %cst_56 : f32 to vector<16x128xf32>
    %142 = arith.mulf %141, %140 : vector<16x128xf32>
    %143 = arith.addf %138, %142 : vector<16x128xf32>
    %cst_57 = arith.constant 0.797884583 : f32
    %144 = vector.broadcast %cst_57 : f32 to vector<16x128xf32>
    %145 = arith.mulf %144, %143 : vector<16x128xf32>
    %146 = math.tanh %145 : vector<16x128xf32>
    %cst_58 = arith.constant 1.000000e+00 : f32
    %147 = vector.broadcast %cst_58 : f32 to vector<16x128xf32>
    %148 = arith.addf %147, %146 : vector<16x128xf32>
    %cst_59 = arith.constant 5.000000e-01 : f32
    %149 = vector.broadcast %cst_59 : f32 to vector<16x128xf32>
    %150 = arith.mulf %149, %148 : vector<16x128xf32>
    %151 = arith.mulf %138, %150 : vector<16x128xf32>
    %152 = arith.truncf %151 : vector<16x128xf32> to vector<16x128xbf16>
    %c0_60 = arith.constant 0 : index
    %c0_61 = arith.constant 0 : index
    %c0_62 = arith.constant 0 : index
    %153 = vector.load %arg13[%c0_60, %c0_61, %c0_62] : memref<1x128x32xbf16, #tpu.memory_space<vmem>>, vector<1x128x32xbf16>
    %154 = vector.shape_cast %153 : vector<1x128x32xbf16> to vector<128x32xbf16>
    %cst_63 = arith.constant dense<0.000000e+00> : vector<16x32xf32>
    %155 = tpu.matmul %152, %154, %cst_63 {dimension_numbers = #tpu.dot_dimension_numbers<[1], [0], [0], [1], [0, 0, 1, 1], [], []>} : vector<16x128xbf16>, vector<128x32xbf16>, vector<16x32xf32> -> vector<16x32xf32>
    %c0_64 = arith.constant 0 : index
    %c0_65 = arith.constant 0 : index
    %c0_66 = arith.constant 0 : index
    %156 = vector.load %arg14[%c0_64, %c0_65, %c0_66] : memref<1x1x32xf32, #tpu.memory_space<vmem>>, vector<1x1x32xf32>
    %157 = vector.shape_cast %156 : vector<1x1x32xf32> to vector<1x32xf32>
    %158 = vector.broadcast %157 : vector<1x32xf32> to vector<16x32xf32>
    %159 = arith.addf %155, %158 : vector<16x32xf32>
    %160 = arith.addf %104, %159 : vector<16x32xf32>
    %161 = vector.shape_cast %160 : vector<16x32xf32> to vector<2x8x32xf32>
    %c0_67 = arith.constant 0 : index
    %c0_68 = arith.constant 0 : index
    %c0_69 = arith.constant 0 : index
    %162 = vector.load %arg15[%c0_67, %c0_68, %c0_69] : memref<2x8x32xf32, #tpu.memory_space<vmem>>, vector<2x8x32xf32>
    tpu.vector_store %arg15[%c0_67, %c0_68, %c0_69], %161 {strides = array<i32>} : memref<2x8x32xf32, #tpu.memory_space<vmem>>, vector<2x8x32xf32>,
    return
  }
  func.func @transform_0(%arg0: i32, %arg1: i32) -> (i32, i32, i32) {
    %c0_i32 = arith.constant 0 : i32
    %c0_i32_0 = arith.constant 0 : i32
    %c0_i32_1 = arith.constant 0 : i32
    return %arg0, %c0_i32, %c0_i32_0 : i32, i32, i32
  }
  func.func @transform_1(%arg0: i32, %arg1: i32) -> (i32, i32, i32) {
    %c0_i32 = arith.constant 0 : i32
    %c0_i32_0 = arith.constant 0 : i32
    %c0_i32_1 = arith.constant 0 : i32
    return %arg1, %c0_i32, %c0_i32_0 : i32, i32, i32
  }
  func.func @transform_2(%arg0: i32, %arg1: i32) -> (i32, i32, i32) {
    %c0_i32 = arith.constant 0 : i32
    %c0_i32_0 = arith.constant 0 : i32
    %c0_i32_1 = arith.constant 0 : i32
    return %arg1, %c0_i32, %c0_i32_0 : i32, i32, i32
  }
  func.func @transform_3(%arg0: i32, %arg1: i32) -> (i32, i32, i32) {
    %c0_i32 = arith.constant 0 : i32
    %c0_i32_0 = arith.constant 0 : i32
    %c0_i32_1 = arith.constant 0 : i32
    return %arg1, %c0_i32, %c0_i32_0 : i32, i32, i32
  }
  func.func @transform_4(%arg0: i32, %arg1: i32) -> (i32, i32, i32) {
    %c0_i32 = arith.constant 0 : i32
    %c0_i32_0 = arith.constant 0 : i32
    %c0_i32_1 = arith.constant 0 : i32
    return %arg1, %c0_i32, %c0_i32_0 : i32, i32, i32
  }
  func.func @transform_5(%arg0: i32, %arg1: i32) -> (i32, i32, i32) {
    %c0_i32 = arith.constant 0 : i32
    %c0_i32_0 = arith.constant 0 : i32
    %c0_i32_1 = arith.constant 0 : i32
    return %arg1, %c0_i32, %c0_i32_0 : i32, i32, i32
  }
  func.func @transform_6(%arg0: i32, %arg1: i32) -> (i32, i32, i32) {
    %c0_i32 = arith.constant 0 : i32
    %c0_i32_0 = arith.constant 0 : i32
    %c0_i32_1 = arith.constant 0 : i32
    return %arg1, %c0_i32, %c0_i32_0 : i32, i32, i32
  }
  func.func @transform_7(%arg0: i32, %arg1: i32) -> (i32, i32, i32) {
    %c0_i32 = arith.constant 0 : i32
    %c0_i32_0 = arith.constant 0 : i32
    %c0_i32_1 = arith.constant 0 : i32
    return %arg1, %c0_i32, %c0_i32_0 : i32, i32, i32
  }
  func.func @transform_8(%arg0: i32, %arg1: i32) -> (i32, i32, i32) {
    %c0_i32 = arith.constant 0 : i32
    %c0_i32_0 = arith.constant 0 : i32
    %c0_i32_1 = arith.constant 0 : i32
    return %arg1, %c0_i32, %c0_i32_0 : i32, i32, i32
  }
  func.func @transform_9(%arg0: i32, %arg1: i32) -> (i32, i32, i32) {
    %c0_i32 = arith.constant 0 : i32
    %c0_i32_0 = arith.constant 0 : i32
    %c0_i32_1 = arith.constant 0 : i32
    return %arg1, %c0_i32, %c0_i32_0 : i32, i32, i32
  }
  func.func @transform_10(%arg0: i32, %arg1: i32) -> (i32, i32, i32) {
    %c0_i32 = arith.constant 0 : i32
    %c0_i32_0 = arith.constant 0 : i32
    %c0_i32_1 = arith.constant 0 : i32
    return %arg1, %c0_i32, %c0_i32_0 : i32, i32, i32
  }
  func.func @transform_11(%arg0: i32, %arg1: i32) -> (i32, i32, i32) {
    %c0_i32 = arith.constant 0 : i32
    %c0_i32_0 = arith.constant 0 : i32
    %c0_i32_1 = arith.constant 0 : i32
    return %arg1, %c0_i32, %c0_i32_0 : i32, i32, i32
  }
  func.func @transform_12(%arg0: i32, %arg1: i32) -> (i32, i32, i32) {
    %c0_i32 = arith.constant 0 : i32
    %c0_i32_0 = arith.constant 0 : i32
    %c0_i32_1 = arith.constant 0 : i32
    return %arg1, %c0_i32, %c0_i32_0 : i32, i32, i32
  }
  func.func @transform_13(%arg0: i32, %arg1: i32) -> (i32, i32, i32) {
    %c0_i32 = arith.constant 0 : i32
    %c0_i32_0 = arith.constant 0 : i32
    %c0_i32_1 = arith.constant 0 : i32
    return %arg0, %c0_i32, %c0_i32_0 : i32, i32, i32
  }
}

</mosaic_0001>

<llo_original>
// kernel: itra_forward.9
$region0: #{itra_forward.9}
  #allocation0 [shape = 'u32[]', space=smem, size = 0x4, offset = 0x4, fixed_abs, tag = 'smem constant byte address 0x4 - core index']
  #allocation1 [shape = 'u32[72,128]{1,0:T(1,128)}', space=vmem, size = 0x9000, scoped, tag = 'internal scratch']
  %s0 = inlined_call_operand.vmem [shape: f32[2,32], index: 0, kind: input, shape index: {}]
  %s1 = inlined_call_operand.vmem [shape: f32[1,32], index: 1, kind: input, shape index: {}]
  %s2 = inlined_call_operand.vmem [shape: f32[1,32], index: 2, kind: input, shape index: {}]
  %s3 = inlined_call_operand.vmem [shape: bf16[32,32], index: 3, kind: input, shape index: {}]
  %s4 = inlined_call_operand.hbm [shape: f32[2,32], index: 4, kind: output, shape index: {}]
  %s5 = sld [smem:[#allocation0]]
  $region26: #{itra_forward.9} parent=0
    _
  %s7 = ssub.s32 1, %s5
  %s8 = scalar_select 0, %s7, %s5
  $region1: #{itra_forward.9} parent=0
    #allocation2 [shape = 'u8[1024]{0}', space=vmem, size = 0x400, scoped, tag = 'output window, operand 0, single buffered']
    #allocation3 [shape = 's32[1]{0}', space=sflag, size = 0x4, scoped, tag = 'scoped memory for itra_forward.9']
    %9 = vsyncpa [#allocation3], 0
    // Predicated region
    $region2: #{itra_forward.9} parent=1 // pred_check
      _
    $region3: #{itra_forward.9} parent=1 // pred_check_branch
      %11 = sbr.rel (0) target = $region5
    $region4: #{itra_forward.9} parent=1 // pred_region
      _
    $region5: #{itra_forward.9} parent=1 // pred_fallthru
      _
    // Predicated region
    $region6: #{itra_forward.9} parent=1 // pred_check
      _
    $region7: #{itra_forward.9} parent=1 // pred_check_branch
      %13 = sbr.rel (0) target = $region9
    $region8: #{itra_forward.9} parent=1 // pred_region
      _
    $region9: #{itra_forward.9} parent=1 // pred_fallthru
      _
    // Predicated region
    $region10: #{itra_forward.9} parent=1 // pred_check
      _
    $region11: #{itra_forward.9} parent=1 // pred_check_branch
      %15 = sbr.rel (0) target = $region13
    $region12: #{itra_forward.9} parent=1 // pred_region
      _
    $region13: #{itra_forward.9} parent=1 // pred_fallthru
      _
    // Predicated region
    $region14: #{itra_forward.9} parent=1 // pred_check
      _
    $region15: #{itra_forward.9} parent=1 // pred_check_branch
      %17 = sbr.rel (0) target = $region17
    $region16: #{itra_forward.9} parent=1 // pred_region
      _
    $region17: #{itra_forward.9} parent=1 // pred_fallthru
      _
    %v19 = vld [vmem:[%s0] sm:$0x3]
    %v20 = vld [vmem:[%s1] sm:$0x1]
    %v21 = vld [vmem:[%s2] sm:$0x1]
    %vm22 = vcmask 254976
    %v23 = vsel %vm22, %v19, 0.0
    %24 = vadd.xlane.f32.xlu0 %v23
    %v25 = vpop.xlane.xlu0 %24
    %v26 = vrcp.pop 32.0
    %v27 = vmul.f32 32.0, %v26
    %v28 = vsub.f32 1.0, %v27
    %v29 = vmul.f32 %v26, %v28
    %v30 = vadd.f32 %v26, %v29
    %vm31 = vweird.f32 %v26
    %v32 = vsel %vm31, %v26, %v30
    %v33 = vmul.f32 %v25, %v32
    %v34 = vsub.f32 %v19, %v33
    %v35 = vmul.f32 %v34, %v34
    %v36 = vsel %vm22, %v35, 0.0
    %37 = vadd.xlane.f32.xlu0 %v36
    %v38 = vpop.xlane.xlu0 %37
    %v39 = vmul.f32 %v38, %v32
    %v40 = vadd.f32 %v39, 1e-05
    %v41 = vrsqrt.pop %v40
    %v42 = vmul.f32 %v41, %v40
    %v43 = vmul.f32 %v42, %v41
    %v44 = vmul.f32 0.5, %v43
    %v45 = vsub.f32 1.5, %v44
    %v46 = vmul.f32 %v41, %v45
    %vm47 = vweird.f32 %v40
    %vm48 = vweird.f32 %v41
    %vm49 = vmor %vm47, %vm48
    %v50 = vsel %vm49, %v41, %v46
    %v51 = vmul.f32 %v34, %v50
    %v53 = vperm.slane %v20, 0
    %v55 = vmul.f32 %v51, %v53
    %v57 = vperm.slane %v21, 0
    %v59 = vadd.f32 %v55, %v57
    %v60 = vpack.c.bf16 %v59, %v59
    %v61 = vld [vmem:[%s3] sm:$0xf]
    %v62 = vld [vmem:[%s3 + $0x4] sm:$0xf]
    %v63 = vld [vmem:[%s3 + $0x8] sm:$0xf]
    %v64 = vld [vmem:[%s3 + $0xc] sm:$0xf]
    %v69 = vunpack.c.l.b16 %v61
    %v70 = vunpack.c.l.b16 %v62
    %v71 = vunpack.c.l.b16 %v63
    %v72 = vunpack.c.l.b16 %v64
    %v73 = vpack.c.b16 %v70, %v69
    %v74 = vpack.c.b16 %v72, %v71
    %vm77 = vcmask 261120
    %v79 = vsel %vm77, %v60, 0
    %81 = vmatpush.bf16.msra.mxu0 0
    %82 = vmatpush.bf16.msra.mxu0 0
    %83 = vmatpush.bf16.msra.mxu0 0
    %84 = vmatpush.bf16.msra.mxu0 0
    %85 = vmatpush.bf16.msra.mxu0 0
    %86 = vmatpush.bf16.msra.mxu0 0
    %87 = vmatpush.bf16.msra.mxu0 %v74
    %88 = vmatpush.bf16.msra.mxu0 %v73
    %89 = vmatmul.bf16.gmra.mxu0 %v79
    %v90 = vpop.f32.mrf.mxu0
    %v91 = vadd.f32 0.0, %v90
    %v92 = vpop.f32.mrf.mxu0
    %93 = vdwg.mxu0
    %94 = vst.msk [vmem:[#allocation2] sm:$0x3] %vm22, %v91
    // Predicated region
    $region18: #{itra_forward.9} parent=1 // pred_check
      _
    $region19: #{itra_forward.9} parent=1 // pred_check_branch
      %96 = sbr.rel (0) target = $region21
    $region20: #{itra_forward.9} parent=1 // pred_region
      %98 = vsyncadd [#allocation3], 0
      %s100 = sshll.u32 [#allocation2], 4
      %s101 = int_to_ptr.vmem [resolvable:$true] %s100
      %s102 = sshll.u32 %s4, 4
      %s103 = int_to_ptr.hbm [resolvable:$true] %s102
      %105 = dma.vmem_to_hbm [thread:$0]  %s101, 32, %s103, [#allocation3]
    $region21: #{itra_forward.9} parent=1 // pred_fallthru
      _
    // Predicated region
    $region22: #{itra_forward.9} parent=1 // pred_check
      _
    $region23: #{itra_forward.9} parent=1 // pred_check_branch
      %107 = sbr.rel (0) target = $region25
    $region24: #{itra_forward.9} parent=1 // pred_region
      %109 = dma.done [#allocation3], 32
    $region25: #{itra_forward.9} parent=1 // pred_fallthru
      _
    %110 = vsyncpa [#allocation3], 1

// kernel: itra_forward.7
$region0: #{itra_forward.7}
  #allocation0 [shape = 'u32[]', space=smem, size = 0x4, offset = 0x4, fixed_abs, tag = 'smem constant byte address 0x4 - core index']
  #allocation1 [shape = 'u32[72,128]{1,0:T(1,128)}', space=vmem, size = 0x9000, scoped, tag = 'internal scratch']
  %s0 = inlined_call_operand.vmem [shape: f32[8,256], index: 0, kind: input, shape index: {}]
  %s1 = inlined_call_operand.vmem [shape: bf16[256,32], index: 1, kind: input, shape index: {}]
  %s2 = inlined_call_operand.vmem [shape: f32[8,32], index: 2, kind: output, shape index: {}]
  %s3 = sld [smem:[#allocation0]]
  $region18: #{itra_forward.7} parent=0
    _
  %s5 = ssub.s32 1, %s3
  %s6 = scalar_select 0, %s5, %s3
  // Predicated region
  $region2: #{itra_forward.7} parent=0 // pred_check
    _
  $region3: #{itra_forward.7} parent=0 // pred_check_branch
    %8 = sbr.rel (0) target = $region5
  $region4: #{itra_forward.7} parent=0 // pred_region
    _
  $region5: #{itra_forward.7} parent=0 // pred_fallthru
    _
  // Predicated region
  $region6: #{itra_forward.7} parent=0 // pred_check
    _
  $region7: #{itra_forward.7} parent=0 // pred_check_branch
    %10 = sbr.rel (0) target = $region9
  $region8: #{itra_forward.7} parent=0 // pred_region
    _
  $region9: #{itra_forward.7} parent=0 // pred_fallthru
    _
  %v11 = vld [vmem:[%s0] sm:$0xff]
  %v12 = vld [vmem:[%s0 + $0x8] sm:$0xff]
  %v13 = vpack.c.bf16 %v11, %v11
  %v14 = vpack.c.bf16 %v12, %v12
  %v15 = vld [vmem:[%s1] sm:$0xf]
  %v16 = vld [vmem:[%s1 + $0x4] sm:$0xf]
  %v17 = vld [vmem:[%s1 + $0x8] sm:$0xf]
  %v18 = vld [vmem:[%s1 + $0xc] sm:$0xf]
  %v19 = vld [vmem:[%s1 + $0x10] sm:$0xf]
  %v20 = vld [vmem:[%s1 + $0x14] sm:$0xf]
  %v21 = vld [vmem:[%s1 + $0x18] sm:$0xf]
  %v22 = vld [vmem:[%s1 + $0x1c] sm:$0xf]
  %v23 = vld [vmem:[%s1 + $0x20] sm:$0xf]
  %v24 = vld [vmem:[%s1 + $0x24] sm:$0xf]
  %v25 = vld [vmem:[%s1 + $0x28] sm:$0xf]
  %v26 = vld [vmem:[%s1 + $0x2c] sm:$0xf]
  %v27 = vld [vmem:[%s1 + $0x30] sm:$0xf]
  %v28 = vld [vmem:[%s1 + $0x34] sm:$0xf]
  %v29 = vld [vmem:[%s1 + $0x38] sm:$0xf]
  %v30 = vld [vmem:[%s1 + $0x3c] sm:$0xf]
  %v31 = vld [vmem:[%s1 + $0x40] sm:$0xf]
  %v32 = vld [vmem:[%s1 + $0x44] sm:$0xf]
  %v33 = vld [vmem:[%s1 + $0x48] sm:$0xf]
  %v34 = vld [vmem:[%s1 + $0x4c] sm:$0xf]
  %v35 = vld [vmem:[%s1 + $0x50] sm:$0xf]
  %v36 = vld [vmem:[%s1 + $0x54] sm:$0xf]
  %v37 = vld [vmem:[%s1 + $0x58] sm:$0xf]
  %v38 = vld [vmem:[%s1 + $0x5c] sm:$0xf]
  %v39 = vld [vmem:[%s1 + $0x60] sm:$0xf]
  %v40 = vld [vmem:[%s1 + $0x64] sm:$0xf]
  %v41 = vld [vmem:[%s1 + $0x68] sm:$0xf]
  %v42 = vld [vmem:[%s1 + $0x6c] sm:$0xf]
  %v43 = vld [vmem:[%s1 + $0x70] sm:$0xf]
  %v44 = vld [vmem:[%s1 + $0x74] sm:$0xf]
  %v45 = vld [vmem:[%s1 + $0x78] sm:$0xf]
  %v46 = vld [vmem:[%s1 + $0x7c] sm:$0xf]
  %v79 = vunpack.c.l.b16 %v15
  %v80 = vunpack.c.l.b16 %v16
  %v81 = vunpack.c.l.b16 %v17
  %v82 = vunpack.c.l.b16 %v18
  %v83 = vunpack.c.l.b16 %v19
  %v84 = vunpack.c.l.b16 %v20
  %v85 = vunpack.c.l.b16 %v21
  %v86 = vunpack.c.l.b16 %v22
  %v87 = vunpack.c.l.b16 %v23
  %v88 = vunpack.c.l.b16 %v24
  %v89 = vunpack.c.l.b16 %v25
  %v90 = vunpack.c.l.b16 %v26
  %v91 = vunpack.c.l.b16 %v27
  %v92 = vunpack.c.l.b16 %v28
  %v93 = vunpack.c.l.b16 %v29
  %v94 = vunpack.c.l.b16 %v30
  %v95 = vunpack.c.l.b16 %v31
  %v96 = vunpack.c.l.b16 %v32
  %v97 = vunpack.c.l.b16 %v33
  %v98 = vunpack.c.l.b16 %v34
  %v99 = vunpack.c.l.b16 %v35
  %v100 = vunpack.c.l.b16 %v36
  %v101 = vunpack.c.l.b16 %v37
  %v102 = vunpack.c.l.b16 %v38
  %v103 = vunpack.c.l.b16 %v39
  %v104 = vunpack.c.l.b16 %v40
  %v105 = vunpack.c.l.b16 %v41
  %v106 = vunpack.c.l.b16 %v42
  %v107 = vunpack.c.l.b16 %v43
  %v108 = vunpack.c.l.b16 %v44
  %v109 = vunpack.c.l.b16 %v45
  %v110 = vunpack.c.l.b16 %v46
  %v111 = vpack.c.b16 %v80, %v79
  %v112 = vpack.c.b16 %v82, %v81
  %v113 = vpack.c.b16 %v84, %v83
  %v114 = vpack.c.b16 %v86, %v85
  %v115 = vpack.c.b16 %v88, %v87
  %v116 = vpack.c.b16 %v90, %v89
  %v117 = vpack.c.b16 %v92, %v91
  %v118 = vpack.c.b16 %v94, %v93
  %v119 = vpack.c.b16 %v96, %v95
  %v120 = vpack.c.b16 %v98, %v97
  %v121 = vpack.c.b16 %v100, %v99
  %v122 = vpack.c.b16 %v102, %v101
  %v123 = vpack.c.b16 %v104, %v103
  %v124 = vpack.c.b16 %v106, %v105
  %v125 = vpack.c.b16 %v108, %v107
  %v126 = vpack.c.b16 %v110, %v109
  %143 = vmatpush.bf16.msra.mxu0 %v118
  %144 = vmatpush.bf16.msra.mxu0 %v117
  %145 = vmatpush.bf16.msra.mxu0 %v116
  %146 = vmatpush.bf16.msra.mxu0 %v115
  %147 = vmatpush.bf16.msra.mxu0 %v114
  %148 = vmatpush.bf16.msra.mxu0 %v113
  %149 = vmatpush.bf16.msra.mxu0 %v112
  %150 = vmatpush.bf16.msra.mxu0 %v111
  %151 = vmatmul.bf16.gmra.mxu0 %v13
  %v152 = vpop.f32.mrf.mxu0
  %v153 = vadd.f32 0.0, %v152
  %v154 = vpop.f32.mrf.mxu0
  %155 = vdwg.mxu0
  %156 = vmatpush.bf16.msra.mxu0 %v126
  %157 = vmatpush.bf16.msra.mxu0 %v125
  %158 = vmatpush.bf16.msra.mxu0 %v124
  %159 = vmatpush.bf16.msra.mxu0 %v123
  %160 = vmatpush.bf16.msra.mxu0 %v122
  %161 = vmatpush.bf16.msra.mxu0 %v121
  %162 = vmatpush.bf16.msra.mxu0 %v120
  %163 = vmatpush.bf16.msra.mxu0 %v119
  %164 = vmatmul.bf16.gmra.mxu0 %v14
  %v165 = vpop.f32.mrf.mxu0
  %v166 = vadd.f32 %v153, %v165
  %v167 = vpop.f32.mrf.mxu0
  %168 = vdwg.mxu0
  %vm169 = vcmask 261120
  %170 = vst.msk [vmem:[%s2] sm:$0xff] %vm169, %v166
  // Predicated region
  $region10: #{itra_forward.7} parent=0 // pred_check
    _
  $region11: #{itra_forward.7} parent=0 // pred_check_branch
    %172 = sbr.rel (0) target = $region13
  $region12: #{itra_forward.7} parent=0 // pred_region
    _
  $region13: #{itra_forward.7} parent=0 // pred_fallthru
    _
  // Predicated region
  $region14: #{itra_forward.7} parent=0 // pred_check
    _
  $region15: #{itra_forward.7} parent=0 // pred_check_branch
    %174 = sbr.rel (0) target = $region17
  $region16: #{itra_forward.7} parent=0 // pred_region
    _
  $region17: #{itra_forward.7} parent=0 // pred_fallthru
    _

// kernel: itra_forward.8
$region0: #{itra_forward.8}
  #allocation0 [shape = 'u32[]', space=smem, size = 0x4, offset = 0x4, fixed_abs, tag = 'smem constant byte address 0x4 - core index']
  #allocation1 [shape = 'u32[72,128]{1,0:T(1,128)}', space=vmem, size = 0x9000, scoped, tag = 'internal scratch']
  %s0 = inlined_call_operand.vmem [shape: f32[2,8,32], index: 0, kind: input, shape index: {}, may-alias: {0,13}]
  %s1 = inlined_call_operand.vmem [shape: f32[2,1,32], index: 1, kind: input, shape index: {}]
  %s2 = inlined_call_operand.vmem [shape: f32[2,1,32], index: 2, kind: input, shape index: {}]
  %s3 = inlined_call_operand.vmem [shape: bf16[2,32,96], index: 3, kind: input, shape index: {}]
  %s4 = inlined_call_operand.vmem [shape: f32[2,1,96], index: 4, kind: input, shape index: {}]
  %s5 = inlined_call_operand.vmem [shape: bf16[2,32,32], index: 5, kind: input, shape index: {}]
  %s6 = inlined_call_operand.vmem [shape: f32[2,1,32], index: 6, kind: input, shape index: {}]
  %s7 = inlined_call_operand.vmem [shape: f32[2,1,32], index: 7, kind: input, shape index: {}]
  %s8 = inlined_call_operand.vmem [shape: f32[2,1,32], index: 8, kind: input, shape index: {}]
  %s9 = inlined_call_operand.vmem [shape: bf16[2,32,128], index: 9, kind: input, shape index: {}]
  %s10 = inlined_call_operand.vmem [shape: f32[2,1,128], index: 10, kind: input, shape index: {}]
  %s11 = inlined_call_operand.vmem [shape: bf16[2,128,32], index: 11, kind: input, shape index: {}]
  %s12 = inlined_call_operand.vmem [shape: f32[2,1,32], index: 12, kind: input, shape index: {}]
  %s13 = inlined_call_operand.vmem [shape: f32[2,8,32], index: 13, kind: output, shape index: {}, may-alias: {0,13}]
  %s14 = sld [smem:[#allocation0]]
  $region89: #{itra_forward.8} parent=0
    _
  %s16 = ssub.s32 1, %s14
  %s17 = scalar_select 0, %s16, %s14
  loop: start=0, step=1, limit=4
  $region2: #{itra_forward.8} parent=0 // loop_pre_header
    _
  $region3: #{itra_forward.8} parent=0 // loop_header
    %s19 = sphi 0, %s23
    %p20 = scmp.ge.s32.totalorder %s19, 4
    %s26 = sphi 0, %s38
    %s27 = sphi 0, %s34
    %s28 = sphi 0, %s26
    %s29 = sphi 0, %s27
    %s30 = sphi 0, %s28
    %s31 = sphi 0, %s29
    %s41 = sphi 0, %s43
    %s44 = sphi 0, %s41
    %s45 = sphi 0, %s44
    %s61 = sphi 0, %s45
    %s67 = sphi 0, %s69
    %s70 = sphi 0, %s67
    %s71 = sphi 0, %s70
    %s87 = sphi 0, %s71
    %s93 = sphi 0, %s95
    %s96 = sphi 0, %s93
    %s97 = sphi 0, %s96
    %s113 = sphi 0, %s97
    %s119 = sphi 0, %s121
    %s122 = sphi 0, %s119
    %s123 = sphi 0, %s122
    %s139 = sphi 0, %s123
    %s145 = sphi 0, %s147
    %s148 = sphi 0, %s145
    %s149 = sphi 0, %s148
    %s165 = sphi 0, %s149
    %s171 = sphi 0, %s173
    %s174 = sphi 0, %s171
    %s175 = sphi 0, %s174
    %s191 = sphi 0, %s175
    %s197 = sphi 0, %s199
    %s200 = sphi 0, %s197
    %s201 = sphi 0, %s200
    %s217 = sphi 0, %s201
    %s223 = sphi 0, %s225
    %s226 = sphi 0, %s223
    %s227 = sphi 0, %s226
    %s243 = sphi 0, %s227
    %s249 = sphi 0, %s251
    %s252 = sphi 0, %s249
    %s253 = sphi 0, %s252
    %s269 = sphi 0, %s253
    %s275 = sphi 0, %s277
    %s278 = sphi 0, %s275
    %s279 = sphi 0, %s278
    %s295 = sphi 0, %s279
    %s301 = sphi 0, %s303
    %s304 = sphi 0, %s301
    %s305 = sphi 0, %s304
    %s321 = sphi 0, %s305
    %s327 = sphi 0, %s329
    %s330 = sphi 0, %s327
    %s331 = sphi 0, %s330
    %s347 = sphi 0, %s331
    %s353 = sphi 0, %s355
    %s356 = sphi 0, %s353
    %s357 = sphi 0, %s356
    %s373 = sphi 0, %s357
    %s379 = sphi 0, %s381
    %s382 = sphi 0, %s379
    %s383 = sphi 0, %s382
    %s399 = sphi 0, %s383
  $region4: #{itra_forward.8} parent=0 // loop_header_branch
    %22 = sbr.rel (%p20) target = $region8
  $region5: #{itra_forward.8} parent=0 // loop_body
    %s24 = ssub.s32 %s19, 1
    %s25 = ssub.s32 %s19, 2
    %s32 = sadd.s32 1, %s27
    %p33 = scmp.ge.s32.totalorder %s32, 2
    %s34 = scalar_select %p33, 0, %s32
    %s35 = sadd.s32 1, %s26
    %s36 = scalar_select %p33, %s35, %s26
    %p37 = scmp.ge.s32.totalorder %s36, 1
    %s38 = scalar_select %p37, 0, %s36
    %s39 = ssub.s32 %s26, %s38
    %p40 = scmp.eq.s32.totalorder %s39, 0
    %s42 = sadd.s32 %s41, 1
    %s43 = scalar_select %p40, %s41, %s42
    %p46 = pneg %p40
    %p47 = scmp.eq.s32.totalorder %s19, 1
    %p48 = por %p46, %p47
    %p49 = scmp.ne.s32.totalorder %s41, %s44
    %p50 = scmp.eq.s32.totalorder %s19, 0
    %p51 = por %p49, %p50
    %p52 = scmp.ne.s32.totalorder %s41, %s44
    %p53 = scmp.eq.s32.totalorder %s24, 1
    %p54 = por %p52, %p53
    %p55 = scmp.ne.s32.totalorder %s44, %s45
    %p56 = scmp.eq.s32.totalorder %s24, 0
    %p57 = por %p55, %p56
    %p58 = scmp.ne.s32.totalorder %s44, %s45
    %p59 = scmp.eq.s32.totalorder %s25, 1
    %p60 = por %p58, %p59
    %p62 = scmp.ne.s32.totalorder %s45, %s61
    %p63 = scmp.eq.s32.totalorder %s25, 0
    %p64 = por %p62, %p63
    %s65 = ssub.s32 %s27, %s34
    %p66 = scmp.eq.s32.totalorder %s65, 0
    %s68 = sadd.s32 %s67, 1
    %s69 = scalar_select %p66, %s67, %s68
    %p72 = pneg %p66
    %p73 = scmp.eq.s32.totalorder %s19, 1
    %p74 = por %p72, %p73
    %p75 = scmp.ne.s32.totalorder %s67, %s70
    %p76 = scmp.eq.s32.totalorder %s19, 0
    %p77 = por %p75, %p76
    %p78 = scmp.ne.s32.totalorder %s67, %s70
    %p79 = scmp.eq.s32.totalorder %s24, 1
    %p80 = por %p78, %p79
    %p81 = scmp.ne.s32.totalorder %s70, %s71
    %p82 = scmp.eq.s32.totalorder %s24, 0
    %p83 = por %p81, %p82
    %p84 = scmp.ne.s32.totalorder %s70, %s71
    %p85 = scmp.eq.s32.totalorder %s25, 1
    %p86 = por %p84, %p85
    %p88 = scmp.ne.s32.totalorder %s71, %s87
    %p89 = scmp.eq.s32.totalorder %s25, 0
    %p90 = por %p88, %p89
    %s91 = ssub.s32 %s27, %s34
    %p92 = scmp.eq.s32.totalorder %s91, 0
    %s94 = sadd.s32 %s93, 1
    %s95 = scalar_select %p92, %s93, %s94
    %p98 = pneg %p92
    %p99 = scmp.eq.s32.totalorder %s19, 1
    %p100 = por %p98, %p99
    %p101 = scmp.ne.s32.totalorder %s93, %s96
    %p102 = scmp.eq.s32.totalorder %s19, 0
    %p103 = por %p101, %p102
    %p104 = scmp.ne.s32.totalorder %s93, %s96
    %p105 = scmp.eq.s32.totalorder %s24, 1
    %p106 = por %p104, %p105
    %p107 = scmp.ne.s32.totalorder %s96, %s97
    %p108 = scmp.eq.s32.totalorder %s24, 0
    %p109 = por %p107, %p108
    %p110 = scmp.ne.s32.totalorder %s96, %s97
    %p111 = scmp.eq.s32.totalorder %s25, 1
    %p112 = por %p110, %p111
    %p114 = scmp.ne.s32.totalorder %s97, %s113
    %p115 = scmp.eq.s32.totalorder %s25, 0
    %p116 = por %p114, %p115
    %s117 = ssub.s32 %s27, %s34
    %p118 = scmp.eq.s32.totalorder %s117, 0
    %s120 = sadd.s32 %s119, 1
    %s121 = scalar_select %p118, %s119, %s120
    %p124 = pneg %p118
    %p125 = scmp.eq.s32.totalorder %s19, 1
    %p126 = por %p124, %p125
    %p127 = scmp.ne.s32.totalorder %s119, %s122
    %p128 = scmp.eq.s32.totalorder %s19, 0
    %p129 = por %p127, %p128
    %p130 = scmp.ne.s32.totalorder %s119, %s122
    %p131 = scmp.eq.s32.totalorder %s24, 1
    %p132 = por %p130, %p131
    %p133 = scmp.ne.s32.totalorder %s122, %s123
    %p134 = scmp.eq.s32.totalorder %s24, 0
    %p135 = por %p133, %p134
    %p136 = scmp.ne.s32.totalorder %s122, %s123
    %p137 = scmp.eq.s32.totalorder %s25, 1
    %p138 = por %p136, %p137
    %p140 = scmp.ne.s32.totalorder %s123, %s139
    %p141 = scmp.eq.s32.totalorder %s25, 0
    %p142 = por %p140, %p141
    %s143 = ssub.s32 %s27, %s34
    %p144 = scmp.eq.s32.totalorder %s143, 0
    %s146 = sadd.s32 %s145, 1
    %s147 = scalar_select %p144, %s145, %s146
    %p150 = pneg %p144
    %p151 = scmp.eq.s32.totalorder %s19, 1
    %p152 = por %p150, %p151
    %p153 = scmp.ne.s32.totalorder %s145, %s148
    %p154 = scmp.eq.s32.totalorder %s19, 0
    %p155 = por %p153, %p154
    %p156 = scmp.ne.s32.totalorder %s145, %s148
    %p157 = scmp.eq.s32.totalorder %s24, 1
    %p158 = por %p156, %p157
    %p159 = scmp.ne.s32.totalorder %s148, %s149
    %p160 = scmp.eq.s32.totalorder %s24, 0
    %p161 = por %p159, %p160
    %p162 = scmp.ne.s32.totalorder %s148, %s149
    %p163 = scmp.eq.s32.totalorder %s25, 1
    %p164 = por %p162, %p163
    %p166 = scmp.ne.s32.totalorder %s149, %s165
    %p167 = scmp.eq.s32.totalorder %s25, 0
    %p168 = por %p166, %p167
    %s169 = ssub.s32 %s27, %s34
    %p170 = scmp.eq.s32.totalorder %s169, 0
    %s172 = sadd.s32 %s171, 1
    %s173 = scalar_select %p170, %s171, %s172
    %p176 = pneg %p170
    %p177 = scmp.eq.s32.totalorder %s19, 1
    %p178 = por %p176, %p177
    %p179 = scmp.ne.s32.totalorder %s171, %s174
    %p180 = scmp.eq.s32.totalorder %s19, 0
    %p181 = por %p179, %p180
    %p182 = scmp.ne.s32.totalorder %s171, %s174
    %p183 = scmp.eq.s32.totalorder %s24, 1
    %p184 = por %p182, %p183
    %p185 = scmp.ne.s32.totalorder %s174, %s175
    %p186 = scmp.eq.s32.totalorder %s24, 0
    %p187 = por %p185, %p186
    %p188 = scmp.ne.s32.totalorder %s174, %s175
    %p189 = scmp.eq.s32.totalorder %s25, 1
    %p190 = por %p188, %p189
    %p192 = scmp.ne.s32.totalorder %s175, %s191
    %p193 = scmp.eq.s32.totalorder %s25, 0
    %p194 = por %p192, %p193
    %s195 = ssub.s32 %s27, %s34
    %p196 = scmp.eq.s32.totalorder %s195, 0
    %s198 = sadd.s32 %s197, 1
    %s199 = scalar_select %p196, %s197, %s198
    %p202 = pneg %p196
    %p203 = scmp.eq.s32.totalorder %s19, 1
    %p204 = por %p202, %p203
    %p205 = scmp.ne.s32.totalorder %s197, %s200
    %p206 = scmp.eq.s32.totalorder %s19, 0
    %p207 = por %p205, %p206
    %p208 = scmp.ne.s32.totalorder %s197, %s200
    %p209 = scmp.eq.s32.totalorder %s24, 1
    %p210 = por %p208, %p209
    %p211 = scmp.ne.s32.totalorder %s200, %s201
    %p212 = scmp.eq.s32.totalorder %s24, 0
    %p213 = por %p211, %p212
    %p214 = scmp.ne.s32.totalorder %s200, %s201
    %p215 = scmp.eq.s32.totalorder %s25, 1
    %p216 = por %p214, %p215
    %p218 = scmp.ne.s32.totalorder %s201, %s217
    %p219 = scmp.eq.s32.totalorder %s25, 0
    %p220 = por %p218, %p219
    %s221 = ssub.s32 %s27, %s34
    %p222 = scmp.eq.s32.totalorder %s221, 0
    %s224 = sadd.s32 %s223, 1
    %s225 = scalar_select %p222, %s223, %s224
    %p228 = pneg %p222
    %p229 = scmp.eq.s32.totalorder %s19, 1
    %p230 = por %p228, %p229
    %p231 = scmp.ne.s32.totalorder %s223, %s226
    %p232 = scmp.eq.s32.totalorder %s19, 0
    %p233 = por %p231, %p232
    %p234 = scmp.ne.s32.totalorder %s223, %s226
    %p235 = scmp.eq.s32.totalorder %s24, 1
    %p236 = por %p234, %p235
    %p237 = scmp.ne.s32.totalorder %s226, %s227
    %p238 = scmp.eq.s32.totalorder %s24, 0
    %p239 = por %p237, %p238
    %p240 = scmp.ne.s32.totalorder %s226, %s227
    %p241 = scmp.eq.s32.totalorder %s25, 1
    %p242 = por %p240, %p241
    %p244 = scmp.ne.s32.totalorder %s227, %s243
    %p245 = scmp.eq.s32.totalorder %s25, 0
    %p246 = por %p244, %p245
    %s247 = ssub.s32 %s27, %s34
    %p248 = scmp.eq.s32.totalorder %s247, 0
    %s250 = sadd.s32 %s249, 1
    %s251 = scalar_select %p248, %s249, %s250
    %p254 = pneg %p248
    %p255 = scmp.eq.s32.totalorder %s19, 1
    %p256 = por %p254, %p255
    %p257 = scmp.ne.s32.totalorder %s249, %s252
    %p258 = scmp.eq.s32.totalorder %s19, 0
    %p259 = por %p257, %p258
    %p260 = scmp.ne.s32.totalorder %s249, %s252
    %p261 = scmp.eq.s32.totalorder %s24, 1
    %p262 = por %p260, %p261
    %p263 = scmp.ne.s32.totalorder %s252, %s253
    %p264 = scmp.eq.s32.totalorder %s24, 0
    %p265 = por %p263, %p264
    %p266 = scmp.ne.s32.totalorder %s252, %s253
    %p267 = scmp.eq.s32.totalorder %s25, 1
    %p268 = por %p266, %p267
    %p270 = scmp.ne.s32.totalorder %s253, %s269
    %p271 = scmp.eq.s32.totalorder %s25, 0
    %p272 = por %p270, %p271
    %s273 = ssub.s32 %s27, %s34
    %p274 = scmp.eq.s32.totalorder %s273, 0
    %s276 = sadd.s32 %s275, 1
    %s277 = scalar_select %p274, %s275, %s276
    %p280 = pneg %p274
    %p281 = scmp.eq.s32.totalorder %s19, 1
    %p282 = por %p280, %p281
    %p283 = scmp.ne.s32.totalorder %s275, %s278
    %p284 = scmp.eq.s32.totalorder %s19, 0
    %p285 = por %p283, %p284
    %p286 = scmp.ne.s32.totalorder %s275, %s278
    %p287 = scmp.eq.s32.totalorder %s24, 1
    %p288 = por %p286, %p287
    %p289 = scmp.ne.s32.totalorder %s278, %s279
    %p290 = scmp.eq.s32.totalorder %s24, 0
    %p291 = por %p289, %p290
    %p292 = scmp.ne.s32.totalorder %s278, %s279
    %p293 = scmp.eq.s32.totalorder %s25, 1
    %p294 = por %p292, %p293
    %p296 = scmp.ne.s32.totalorder %s279, %s295
    %p297 = scmp.eq.s32.totalorder %s25, 0
    %p298 = por %p296, %p297
    %s299 = ssub.s32 %s27, %s34
    %p300 = scmp.eq.s32.totalorder %s299, 0
    %s302 = sadd.s32 %s301, 1
    %s303 = scalar_select %p300, %s301, %s302
    %p306 = pneg %p300
    %p307 = scmp.eq.s32.totalorder %s19, 1
    %p308 = por %p306, %p307
    %p309 = scmp.ne.s32.totalorder %s301, %s304
    %p310 = scmp.eq.s32.totalorder %s19, 0
    %p311 = por %p309, %p310
    %p312 = scmp.ne.s32.totalorder %s301, %s304
    %p313 = scmp.eq.s32.totalorder %s24, 1
    %p314 = por %p312, %p313
    %p315 = scmp.ne.s32.totalorder %s304, %s305
    %p316 = scmp.eq.s32.totalorder %s24, 0
    %p317 = por %p315, %p316
    %p318 = scmp.ne.s32.totalorder %s304, %s305
    %p319 = scmp.eq.s32.totalorder %s25, 1
    %p320 = por %p318, %p319
    %p322 = scmp.ne.s32.totalorder %s305, %s321
    %p323 = scmp.eq.s32.totalorder %s25, 0
    %p324 = por %p322, %p323
    %s325 = ssub.s32 %s27, %s34
    %p326 = scmp.eq.s32.totalorder %s325, 0
    %s328 = sadd.s32 %s327, 1
    %s329 = scalar_select %p326, %s327, %s328
    %p332 = pneg %p326
    %p333 = scmp.eq.s32.totalorder %s19, 1
    %p334 = por %p332, %p333
    %p335 = scmp.ne.s32.totalorder %s327, %s330
    %p336 = scmp.eq.s32.totalorder %s19, 0
    %p337 = por %p335, %p336
    %p338 = scmp.ne.s32.totalorder %s327, %s330
    %p339 = scmp.eq.s32.totalorder %s24, 1
    %p340 = por %p338, %p339
    %p341 = scmp.ne.s32.totalorder %s330, %s331
    %p342 = scmp.eq.s32.totalorder %s24, 0
    %p343 = por %p341, %p342
    %p344 = scmp.ne.s32.totalorder %s330, %s331
    %p345 = scmp.eq.s32.totalorder %s25, 1
    %p346 = por %p344, %p345
    %p348 = scmp.ne.s32.totalorder %s331, %s347
    %p349 = scmp.eq.s32.totalorder %s25, 0
    %p350 = por %p348, %p349
    %s351 = ssub.s32 %s27, %s34
    %p352 = scmp.eq.s32.totalorder %s351, 0
    %s354 = sadd.s32 %s353, 1
    %s355 = scalar_select %p352, %s353, %s354
    %p358 = pneg %p352
    %p359 = scmp.eq.s32.totalorder %s19, 1
    %p360 = por %p358, %p359
    %p361 = scmp.ne.s32.totalorder %s353, %s356
    %p362 = scmp.eq.s32.totalorder %s19, 0
    %p363 = por %p361, %p362
    %p364 = scmp.ne.s32.totalorder %s353, %s356
    %p365 = scmp.eq.s32.totalorder %s24, 1
    %p366 = por %p364, %p365
    %p367 = scmp.ne.s32.totalorder %s356, %s357
    %p368 = scmp.eq.s32.totalorder %s24, 0
    %p369 = por %p367, %p368
    %p370 = scmp.ne.s32.totalorder %s356, %s357
    %p371 = scmp.eq.s32.totalorder %s25, 1
    %p372 = por %p370, %p371
    %p374 = scmp.ne.s32.totalorder %s357, %s373
    %p375 = scmp.eq.s32.totalorder %s25, 0
    %p376 = por %p374, %p375
    %s377 = ssub.s32 %s26, %s38
    %p378 = scmp.eq.s32.totalorder %s377, 0
    %s380 = sadd.s32 %s379, 1
    %s381 = scalar_select %p378, %s379, %s380
    %p384 = pneg %p378
    %p385 = scmp.eq.s32.totalorder %s19, 1
    %p386 = por %p384, %p385
    %p387 = scmp.ne.s32.totalorder %s379, %s382
    %p388 = scmp.eq.s32.totalorder %s19, 0
    %p389 = por %p387, %p388
    %p390 = scmp.ne.s32.totalorder %s379, %s382
    %p391 = scmp.eq.s32.totalorder %s24, 1
    %p392 = por %p390, %p391
    %p393 = scmp.ne.s32.totalorder %s382, %s383
    %p394 = scmp.eq.s32.totalorder %s24, 0
    %p395 = por %p393, %p394
    %p396 = scmp.ne.s32.totalorder %s382, %s383
    %p397 = scmp.eq.s32.totalorder %s25, 1
    %p398 = por %p396, %p397
    %p400 = scmp.ne.s32.totalorder %s383, %s399
    %p401 = scmp.eq.s32.totalorder %s25, 0
    %p402 = por %p400, %p401
    %p403 = scmp.le.s32.totalorder 1, %s19
    %p404 = scmp.lt.s32.totalorder %s19, 3
    %p405 = pnand %p403, %p404
    %p406 = pneg %p405
    // Predicated region
    $region9: #{itra_forward.8} parent=5 // pred_check
      _
    $region10: #{itra_forward.8} parent=5 // pred_check_branch
      %408 = sbr.rel (%p405) target = $region12
    $region11: #{itra_forward.8} parent=5 // pred_region
      %s409 = ssub.s32 %s19, 1
      // Predicated region
      $region13: #{itra_forward.8} parent=11 // pred_check
        %p410 = pneg %p57
      $region14: #{itra_forward.8} parent=11 // pred_check_branch
        %412 = sbr.rel (%p410) target = $region16
      $region15: #{itra_forward.8} parent=11 // pred_region
        %s413 = smul.u32 2, %s28
        %p414 = scmp.lt.s32.totalorder %s413, 1
        %s415 = scalar_select %p414, %s413, 1
        %s416 = smul.addr %s415, 8
        %s417 = scalar_lea.vmem %s0, %s416
        %s418 = smul.u32 2, %s28
      $region16: #{itra_forward.8} parent=11 // pred_fallthru
        _
    $region12: #{itra_forward.8} parent=5 // pred_fallthru
      _
    %p419 = scmp.lt.s32.totalorder %s19, 2
    // Predicated region
    $region17: #{itra_forward.8} parent=5 // pred_check
      %p420 = pneg %p419
    $region18: #{itra_forward.8} parent=5 // pred_check_branch
      %422 = sbr.rel (%p420) target = $region20
    $region19: #{itra_forward.8} parent=5 // pred_region
      // Predicated region
      $region21: #{itra_forward.8} parent=19 // pred_check
        %p423 = pneg %p77
      $region22: #{itra_forward.8} parent=19 // pred_check_branch
        %425 = sbr.rel (%p423) target = $region24
      $region23: #{itra_forward.8} parent=19 // pred_region
        %p426 = scmp.lt.s32.totalorder %s27, 1
        %s427 = scalar_select %p426, %s27, 1
        %s428 = scalar_lea.vmem %s1, %s427
      $region24: #{itra_forward.8} parent=19 // pred_fallthru
        _
      // Predicated region
      $region25: #{itra_forward.8} parent=19 // pred_check
        %p429 = pneg %p103
      $region26: #{itra_forward.8} parent=19 // pred_check_branch
        %431 = sbr.rel (%p429) target = $region28
      $region27: #{itra_forward.8} parent=19 // pred_region
        %p432 = scmp.lt.s32.totalorder %s27, 1
        %s433 = scalar_select %p432, %s27, 1
        %s434 = scalar_lea.vmem %s2, %s433
      $region28: #{itra_forward.8} parent=19 // pred_fallthru
        _
      // Predicated region
      $region29: #{itra_forward.8} parent=19 // pred_check
        %p435 = pneg %p129
      $region30: #{itra_forward.8} parent=19 // pred_check_branch
        %437 = sbr.rel (%p435) target = $region32
      $region31: #{itra_forward.8} parent=19 // pred_region
        %p438 = scmp.lt.s32.totalorder %s27, 1
        %s439 = scalar_select %p438, %s27, 1
        %s440 = smul.addr %s439, 4
        %s441 = smul.addr %s440, 4
        %s442 = scalar_lea.vmem %s3, %s441
      $region32: #{itra_forward.8} parent=19 // pred_fallthru
        _
      // Predicated region
      $region33: #{itra_forward.8} parent=19 // pred_check
        %p443 = pneg %p155
      $region34: #{itra_forward.8} parent=19 // pred_check_branch
        %445 = sbr.rel (%p443) target = $region36
      $region35: #{itra_forward.8} parent=19 // pred_region
        %p446 = scmp.lt.s32.totalorder %s27, 1
        %s447 = scalar_select %p446, %s27, 1
        %s448 = scalar_lea.vmem %s4, %s447
      $region36: #{itra_forward.8} parent=19 // pred_fallthru
        _
      // Predicated region
      $region37: #{itra_forward.8} parent=19 // pred_check
        %p449 = pneg %p181
      $region38: #{itra_forward.8} parent=19 // pred_check_branch
        %451 = sbr.rel (%p449) target = $region40
      $region39: #{itra_forward.8} parent=19 // pred_region
        %p452 = scmp.lt.s32.totalorder %s27, 1
        %s453 = scalar_select %p452, %s27, 1
        %s454 = smul.addr %s453, 4
        %s455 = smul.addr %s454, 4
        %s456 = scalar_lea.vmem %s5, %s455
      $region40: #{itra_forward.8} parent=19 // pred_fallthru
        _
      // Predicated region
      $region41: #{itra_forward.8} parent=19 // pred_check
        %p457 = pneg %p207
      $region42: #{itra_forward.8} parent=19 // pred_check_branch
        %459 = sbr.rel (%p457) target = $region44
      $region43: #{itra_forward.8} parent=19 // pred_region
        %p460 = scmp.lt.s32.totalorder %s27, 1
        %s461 = scalar_select %p460, %s27, 1
        %s462 = scalar_lea.vmem %s6, %s461
      $region44: #{itra_forward.8} parent=19 // pred_fallthru
        _
      // Predicated region
      $region45: #{itra_forward.8} parent=19 // pred_check
        %p463 = pneg %p233
      $region46: #{itra_forward.8} parent=19 // pred_check_branch
        %465 = sbr.rel (%p463) target = $region48
      $region47: #{itra_forward.8} parent=19 // pred_region
        %p466 = scmp.lt.s32.totalorder %s27, 1
        %s467 = scalar_select %p466, %s27, 1
        %s468 = scalar_lea.vmem %s7, %s467
      $region48: #{itra_forward.8} parent=19 // pred_fallthru
        _
      // Predicated region
      $region49: #{itra_forward.8} parent=19 // pred_check
        %p469 = pneg %p259
      $region50: #{itra_forward.8} parent=19 // pred_check_branch
        %471 = sbr.rel (%p469) target = $region52
      $region51: #{itra_forward.8} parent=19 // pred_region
        %p472 = scmp.lt.s32.totalorder %s27, 1
        %s473 = scalar_select %p472, %s27, 1
        %s474 = scalar_lea.vmem %s8, %s473
      $region52: #{itra_forward.8} parent=19 // pred_fallthru
        _
      // Predicated region
      $region53: #{itra_forward.8} parent=19 // pred_check
        %p475 = pneg %p285
      $region54: #{itra_forward.8} parent=19 // pred_check_branch
        %477 = sbr.rel (%p475) target = $region56
      $region55: #{itra_forward.8} parent=19 // pred_region
        %p478 = scmp.lt.s32.totalorder %s27, 1
        %s479 = scalar_select %p478, %s27, 1
        %s480 = smul.addr %s479, 4
        %s481 = smul.addr %s480, 4
        %s482 = scalar_lea.vmem %s9, %s481
      $region56: #{itra_forward.8} parent=19 // pred_fallthru
        _
      // Predicated region
      $region57: #{itra_forward.8} parent=19 // pred_check
        %p483 = pneg %p311
      $region58: #{itra_forward.8} parent=19 // pred_check_branch
        %485 = sbr.rel (%p483) target = $region60
      $region59: #{itra_forward.8} parent=19 // pred_region
        %p486 = scmp.lt.s32.totalorder %s27, 1
        %s487 = scalar_select %p486, %s27, 1
        %s488 = scalar_lea.vmem %s10, %s487
      $region60: #{itra_forward.8} parent=19 // pred_fallthru
        _
      // Predicated region
      $region61: #{itra_forward.8} parent=19 // pred_check
        %p489 = pneg %p337
      $region62: #{itra_forward.8} parent=19 // pred_check_branch
        %491 = sbr.rel (%p489) target = $region64
      $region63: #{itra_forward.8} parent=19 // pred_region
        %p492 = scmp.lt.s32.totalorder %s27, 1
        %s493 = scalar_select %p492, %s27, 1
        %s494 = smul.addr %s493, 16
        %s495 = smul.addr %s494, 4
        %s496 = scalar_lea.vmem %s11, %s495
      $region64: #{itra_forward.8} parent=19 // pred_fallthru
        _
      // Predicated region
      $region65: #{itra_forward.8} parent=19 // pred_check
        %p497 = pneg %p363
      $region66: #{itra_forward.8} parent=19 // pred_check_branch
        %499 = sbr.rel (%p497) target = $region68
      $region67: #{itra_forward.8} parent=19 // pred_region
        %p500 = scmp.lt.s32.totalorder %s27, 1
        %s501 = scalar_select %p500, %s27, 1
        %s502 = scalar_lea.vmem %s12, %s501
      $region68: #{itra_forward.8} parent=19 // pred_fallthru
        _
    $region20: #{itra_forward.8} parent=5 // pred_fallthru
      _
    %p503 = scmp.le.s32.totalorder 1, %s19
    %p504 = scmp.lt.s32.totalorder %s19, 3
    %p505 = pnand %p503, %p504
    %p506 = pneg %p505
    // Predicated region
    $region69: #{itra_forward.8} parent=5 // pred_check
      _
    $region70: #{itra_forward.8} parent=5 // pred_check_branch
      %508 = sbr.rel (%p505) target = $region72
    $region71: #{itra_forward.8} parent=5 // pred_region
      %s509 = ssub.s32 %s19, 1
      %s510 = smul.u32 2, %s28
      %p511 = scmp.lt.s32.totalorder %s510, 1
      %s512 = scalar_select %p511, %s510, 1
      %s513 = smul.addr %s512, 8
      %s514 = scalar_lea.vmem %s0, %s513
      %p515 = pneg %p57
      %p516 = pneg %p54
      %p517 = scmp.lt.s32.totalorder %s29, 1
      %s518 = scalar_select %p517, %s29, 1
      %s519 = scalar_lea.vmem %s1, %s518
      %p520 = pneg %p83
      %p521 = pneg %p80
      %p522 = scmp.lt.s32.totalorder %s29, 1
      %s523 = scalar_select %p522, %s29, 1
      %s524 = scalar_lea.vmem %s2, %s523
      %p525 = pneg %p109
      %p526 = pneg %p106
      %p527 = scmp.lt.s32.totalorder %s29, 1
      %s528 = scalar_select %p527, %s29, 1
      %s529 = smul.addr %s528, 4
      %s530 = smul.addr %s529, 4
      %s531 = scalar_lea.vmem %s3, %s530
      %p532 = pneg %p135
      %p533 = pneg %p132
      %p534 = scmp.lt.s32.totalorder %s29, 1
      %s535 = scalar_select %p534, %s29, 1
      %s536 = scalar_lea.vmem %s4, %s535
      %p537 = pneg %p161
      %p538 = pneg %p158
      %p539 = scmp.lt.s32.totalorder %s29, 1
      %s540 = scalar_select %p539, %s29, 1
      %s541 = smul.addr %s540, 4
      %s542 = smul.addr %s541, 4
      %s543 = scalar_lea.vmem %s5, %s542
      %p544 = pneg %p187
      %p545 = pneg %p184
      %p546 = scmp.lt.s32.totalorder %s29, 1
      %s547 = scalar_select %p546, %s29, 1
      %s548 = scalar_lea.vmem %s6, %s547
      %p549 = pneg %p213
      %p550 = pneg %p210
      %p551 = scmp.lt.s32.totalorder %s29, 1
      %s552 = scalar_select %p551, %s29, 1
      %s553 = scalar_lea.vmem %s7, %s552
      %p554 = pneg %p239
      %p555 = pneg %p236
      %p556 = scmp.lt.s32.totalorder %s29, 1
      %s557 = scalar_select %p556, %s29, 1
      %s558 = scalar_lea.vmem %s8, %s557
      %p559 = pneg %p265
      %p560 = pneg %p262
      %p561 = scmp.lt.s32.totalorder %s29, 1
      %s562 = scalar_select %p561, %s29, 1
      %s563 = smul.addr %s562, 4
      %s564 = smul.addr %s563, 4
      %s565 = scalar_lea.vmem %s9, %s564
      %p566 = pneg %p291
      %p567 = pneg %p288
      %p568 = scmp.lt.s32.totalorder %s29, 1
      %s569 = scalar_select %p568, %s29, 1
      %s570 = scalar_lea.vmem %s10, %s569
      %p571 = pneg %p317
      %p572 = pneg %p314
      %p573 = scmp.lt.s32.totalorder %s29, 1
      %s574 = scalar_select %p573, %s29, 1
      %s575 = smul.addr %s574, 16
      %s576 = smul.addr %s575, 4
      %s577 = scalar_lea.vmem %s11, %s576
      %p578 = pneg %p343
      %p579 = pneg %p340
      %p580 = scmp.lt.s32.totalorder %s29, 1
      %s581 = scalar_select %p580, %s29, 1
      %s582 = scalar_lea.vmem %s12, %s581
      %p583 = pneg %p369
      %p584 = pneg %p366
      %p585 = pneg %p395
      %p586 = pneg %p392
      %s587 = smul.u32 2, %s28
      %p588 = scmp.lt.s32.totalorder %s587, 1
      %s589 = scalar_select %p588, %s587, 1
      %s590 = smul.addr %s589, 8
      %s591 = scalar_lea.vmem %s13, %s590
      %s592 = smul.u32 2, %s28
      %p593 = scmp.lt.s32.totalorder %s592, 1
      %s594 = scalar_select %p593, %s592, 1
      %s595 = smul.addr %s594, 8
      %s596 = scalar_lea.vmem %s0, %s595
      %s597 = smul.u32 2, %s28
      %p598 = scmp.lt.s32.totalorder %s29, 1
      %s599 = scalar_select %p598, %s29, 1
      %s600 = scalar_lea.vmem %s1, %s599
      %p601 = scmp.lt.s32.totalorder %s29, 1
      %s602 = scalar_select %p601, %s29, 1
      %s603 = scalar_lea.vmem %s2, %s602
      %p604 = scmp.lt.s32.totalorder %s29, 1
      %s605 = scalar_select %p604, %s29, 1
      %s606 = smul.addr %s605, 4
      %s607 = smul.addr %s606, 4
      %s608 = scalar_lea.vmem %s3, %s607
      %p609 = scmp.lt.s32.totalorder %s29, 1
      %s610 = scalar_select %p609, %s29, 1
      %s611 = scalar_lea.vmem %s4, %s610
      %p612 = scmp.lt.s32.totalorder %s29, 1
      %s613 = scalar_select %p612, %s29, 1
      %s614 = smul.addr %s613, 4
      %s615 = smul.addr %s614, 4
      %s616 = scalar_lea.vmem %s5, %s615
      %p617 = scmp.lt.s32.totalorder %s29, 1
      %s618 = scalar_select %p617, %s29, 1
      %s619 = scalar_lea.vmem %s6, %s618
      %p620 = scmp.lt.s32.totalorder %s29, 1
      %s621 = scalar_select %p620, %s29, 1
      %s622 = scalar_lea.vmem %s7, %s621
      %p623 = scmp.lt.s32.totalorder %s29, 1
      %s624 = scalar_select %p623, %s29, 1
      %s625 = scalar_lea.vmem %s8, %s624
      %p626 = scmp.lt.s32.totalorder %s29, 1
      %s627 = scalar_select %p626, %s29, 1
      %s628 = smul.addr %s627, 4
      %s629 = smul.addr %s628, 4
      %s630 = scalar_lea.vmem %s9, %s629
      %p631 = scmp.lt.s32.totalorder %s29, 1
      %s632 = scalar_select %p631, %s29, 1
      %s633 = scalar_lea.vmem %s10, %s632
      %p634 = scmp.lt.s32.totalorder %s29, 1
      %s635 = scalar_select %p634, %s29, 1
      %s636 = smul.addr %s635, 16
      %s637 = smul.addr %s636, 4
      %s638 = scalar_lea.vmem %s11, %s637
      %p639 = scmp.lt.s32.totalorder %s29, 1
      %s640 = scalar_select %p639, %s29, 1
      %s641 = scalar_lea.vmem %s12, %s640
      %s642 = smul.u32 2, %s28
      %p643 = scmp.lt.s32.totalorder %s642, 1
      %s644 = scalar_select %p643, %s642, 1
      %s645 = smul.addr %s644, 8
      %s646 = scalar_lea.vmem %s13, %s645
      %s647 = smul.u32 2, %s28
      %p649 = scmp.eq.s32.totalorder %s29, 0
      // Predicated region
      $region73: #{itra_forward.8} parent=71 // pred_check
        %p650 = pneg %p649
      $region74: #{itra_forward.8} parent=71 // pred_check_branch
        %652 = sbr.rel (%p650) target = $region76
      $region75: #{itra_forward.8} parent=71 // pred_region
        %v653 = vld [vmem:[%s596] sm:$0xff]
        %v654 = vld [vmem:[%s596 + $0x8] sm:$0xff]
        %vm655 = vcmask 261120
        %656 = vst.msk [vmem:[%s646] sm:$0xff] %vm655, %v653
        %657 = vst.msk [vmem:[%s646 + $0x8] sm:$0xff] %vm655, %v654
      $region76: #{itra_forward.8} parent=71 // pred_fallthru
        _
      %v658 = vld [vmem:[%s646] sm:$0xff]
      %v659 = vld [vmem:[%s646 + $0x8] sm:$0xff]
      %v660 = vld [vmem:[%s600] sm:$0x1]
      %v661 = vld [vmem:[%s603] sm:$0x1]
      %vm662 = vcmask 261120
      %v663 = vsel %vm662, %v658, 0.0
      %664 = vadd.xlane.f32.xlu0 %v663
      %v665 = vpop.xlane.xlu0 %664
      %v666 = vsel %vm662, %v659, 0.0
      %667 = vadd.xlane.f32.xlu0 %v666
      %v668 = vpop.xlane.xlu0 %667
      %v669 = vrcp.pop 32.0
      %v670 = vmul.f32 32.0, %v669
      %v671 = vsub.f32 1.0, %v670
      %v672 = vmul.f32 %v669, %v671
      %v673 = vadd.f32 %v669, %v672
      %vm674 = vweird.f32 %v669
      %v675 = vsel %vm674, %v669, %v673
      %v676 = vmul.f32 %v665, %v675
      %v677 = vmul.f32 %v668, %v675
      %v678 = vsub.f32 %v658, %v676
      %v679 = vsub.f32 %v659, %v677
      %v680 = vmul.f32 %v678, %v678
      %v681 = vmul.f32 %v679, %v679
      %v682 = vsel %vm662, %v680, 0.0
      %683 = vadd.xlane.f32.xlu0 %v682
      %v684 = vpop.xlane.xlu0 %683
      %v685 = vsel %vm662, %v681, 0.0
      %686 = vadd.xlane.f32.xlu0 %v685
      %v687 = vpop.xlane.xlu0 %686
      %v688 = vmul.f32 %v684, %v675
      %v689 = vmul.f32 %v687, %v675
      %v690 = vadd.f32 %v688, 1e-05
      %v691 = vadd.f32 %v689, 1e-05
      %v692 = vrsqrt.pop %v690
      %v693 = vmul.f32 %v692, %v690
      %v694 = vmul.f32 %v693, %v692
      %v695 = vmul.f32 0.5, %v694
      %v696 = vsub.f32 1.5, %v695
      %v697 = vmul.f32 %v692, %v696
      %vm698 = vweird.f32 %v690
      %vm699 = vweird.f32 %v692
      %vm700 = vmor %vm698, %vm699
      %v701 = vsel %vm700, %v692, %v697
      %v702 = vrsqrt.pop %v691
      %v703 = vmul.f32 %v702, %v691
      %v704 = vmul.f32 %v703, %v702
      %v705 = vmul.f32 0.5, %v704
      %v706 = vsub.f32 1.5, %v705
      %v707 = vmul.f32 %v702, %v706
      %vm708 = vweird.f32 %v691
      %vm709 = vweird.f32 %v702
      %vm710 = vmor %vm708, %vm709
      %v711 = vsel %vm710, %v702, %v707
      %v712 = vmul.f32 %v678, %v701
      %v713 = vmul.f32 %v679, %v711
      %v715 = vperm.slane %v660, 0
      %v717 = vmul.f32 %v712, %v715
      %v718 = vmul.f32 %v713, %v715
      %v720 = vperm.slane %v661, 0
      %v722 = vadd.f32 %v717, %v720
      %v723 = vadd.f32 %v718, %v720
      %v724 = vpack.c.bf16 %v723, %v722
      %v725 = vld [vmem:[%s608] sm:$0xf]
      %v726 = vld [vmem:[%s608 + $0x4] sm:$0xf]
      %v727 = vld [vmem:[%s608 + $0x8] sm:$0xf]
      %v728 = vld [vmem:[%s608 + $0xc] sm:$0xf]
      %v729 = vld [vmem:[%s611] sm:$0x1]
      %v731 = vperm.slane %v729, 0
      %v737 = vunpack.c.l.b16 %v725
      %v738 = vunpack.c.l.b16 %v726
      %v739 = vunpack.c.l.b16 %v727
      %v740 = vunpack.c.l.b16 %v728
      %v741 = vpack.c.b16 %v738, %v737
      %v742 = vpack.c.b16 %v740, %v739
      %v746 = vsel %vm662, %v724, 0
      %748 = vmatpush.bf16.msra.mxu0 0
      %749 = vmatpush.bf16.msra.mxu0 0
      %750 = vmatpush.bf16.msra.mxu0 0
      %751 = vmatpush.bf16.msra.mxu0 0
      %752 = vmatpush.bf16.msra.mxu0 0
      %753 = vmatpush.bf16.msra.mxu0 0
      %754 = vmatpush.bf16.msra.mxu0 %v742
      %755 = vmatpush.bf16.msra.mxu0 %v741
      %756 = vmatmul.bf16.gmra.mxu0 %v746
      %v757 = vpop.f32.mrf.mxu0
      %v758 = vadd.f32 %v731, %v757
      %v759 = vpop.f32.mrf.mxu0
      %v760 = vadd.f32 %v731, %v759
      %761 = vdwg.mxu0
      %v762 = vmul.f32 %v758, 0.25
      %v763 = vmul.f32 %v760, 0.25
      %v764 = vpack.c.bf16 %v762, %v762
      %v765 = vpack.c.bf16 %v763, %v763
      %v766 = vpack.c.bf16 %v758, %v758
      %v767 = vpack.c.bf16 %v760, %v760
      %v768 = vlaneseq
      %v769 = vand.u32 %v768, 127
      %vm770 = vcmp.lt.s32.totalorder %v769, 5
      %v771 = vsel %vm770, 0.0, -1e+09
      %v773 = vunpack.c.l.b16 %v766
      %v774 = vpack.c.b16 %v773, %v773
      %775 = vrot.lane.b32.xlu0 %v774, 96
      %v776 = vpop.permute.xlu0 %775
      %vm777 = vcmask 130048
      %v779 = vsel %vm777, %v764, 0
      %v782 = vsel %vm777, %v776, 0
      %784 = vmatpush.bf16.xpose.msra.mxu0 0
      %785 = vmatpush.bf16.xpose.msra.mxu0 0
      %786 = vmatpush.bf16.xpose.msra.mxu0 0
      %787 = vmatpush.bf16.xpose.msra.mxu0 0
      %788 = vmatpush.bf16.xpose.msra.mxu0 0
      %789 = vmatpush.bf16.xpose.msra.mxu0 0
      %790 = vmatpush.bf16.xpose.msra.mxu0 0
      %791 = vmatpush.bf16.xpose.msra.mxu0 %v782
      %792 = vmatmul.bf16.gmra.mxu0 %v779
      %v793 = vpop.f32.mrf.mxu0
      %v794 = vadd.f32 %v771, %v793
      %v795 = vpop.f32.mrf.mxu0
      %796 = vdwg.mxu0
      %v798 = vunpack.c.l.b16 %v767
      %v799 = vpack.c.b16 %v798, %v798
      %800 = vrot.lane.b32.xlu0 %v799, 96
      %v801 = vpop.permute.xlu0 %800
      %v803 = vsel %vm777, %v765, 0
      %v806 = vsel %vm777, %v801, 0
      %808 = vmatpush.bf16.xpose.msra.mxu0 0
      %809 = vmatpush.bf16.xpose.msra.mxu0 0
      %810 = vmatpush.bf16.xpose.msra.mxu0 0
      %811 = vmatpush.bf16.xpose.msra.mxu0 0
      %812 = vmatpush.bf16.xpose.msra.mxu0 0
      %813 = vmatpush.bf16.xpose.msra.mxu0 0
      %814 = vmatpush.bf16.xpose.msra.mxu0 0
      %815 = vmatpush.bf16.xpose.msra.mxu0 %v806
      %816 = vmatmul.bf16.gmra.mxu0 %v803
      %v817 = vpop.f32.mrf.mxu0
      %v818 = vadd.f32 %v771, %v817
      %v819 = vpop.f32.mrf.mxu0
      %820 = vdwg.mxu0
      %vm821 = vcmask 64512
      %v822 = vsel %vm821, %v794, -inf
      %823 = vmax.xlane.f32.xlu0 %v822
      %v824 = vpop.xlane.xlu0 %823
      %v825 = vsel %vm821, %v818, -inf
      %826 = vmax.xlane.f32.xlu0 %v825
      %v827 = vpop.xlane.xlu0 %826
      %v828 = vsub.f32 %v794, %v824
      %v829 = vsub.f32 %v818, %v827
      %v830 = vmul.f32 %v828, 1.442695
      %v831 = vpow.pop %v830
      %v832 = vmul.f32 %v829, 1.442695
      %v833 = vpow.pop %v832
      %v834 = vsel %vm821, %v831, 0.0
      %835 = vadd.xlane.f32.xlu0 %v834
      %v836 = vpop.xlane.xlu0 %835
      %v837 = vsel %vm821, %v833, 0.0
      %838 = vadd.xlane.f32.xlu0 %v837
      %v839 = vpop.xlane.xlu0 %838
      %v840 = vrcp.pop %v836
      %v841 = vmul.f32 %v836, %v840
      %v842 = vsub.f32 1.0, %v841
      %v843 = vmul.f32 %v840, %v842
      %v844 = vadd.f32 %v840, %v843
      %vm845 = vweird.f32 %v836
      %vm846 = vweird.f32 %v840
      %vm847 = vmor %vm845, %vm846
      %v848 = vsel %vm847, %v840, %v844
      %v849 = vand.u32 2147483647, %v836
      %vm850 = vcmp.eq.f32.partialorder %v849, 8.507059e+37
      %v851 = vand.u32 %v836, 2147483648
      %v852 = vor.u32 1.1754944e-38, %v851
      %v853 = vsel %vm850, %v852, %v848
      %v854 = vmul.f32 %v831, %v853
      %v855 = vrcp.pop %v839
      %v856 = vmul.f32 %v839, %v855
      %v857 = vsub.f32 1.0, %v856
      %v858 = vmul.f32 %v855, %v857
      %v859 = vadd.f32 %v855, %v858
      %vm860 = vweird.f32 %v839
      %vm861 = vweird.f32 %v855
      %vm862 = vmor %vm860, %vm861
      %v863 = vsel %vm862, %v855, %v859
      %v864 = vand.u32 2147483647, %v839
      %vm865 = vcmp.eq.f32.partialorder %v864, 8.507059e+37
      %v866 = vand.u32 %v839, 2147483648
      %v867 = vor.u32 1.1754944e-38, %v866
      %v868 = vsel %vm865, %v867, %v863
      %v869 = vmul.f32 %v833, %v868
      %v870 = vpack.c.bf16 %v854, %v854
      %v871 = vpack.c.bf16 %v869, %v869
      %872 = vrot.lane.b32.xlu0 %v774, 64
      %v873 = vpop.permute.xlu0 %872
      %v875 = vsel %vm821, %v870, 0
      %vm877 = vcmask 1043456
      %v879 = vsel %vm877, %v873, 0
      %881 = vmatpush.bf16.msra.mxu0 0
      %882 = vmatpush.bf16.msra.mxu0 0
      %883 = vmatpush.bf16.msra.mxu0 0
      %884 = vmatpush.bf16.msra.mxu0 0
      %885 = vmatpush.bf16.msra.mxu0 0
      %886 = vmatpush.bf16.msra.mxu0 0
      %887 = vmatpush.bf16.msra.mxu0 0
      %888 = vmatpush.bf16.msra.mxu0 %v879
      %889 = vmatmul.bf16.gmra.mxu0 %v875
      %v890 = vpop.f32.mrf.mxu0
      %v891 = vadd.f32 0.0, %v890
      %v892 = vpop.f32.mrf.mxu0
      %893 = vdwg.mxu0
      %894 = vrot.lane.b32.xlu0 %v799, 64
      %v895 = vpop.permute.xlu0 %894
      %v897 = vsel %vm821, %v871, 0
      %v900 = vsel %vm877, %v895, 0
      %902 = vmatpush.bf16.msra.mxu0 0
      %903 = vmatpush.bf16.msra.mxu0 0
      %904 = vmatpush.bf16.msra.mxu0 0
      %905 = vmatpush.bf16.msra.mxu0 0
      %906 = vmatpush.bf16.msra.mxu0 0
      %907 = vmatpush.bf16.msra.mxu0 0
      %908 = vmatpush.bf16.msra.mxu0 0
      %909 = vmatpush.bf16.msra.mxu0 %v900
      %910 = vmatmul.bf16.gmra.mxu0 %v897
      %v911 = vpop.f32.mrf.mxu0
      %v912 = vadd.f32 0.0, %v911
      %v913 = vpop.f32.mrf.mxu0
      %914 = vdwg.mxu0
      %v916 = vunpack.c.l.b16 %v764
      %v917 = vpack.c.b16 %v916, %v916
      %918 = vrot.lane.b32.xlu0 %v917, 112
      %v919 = vpop.permute.xlu0 %918
      %920 = vrot.lane.b32.xlu0 %v774, 80
      %v921 = vpop.permute.xlu0 %920
      %v923 = vsel %vm777, %v919, 0
      %v926 = vsel %vm777, %v921, 0
      %928 = vmatpush.bf16.xpose.msra.mxu0 0
      %929 = vmatpush.bf16.xpose.msra.mxu0 0
      %930 = vmatpush.bf16.xpose.msra.mxu0 0
      %931 = vmatpush.bf16.xpose.msra.mxu0 0
      %932 = vmatpush.bf16.xpose.msra.mxu0 0
      %933 = vmatpush.bf16.xpose.msra.mxu0 0
      %934 = vmatpush.bf16.xpose.msra.mxu0 0
      %935 = vmatpush.bf16.xpose.msra.mxu0 %v926
      %936 = vmatmul.bf16.gmra.mxu0 %v923
      %v937 = vpop.f32.mrf.mxu0
      %v938 = vadd.f32 %v771, %v937
      %v939 = vpop.f32.mrf.mxu0
      %940 = vdwg.mxu0
      %v942 = vunpack.c.l.b16 %v765
      %v943 = vpack.c.b16 %v942, %v942
      %944 = vrot.lane.b32.xlu0 %v943, 112
      %v945 = vpop.permute.xlu0 %944
      %946 = vrot.lane.b32.xlu0 %v799, 80
      %v947 = vpop.permute.xlu0 %946
      %v949 = vsel %vm777, %v945, 0
      %v952 = vsel %vm777, %v947, 0
      %954 = vmatpush.bf16.xpose.msra.mxu0 0
      %955 = vmatpush.bf16.xpose.msra.mxu0 0
      %956 = vmatpush.bf16.xpose.msra.mxu0 0
      %957 = vmatpush.bf16.xpose.msra.mxu0 0
      %958 = vmatpush.bf16.xpose.msra.mxu0 0
      %959 = vmatpush.bf16.xpose.msra.mxu0 0
      %960 = vmatpush.bf16.xpose.msra.mxu0 0
      %961 = vmatpush.bf16.xpose.msra.mxu0 %v952
      %962 = vmatmul.bf16.gmra.mxu0 %v949
      %v963 = vpop.f32.mrf.mxu0
      %v964 = vadd.f32 %v771, %v963
      %v965 = vpop.f32.mrf.mxu0
      %966 = vdwg.mxu0
      %v967 = vsel %vm821, %v938, -inf
      %968 = vmax.xlane.f32.xlu0 %v967
      %v969 = vpop.xlane.xlu0 %968
      %v970 = vsel %vm821, %v964, -inf
      %971 = vmax.xlane.f32.xlu0 %v970
      %v972 = vpop.xlane.xlu0 %971
      %v973 = vsub.f32 %v938, %v969
      %v974 = vsub.f32 %v964, %v972
      %v975 = vmul.f32 %v973, 1.442695
      %v976 = vpow.pop %v975
      %v977 = vmul.f32 %v974, 1.442695
      %v978 = vpow.pop %v977
      %v979 = vsel %vm821, %v976, 0.0
      %980 = vadd.xlane.f32.xlu0 %v979
      %v981 = vpop.xlane.xlu0 %980
      %v982 = vsel %vm821, %v978, 0.0
      %983 = vadd.xlane.f32.xlu0 %v982
      %v984 = vpop.xlane.xlu0 %983
      %v985 = vrcp.pop %v981
      %v986 = vmul.f32 %v981, %v985
      %v987 = vsub.f32 1.0, %v986
      %v988 = vmul.f32 %v985, %v987
      %v989 = vadd.f32 %v985, %v988
      %vm990 = vweird.f32 %v981
      %vm991 = vweird.f32 %v985
      %vm992 = vmor %vm990, %vm991
      %v993 = vsel %vm992, %v985, %v989
      %v994 = vand.u32 2147483647, %v981
      %vm995 = vcmp.eq.f32.partialorder %v994, 8.507059e+37
      %v996 = vand.u32 %v981, 2147483648
      %v997 = vor.u32 1.1754944e-38, %v996
      %v998 = vsel %vm995, %v997, %v993
      %v999 = vmul.f32 %v976, %v998
      %v1000 = vrcp.pop %v984
      %v1001 = vmul.f32 %v984, %v1000
      %v1002 = vsub.f32 1.0, %v1001
      %v1003 = vmul.f32 %v1000, %v1002
      %v1004 = vadd.f32 %v1000, %v1003
      %vm1005 = vweird.f32 %v984
      %vm1006 = vweird.f32 %v1000
      %vm1007 = vmor %vm1005, %vm1006
      %v1008 = vsel %vm1007, %v1000, %v1004
      %v1009 = vand.u32 2147483647, %v984
      %vm1010 = vcmp.eq.f32.partialorder %v1009, 8.507059e+37
      %v1011 = vand.u32 %v984, 2147483648
      %v1012 = vor.u32 1.1754944e-38, %v1011
      %v1013 = vsel %vm1010, %v1012, %v1008
      %v1014 = vmul.f32 %v978, %v1013
      %v1015 = vpack.c.bf16 %v999, %v999
      %v1016 = vpack.c.bf16 %v1014, %v1014
      %1017 = vrot.lane.b32.xlu0 %v774, 48
      %v1018 = vpop.permute.xlu0 %1017
      %v1020 = vsel %vm821, %v1015, 0
      %v1023 = vsel %vm877, %v1018, 0
      %1025 = vmatpush.bf16.msra.mxu0 0
      %1026 = vmatpush.bf16.msra.mxu0 0
      %1027 = vmatpush.bf16.msra.mxu0 0
      %1028 = vmatpush.bf16.msra.mxu0 0
      %1029 = vmatpush.bf16.msra.mxu0 0
      %1030 = vmatpush.bf16.msra.mxu0 0
      %1031 = vmatpush.bf16.msra.mxu0 0
      %1032 = vmatpush.bf16.msra.mxu0 %v1023
      %1033 = vmatmul.bf16.gmra.mxu0 %v1020
      %v1034 = vpop.f32.mrf.mxu0
      %v1035 = vadd.f32 0.0, %v1034
      %v1036 = vpop.f32.mrf.mxu0
      %1037 = vdwg.mxu0
      %1038 = vrot.lane.b32.xlu0 %v799, 48
      %v1039 = vpop.permute.xlu0 %1038
      %v1041 = vsel %vm821, %v1016, 0
      %v1044 = vsel %vm877, %v1039, 0
      %1046 = vmatpush.bf16.msra.mxu0 0
      %1047 = vmatpush.bf16.msra.mxu0 0
      %1048 = vmatpush.bf16.msra.mxu0 0
      %1049 = vmatpush.bf16.msra.mxu0 0
      %1050 = vmatpush.bf16.msra.mxu0 0
      %1051 = vmatpush.bf16.msra.mxu0 0
      %1052 = vmatpush.bf16.msra.mxu0 0
      %1053 = vmatpush.bf16.msra.mxu0 %v1044
      %1054 = vmatmul.bf16.gmra.mxu0 %v1041
      %v1055 = vpop.f32.mrf.mxu0
      %v1056 = vadd.f32 0.0, %v1055
      %v1057 = vpop.f32.mrf.mxu0
      %1058 = vdwg.mxu0
      %1061 = vrot.lane.b32.xlu0 %v1035, 16
      %v1062 = vpop.permute.xlu0 %1061
      %1063 = vrot.lane.b32.xlu0 %v1056, 16
      %v1064 = vpop.permute.xlu0 %1063
      %v1067 = vsel %vm777, %v891, %v1062
      %v1068 = vsel %vm777, %v912, %v1064
      %v1069 = vpack.c.bf16 %v1068, %v1067
      %v1070 = vld [vmem:[%s616] sm:$0xf]
      %v1071 = vld [vmem:[%s616 + $0x4] sm:$0xf]
      %v1072 = vld [vmem:[%s616 + $0x8] sm:$0xf]
      %v1073 = vld [vmem:[%s616 + $0xc] sm:$0xf]
      %v1074 = vld [vmem:[%s619] sm:$0x1]
      %v1076 = vperm.slane %v1074, 0
      %v1082 = vunpack.c.l.b16 %v1070
      %v1083 = vunpack.c.l.b16 %v1071
      %v1084 = vunpack.c.l.b16 %v1072
      %v1085 = vunpack.c.l.b16 %v1073
      %v1086 = vpack.c.b16 %v1083, %v1082
      %v1087 = vpack.c.b16 %v1085, %v1084
      %v1091 = vsel %vm662, %v1069, 0
      %1093 = vmatpush.bf16.msra.mxu0 0
      %1094 = vmatpush.bf16.msra.mxu0 0
      %1095 = vmatpush.bf16.msra.mxu0 0
      %1096 = vmatpush.bf16.msra.mxu0 0
      %1097 = vmatpush.bf16.msra.mxu0 0
      %1098 = vmatpush.bf16.msra.mxu0 0
      %1099 = vmatpush.bf16.msra.mxu0 %v1087
      %1100 = vmatpush.bf16.msra.mxu0 %v1086
      %1101 = vmatmul.bf16.gmra.mxu0 %v1091
      %v1102 = vpop.f32.mrf.mxu0
      %v1103 = vadd.f32 %v1076, %v1102
      %v1104 = vpop.f32.mrf.mxu0
      %v1105 = vadd.f32 %v1076, %v1104
      %1106 = vdwg.mxu0
      %v1107 = vadd.f32 %v658, %v1103
      %v1108 = vadd.f32 %v659, %v1105
      %v1109 = vld [vmem:[%s622] sm:$0x1]
      %v1110 = vld [vmem:[%s625] sm:$0x1]
      %v1111 = vsel %vm662, %v1107, 0.0
      %1112 = vadd.xlane.f32.xlu0 %v1111
      %v1113 = vpop.xlane.xlu0 %1112
      %v1114 = vsel %vm662, %v1108, 0.0
      %1115 = vadd.xlane.f32.xlu0 %v1114
      %v1116 = vpop.xlane.xlu0 %1115
      %v1117 = vmul.f32 %v1113, %v675
      %v1118 = vmul.f32 %v1116, %v675
      %v1119 = vsub.f32 %v1107, %v1117
      %v1120 = vsub.f32 %v1108, %v1118
      %v1121 = vmul.f32 %v1119, %v1119
      %v1122 = vmul.f32 %v1120, %v1120
      %v1123 = vsel %vm662, %v1121, 0.0
      %1124 = vadd.xlane.f32.xlu0 %v1123
      %v1125 = vpop.xlane.xlu0 %1124
      %v1126 = vsel %vm662, %v1122, 0.0
      %1127 = vadd.xlane.f32.xlu0 %v1126
      %v1128 = vpop.xlane.xlu0 %1127
      %v1129 = vmul.f32 %v1125, %v675
      %v1130 = vmul.f32 %v1128, %v675
      %v1131 = vadd.f32 %v1129, 1e-05
      %v1132 = vadd.f32 %v1130, 1e-05
      %v1133 = vrsqrt.pop %v1131
      %v1134 = vmul.f32 %v1133, %v1131
      %v1135 = vmul.f32 %v1134, %v1133
      %v1136 = vmul.f32 0.5, %v1135
      %v1137 = vsub.f32 1.5, %v1136
      %v1138 = vmul.f32 %v1133, %v1137
      %vm1139 = vweird.f32 %v1131
      %vm1140 = vweird.f32 %v1133
      %vm1141 = vmor %vm1139, %vm1140
      %v1142 = vsel %vm1141, %v1133, %v1138
      %v1143 = vrsqrt.pop %v1132
      %v1144 = vmul.f32 %v1143, %v1132
      %v1145 = vmul.f32 %v1144, %v1143
      %v1146 = vmul.f32 0.5, %v1145
      %v1147 = vsub.f32 1.5, %v1146
      %v1148 = vmul.f32 %v1143, %v1147
      %vm1149 = vweird.f32 %v1132
      %vm1150 = vweird.f32 %v1143
      %vm1151 = vmor %vm1149, %vm1150
      %v1152 = vsel %vm1151, %v1143, %v1148
      %v1153 = vmul.f32 %v1119, %v1142
      %v1154 = vmul.f32 %v1120, %v1152
      %v1156 = vperm.slane %v1109, 0
      %v1158 = vmul.f32 %v1153, %v1156
      %v1159 = vmul.f32 %v1154, %v1156
      %v1161 = vperm.slane %v1110, 0
      %v1163 = vadd.f32 %v1158, %v1161
      %v1164 = vadd.f32 %v1159, %v1161
      %v1165 = vpack.c.bf16 %v1164, %v1163
      %v1166 = vld [vmem:[%s630] sm:$0xf]
      %v1167 = vld [vmem:[%s630 + $0x4] sm:$0xf]
      %v1168 = vld [vmem:[%s630 + $0x8] sm:$0xf]
      %v1169 = vld [vmem:[%s630 + $0xc] sm:$0xf]
      %v1170 = vld [vmem:[%s633] sm:$0x1]
      %v1172 = vperm.slane %v1170, 0
      %v1178 = vunpack.c.l.b16 %v1166
      %v1179 = vunpack.c.l.b16 %v1167
      %v1180 = vunpack.c.l.b16 %v1168
      %v1181 = vunpack.c.l.b16 %v1169
      %v1182 = vpack.c.b16 %v1179, %v1178
      %v1183 = vpack.c.b16 %v1181, %v1180
      %v1187 = vsel %vm662, %v1165, 0
      %1189 = vmatpush.bf16.msra.mxu0 0
      %1190 = vmatpush.bf16.msra.mxu0 0
      %1191 = vmatpush.bf16.msra.mxu0 0
      %1192 = vmatpush.bf16.msra.mxu0 0
      %1193 = vmatpush.bf16.msra.mxu0 0
      %1194 = vmatpush.bf16.msra.mxu0 0
      %1195 = vmatpush.bf16.msra.mxu0 %v1183
      %1196 = vmatpush.bf16.msra.mxu0 %v1182
      %1197 = vmatmul.bf16.gmra.mxu0 %v1187
      %v1198 = vpop.f32.mrf.mxu0
      %v1199 = vadd.f32 %v1172, %v1198
      %v1200 = vpop.f32.mrf.mxu0
      %v1201 = vadd.f32 %v1172, %v1200
      %1202 = vdwg.mxu0
      %v1203 = vmul.f32 %v1199, %v1199
      %v1204 = vmul.f32 %v1201, %v1201
      %v1205 = vmul.f32 %v1199, %v1203
      %v1206 = vmul.f32 %v1201, %v1204
      %v1207 = vmul.f32 %v1205, 0.044715
      %v1208 = vmul.f32 %v1206, 0.044715
      %v1209 = vadd.f32 %v1199, %v1207
      %v1210 = vadd.f32 %v1201, %v1208
      %v1211 = vmul.f32 %v1209, 0.7978846
      %v1212 = vmul.f32 %v1210, 0.7978846
      %v1213 = vtanh.pop %v1211
      %v1214 = vtanh.pop %v1212
      %v1215 = vadd.f32 %v1213, 1.0
      %v1216 = vadd.f32 %v1214, 1.0
      %v1217 = vmul.f32 %v1215, 0.5
      %v1218 = vmul.f32 %v1216, 0.5
      %v1219 = vmul.f32 %v1199, %v1217
      %v1220 = vmul.f32 %v1201, %v1218
      %v1221 = vpack.c.bf16 %v1220, %v1219
      %v1222 = vld [vmem:[%s638] sm:$0xf]
      %v1223 = vld [vmem:[%s638 + $0x4] sm:$0xf]
      %v1224 = vld [vmem:[%s638 + $0x8] sm:$0xf]
      %v1225 = vld [vmem:[%s638 + $0xc] sm:$0xf]
      %v1226 = vld [vmem:[%s638 + $0x10] sm:$0xf]
      %v1227 = vld [vmem:[%s638 + $0x14] sm:$0xf]
      %v1228 = vld [vmem:[%s638 + $0x18] sm:$0xf]
      %v1229 = vld [vmem:[%s638 + $0x1c] sm:$0xf]
      %v1230 = vld [vmem:[%s638 + $0x20] sm:$0xf]
      %v1231 = vld [vmem:[%s638 + $0x24] sm:$0xf]
      %v1232 = vld [vmem:[%s638 + $0x28] sm:$0xf]
      %v1233 = vld [vmem:[%s638 + $0x2c] sm:$0xf]
      %v1234 = vld [vmem:[%s638 + $0x30] sm:$0xf]
      %v1235 = vld [vmem:[%s638 + $0x34] sm:$0xf]
      %v1236 = vld [vmem:[%s638 + $0x38] sm:$0xf]
      %v1237 = vld [vmem:[%s638 + $0x3c] sm:$0xf]
      %v1238 = vld [vmem:[%s641] sm:$0x1]
      %v1240 = vperm.slane %v1238, 0
      %v1258 = vunpack.c.l.b16 %v1222
      %v1259 = vunpack.c.l.b16 %v1223
      %v1260 = vunpack.c.l.b16 %v1224
      %v1261 = vunpack.c.l.b16 %v1225
      %v1262 = vunpack.c.l.b16 %v1226
      %v1263 = vunpack.c.l.b16 %v1227
      %v1264 = vunpack.c.l.b16 %v1228
      %v1265 = vunpack.c.l.b16 %v1229
      %v1266 = vunpack.c.l.b16 %v1230
      %v1267 = vunpack.c.l.b16 %v1231
      %v1268 = vunpack.c.l.b16 %v1232
      %v1269 = vunpack.c.l.b16 %v1233
      %v1270 = vunpack.c.l.b16 %v1234
      %v1271 = vunpack.c.l.b16 %v1235
      %v1272 = vunpack.c.l.b16 %v1236
      %v1273 = vunpack.c.l.b16 %v1237
      %v1274 = vpack.c.b16 %v1259, %v1258
      %v1275 = vpack.c.b16 %v1261, %v1260
      %v1276 = vpack.c.b16 %v1263, %v1262
      %v1277 = vpack.c.b16 %v1265, %v1264
      %v1278 = vpack.c.b16 %v1267, %v1266
      %v1279 = vpack.c.b16 %v1269, %v1268
      %v1280 = vpack.c.b16 %v1271, %v1270
      %v1281 = vpack.c.b16 %v1273, %v1272
      %1290 = vmatpush.bf16.msra.mxu0 %v1281
      %1291 = vmatpush.bf16.msra.mxu0 %v1280
      %1292 = vmatpush.bf16.msra.mxu0 %v1279
      %1293 = vmatpush.bf16.msra.mxu0 %v1278
      %1294 = vmatpush.bf16.msra.mxu0 %v1277
      %1295 = vmatpush.bf16.msra.mxu0 %v1276
      %1296 = vmatpush.bf16.msra.mxu0 %v1275
      %1297 = vmatpush.bf16.msra.mxu0 %v1274
      %1298 = vmatmul.bf16.gmra.mxu0 %v1221
      %v1299 = vpop.f32.mrf.mxu0
      %v1300 = vadd.f32 %v1240, %v1299
      %v1301 = vpop.f32.mrf.mxu0
      %v1302 = vadd.f32 %v1240, %v1301
      %1303 = vdwg.mxu0
      %v1304 = vadd.f32 %v1107, %v1300
      %v1305 = vadd.f32 %v1108, %v1302
      %1306 = vst.msk [vmem:[%s646] sm:$0xff] %vm662, %v1304
      %1307 = vst.msk [vmem:[%s646 + $0x8] sm:$0xff] %vm662, %v1305
      %s1308 = smul.u32 2, %s28
      %p1309 = scmp.lt.s32.totalorder %s1308, 1
      %s1310 = scalar_select %p1309, %s1308, 1
      %s1311 = smul.addr %s1310, 8
      %s1312 = scalar_lea.vmem %s13, %s1311
      // Predicated region
      $region77: #{itra_forward.8} parent=71 // pred_check
        %p1313 = pneg %p392
      $region78: #{itra_forward.8} parent=71 // pred_check_branch
        %1315 = sbr.rel (%p1313) target = $region80
      $region79: #{itra_forward.8} parent=71 // pred_region
        %s1316 = smul.u32 2, %s28
      $region80: #{itra_forward.8} parent=71 // pred_fallthru
        _
      // Predicated region
      $region81: #{itra_forward.8} parent=71 // pred_check
        %p1317 = pneg %p392
      $region82: #{itra_forward.8} parent=71 // pred_check_branch
        %1319 = sbr.rel (%p1317) target = $region84
      $region83: #{itra_forward.8} parent=71 // pred_region
        %s1320 = smul.u32 2, %s28
        %p1321 = scmp.lt.s32.totalorder %s1320, 1
        %s1322 = scalar_select %p1321, %s1320, 1
        %s1323 = smul.addr %s1322, 8
        %s1324 = scalar_lea.vmem %s13, %s1323
      $region84: #{itra_forward.8} parent=71 // pred_fallthru
        _
    $region72: #{itra_forward.8} parent=5 // pred_fallthru
      _
    %p1325 = scmp.le.s32.totalorder 2, %s19
    // Predicated region
    $region85: #{itra_forward.8} parent=5 // pred_check
      %p1326 = pneg %p1325
    $region86: #{itra_forward.8} parent=5 // pred_check_branch
      %1328 = sbr.rel (%p1326) target = $region88
    $region87: #{itra_forward.8} parent=5 // pred_region
      %s1329 = ssub.s32 %s19, 2
    $region88: #{itra_forward.8} parent=5 // pred_fallthru
      _
  $region6: #{itra_forward.8} parent=0 // loop_footer
    %s23 = sadd.s32 1, %s19
  $region7: #{itra_forward.8} parent=0 // loop_footer_branch
    %18 = sbr.rel target = $region3
  $region8: #{itra_forward.8} parent=0 // loop_exit
    _

// kernel: itra_forward.5
$region0: #{itra_forward.5}
  #allocation0 [shape = 'u32[]', space=smem, size = 0x4, offset = 0x4, fixed_abs, tag = 'smem constant byte address 0x4 - core index']
  #allocation1 [shape = 'u32[72,128]{1,0:T(1,128)}', space=vmem, size = 0x9000, scoped, tag = 'internal scratch']
  %s0 = inlined_call_operand.vmem [shape: f32[2,8,32], index: 0, kind: input, shape index: {}, may-alias: {0,13}]
  %s1 = inlined_call_operand.vmem [shape: f32[2,1,32], index: 1, kind: input, shape index: {}]
  %s2 = inlined_call_operand.vmem [shape: f32[2,1,32], index: 2, kind: input, shape index: {}]
  %s3 = inlined_call_operand.vmem [shape: bf16[2,32,96], index: 3, kind: input, shape index: {}]
  %s4 = inlined_call_operand.vmem [shape: f32[2,1,96], index: 4, kind: input, shape index: {}]
  %s5 = inlined_call_operand.vmem [shape: bf16[2,32,32], index: 5, kind: input, shape index: {}]
  %s6 = inlined_call_operand.vmem [shape: f32[2,1,32], index: 6, kind: input, shape index: {}]
  %s7 = inlined_call_operand.vmem [shape: f32[2,1,32], index: 7, kind: input, shape index: {}]
  %s8 = inlined_call_operand.vmem [shape: f32[2,1,32], index: 8, kind: input, shape index: {}]
  %s9 = inlined_call_operand.vmem [shape: bf16[2,32,128], index: 9, kind: input, shape index: {}]
  %s10 = inlined_call_operand.vmem [shape: f32[2,1,128], index: 10, kind: input, shape index: {}]
  %s11 = inlined_call_operand.vmem [shape: bf16[2,128,32], index: 11, kind: input, shape index: {}]
  %s12 = inlined_call_operand.vmem [shape: f32[2,1,32], index: 12, kind: input, shape index: {}]
  %s13 = inlined_call_operand.vmem [shape: f32[2,8,32], index: 13, kind: output, shape index: {}, may-alias: {0,13}]
  %s14 = sld [smem:[#allocation0]]
  $region89: #{itra_forward.5} parent=0
    _
  %s16 = ssub.s32 1, %s14
  %s17 = scalar_select 0, %s16, %s14
  loop: start=0, step=1, limit=4
  $region2: #{itra_forward.5} parent=0 // loop_pre_header
    _
  $region3: #{itra_forward.5} parent=0 // loop_header
    %s19 = sphi 0, %s23
    %p20 = scmp.ge.s32.totalorder %s19, 4
    %s26 = sphi 0, %s38
    %s27 = sphi 0, %s34
    %s28 = sphi 0, %s26
    %s29 = sphi 0, %s27
    %s30 = sphi 0, %s28
    %s31 = sphi 0, %s29
    %s41 = sphi 0, %s43
    %s44 = sphi 0, %s41
    %s45 = sphi 0, %s44
    %s61 = sphi 0, %s45
    %s67 = sphi 0, %s69
    %s70 = sphi 0, %s67
    %s71 = sphi 0, %s70
    %s87 = sphi 0, %s71
    %s93 = sphi 0, %s95
    %s96 = sphi 0, %s93
    %s97 = sphi 0, %s96
    %s113 = sphi 0, %s97
    %s119 = sphi 0, %s121
    %s122 = sphi 0, %s119
    %s123 = sphi 0, %s122
    %s139 = sphi 0, %s123
    %s145 = sphi 0, %s147
    %s148 = sphi 0, %s145
    %s149 = sphi 0, %s148
    %s165 = sphi 0, %s149
    %s171 = sphi 0, %s173
    %s174 = sphi 0, %s171
    %s175 = sphi 0, %s174
    %s191 = sphi 0, %s175
    %s197 = sphi 0, %s199
    %s200 = sphi 0, %s197
    %s201 = sphi 0, %s200
    %s217 = sphi 0, %s201
    %s223 = sphi 0, %s225
    %s226 = sphi 0, %s223
    %s227 = sphi 0, %s226
    %s243 = sphi 0, %s227
    %s249 = sphi 0, %s251
    %s252 = sphi 0, %s249
    %s253 = sphi 0, %s252
    %s269 = sphi 0, %s253
    %s275 = sphi 0, %s277
    %s278 = sphi 0, %s275
    %s279 = sphi 0, %s278
    %s295 = sphi 0, %s279
    %s301 = sphi 0, %s303
    %s304 = sphi 0, %s301
    %s305 = sphi 0, %s304
    %s321 = sphi 0, %s305
    %s327 = sphi 0, %s329
    %s330 = sphi 0, %s327
    %s331 = sphi 0, %s330
    %s347 = sphi 0, %s331
    %s353 = sphi 0, %s355
    %s356 = sphi 0, %s353
    %s357 = sphi 0, %s356
    %s373 = sphi 0, %s357
    %s379 = sphi 0, %s381
    %s382 = sphi 0, %s379
    %s383 = sphi 0, %s382
    %s399 = sphi 0, %s383
  $region4: #{itra_forward.5} parent=0 // loop_header_branch
    %22 = sbr.rel (%p20) target = $region8
  $region5: #{itra_forward.5} parent=0 // loop_body
    %s24 = ssub.s32 %s19, 1
    %s25 = ssub.s32 %s19, 2
    %s32 = sadd.s32 1, %s27
    %p33 = scmp.ge.s32.totalorder %s32, 2
    %s34 = scalar_select %p33, 0, %s32
    %s35 = sadd.s32 1, %s26
    %s36 = scalar_select %p33, %s35, %s26
    %p37 = scmp.ge.s32.totalorder %s36, 1
    %s38 = scalar_select %p37, 0, %s36
    %s39 = ssub.s32 %s26, %s38
    %p40 = scmp.eq.s32.totalorder %s39, 0
    %s42 = sadd.s32 %s41, 1
    %s43 = scalar_select %p40, %s41, %s42
    %p46 = pneg %p40
    %p47 = scmp.eq.s32.totalorder %s19, 1
    %p48 = por %p46, %p47
    %p49 = scmp.ne.s32.totalorder %s41, %s44
    %p50 = scmp.eq.s32.totalorder %s19, 0
    %p51 = por %p49, %p50
    %p52 = scmp.ne.s32.totalorder %s41, %s44
    %p53 = scmp.eq.s32.totalorder %s24, 1
    %p54 = por %p52, %p53
    %p55 = scmp.ne.s32.totalorder %s44, %s45
    %p56 = scmp.eq.s32.totalorder %s24, 0
    %p57 = por %p55, %p56
    %p58 = scmp.ne.s32.totalorder %s44, %s45
    %p59 = scmp.eq.s32.totalorder %s25, 1
    %p60 = por %p58, %p59
    %p62 = scmp.ne.s32.totalorder %s45, %s61
    %p63 = scmp.eq.s32.totalorder %s25, 0
    %p64 = por %p62, %p63
    %s65 = ssub.s32 %s27, %s34
    %p66 = scmp.eq.s32.totalorder %s65, 0
    %s68 = sadd.s32 %s67, 1
    %s69 = scalar_select %p66, %s67, %s68
    %p72 = pneg %p66
    %p73 = scmp.eq.s32.totalorder %s19, 1
    %p74 = por %p72, %p73
    %p75 = scmp.ne.s32.totalorder %s67, %s70
    %p76 = scmp.eq.s32.totalorder %s19, 0
    %p77 = por %p75, %p76
    %p78 = scmp.ne.s32.totalorder %s67, %s70
    %p79 = scmp.eq.s32.totalorder %s24, 1
    %p80 = por %p78, %p79
    %p81 = scmp.ne.s32.totalorder %s70, %s71
    %p82 = scmp.eq.s32.totalorder %s24, 0
    %p83 = por %p81, %p82
    %p84 = scmp.ne.s32.totalorder %s70, %s71
    %p85 = scmp.eq.s32.totalorder %s25, 1
    %p86 = por %p84, %p85
    %p88 = scmp.ne.s32.totalorder %s71, %s87
    %p89 = scmp.eq.s32.totalorder %s25, 0
    %p90 = por %p88, %p89
    %s91 = ssub.s32 %s27, %s34
    %p92 = scmp.eq.s32.totalorder %s91, 0
    %s94 = sadd.s32 %s93, 1
    %s95 = scalar_select %p92, %s93, %s94
    %p98 = pneg %p92
    %p99 = scmp.eq.s32.totalorder %s19, 1
    %p100 = por %p98, %p99
    %p101 = scmp.ne.s32.totalorder %s93, %s96
    %p102 = scmp.eq.s32.totalorder %s19, 0
    %p103 = por %p101, %p102
    %p104 = scmp.ne.s32.totalorder %s93, %s96
    %p105 = scmp.eq.s32.totalorder %s24, 1
    %p106 = por %p104, %p105
    %p107 = scmp.ne.s32.totalorder %s96, %s97
    %p108 = scmp.eq.s32.totalorder %s24, 0
    %p109 = por %p107, %p108
    %p110 = scmp.ne.s32.totalorder %s96, %s97
    %p111 = scmp.eq.s32.totalorder %s25, 1
    %p112 = por %p110, %p111
    %p114 = scmp.ne.s32.totalorder %s97, %s113
    %p115 = scmp.eq.s32.totalorder %s25, 0
    %p116 = por %p114, %p115
    %s117 = ssub.s32 %s27, %s34
    %p118 = scmp.eq.s32.totalorder %s117, 0
    %s120 = sadd.s32 %s119, 1
    %s121 = scalar_select %p118, %s119, %s120
    %p124 = pneg %p118
    %p125 = scmp.eq.s32.totalorder %s19, 1
    %p126 = por %p124, %p125
    %p127 = scmp.ne.s32.totalorder %s119, %s122
    %p128 = scmp.eq.s32.totalorder %s19, 0
    %p129 = por %p127, %p128
    %p130 = scmp.ne.s32.totalorder %s119, %s122
    %p131 = scmp.eq.s32.totalorder %s24, 1
    %p132 = por %p130, %p131
    %p133 = scmp.ne.s32.totalorder %s122, %s123
    %p134 = scmp.eq.s32.totalorder %s24, 0
    %p135 = por %p133, %p134
    %p136 = scmp.ne.s32.totalorder %s122, %s123
    %p137 = scmp.eq.s32.totalorder %s25, 1
    %p138 = por %p136, %p137
    %p140 = scmp.ne.s32.totalorder %s123, %s139
    %p141 = scmp.eq.s32.totalorder %s25, 0
    %p142 = por %p140, %p141
    %s143 = ssub.s32 %s27, %s34
    %p144 = scmp.eq.s32.totalorder %s143, 0
    %s146 = sadd.s32 %s145, 1
    %s147 = scalar_select %p144, %s145, %s146
    %p150 = pneg %p144
    %p151 = scmp.eq.s32.totalorder %s19, 1
    %p152 = por %p150, %p151
    %p153 = scmp.ne.s32.totalorder %s145, %s148
    %p154 = scmp.eq.s32.totalorder %s19, 0
    %p155 = por %p153, %p154
    %p156 = scmp.ne.s32.totalorder %s145, %s148
    %p157 = scmp.eq.s32.totalorder %s24, 1
    %p158 = por %p156, %p157
    %p159 = scmp.ne.s32.totalorder %s148, %s149
    %p160 = scmp.eq.s32.totalorder %s24, 0
    %p161 = por %p159, %p160
    %p162 = scmp.ne.s32.totalorder %s148, %s149
    %p163 = scmp.eq.s32.totalorder %s25, 1
    %p164 = por %p162, %p163
    %p166 = scmp.ne.s32.totalorder %s149, %s165
    %p167 = scmp.eq.s32.totalorder %s25, 0
    %p168 = por %p166, %p167
    %s169 = ssub.s32 %s27, %s34
    %p170 = scmp.eq.s32.totalorder %s169, 0
    %s172 = sadd.s32 %s171, 1
    %s173 = scalar_select %p170, %s171, %s172
    %p176 = pneg %p170
    %p177 = scmp.eq.s32.totalorder %s19, 1
    %p178 = por %p176, %p177
    %p179 = scmp.ne.s32.totalorder %s171, %s174
    %p180 = scmp.eq.s32.totalorder %s19, 0
    %p181 = por %p179, %p180
    %p182 = scmp.ne.s32.totalorder %s171, %s174
    %p183 = scmp.eq.s32.totalorder %s24, 1
    %p184 = por %p182, %p183
    %p185 = scmp.ne.s32.totalorder %s174, %s175
    %p186 = scmp.eq.s32.totalorder %s24, 0
    %p187 = por %p185, %p186
    %p188 = scmp.ne.s32.totalorder %s174, %s175
    %p189 = scmp.eq.s32.totalorder %s25, 1
    %p190 = por %p188, %p189
    %p192 = scmp.ne.s32.totalorder %s175, %s191
    %p193 = scmp.eq.s32.totalorder %s25, 0
    %p194 = por %p192, %p193
    %s195 = ssub.s32 %s27, %s34
    %p196 = scmp.eq.s32.totalorder %s195, 0
    %s198 = sadd.s32 %s197, 1
    %s199 = scalar_select %p196, %s197, %s198
    %p202 = pneg %p196
    %p203 = scmp.eq.s32.totalorder %s19, 1
    %p204 = por %p202, %p203
    %p205 = scmp.ne.s32.totalorder %s197, %s200
    %p206 = scmp.eq.s32.totalorder %s19, 0
    %p207 = por %p205, %p206
    %p208 = scmp.ne.s32.totalorder %s197, %s200
    %p209 = scmp.eq.s32.totalorder %s24, 1
    %p210 = por %p208, %p209
    %p211 = scmp.ne.s32.totalorder %s200, %s201
    %p212 = scmp.eq.s32.totalorder %s24, 0
    %p213 = por %p211, %p212
    %p214 = scmp.ne.s32.totalorder %s200, %s201
    %p215 = scmp.eq.s32.totalorder %s25, 1
    %p216 = por %p214, %p215
    %p218 = scmp.ne.s32.totalorder %s201, %s217
    %p219 = scmp.eq.s32.totalorder %s25, 0
    %p220 = por %p218, %p219
    %s221 = ssub.s32 %s27, %s34
    %p222 = scmp.eq.s32.totalorder %s221, 0
    %s224 = sadd.s32 %s223, 1
    %s225 = scalar_select %p222, %s223, %s224
    %p228 = pneg %p222
    %p229 = scmp.eq.s32.totalorder %s19, 1
    %p230 = por %p228, %p229
    %p231 = scmp.ne.s32.totalorder %s223, %s226
    %p232 = scmp.eq.s32.totalorder %s19, 0
    %p233 = por %p231, %p232
    %p234 = scmp.ne.s32.totalorder %s223, %s226
    %p235 = scmp.eq.s32.totalorder %s24, 1
    %p236 = por %p234, %p235
    %p237 = scmp.ne.s32.totalorder %s226, %s227
    %p238 = scmp.eq.s32.totalorder %s24, 0
    %p239 = por %p237, %p238
    %p240 = scmp.ne.s32.totalorder %s226, %s227
    %p241 = scmp.eq.s32.totalorder %s25, 1
    %p242 = por %p240, %p241
    %p244 = scmp.ne.s32.totalorder %s227, %s243
    %p245 = scmp.eq.s32.totalorder %s25, 0
    %p246 = por %p244, %p245
    %s247 = ssub.s32 %s27, %s34
    %p248 = scmp.eq.s32.totalorder %s247, 0
    %s250 = sadd.s32 %s249, 1
    %s251 = scalar_select %p248, %s249, %s250
    %p254 = pneg %p248
    %p255 = scmp.eq.s32.totalorder %s19, 1
    %p256 = por %p254, %p255
    %p257 = scmp.ne.s32.totalorder %s249, %s252
    %p258 = scmp.eq.s32.totalorder %s19, 0
    %p259 = por %p257, %p258
    %p260 = scmp.ne.s32.totalorder %s249, %s252
    %p261 = scmp.eq.s32.totalorder %s24, 1
    %p262 = por %p260, %p261
    %p263 = scmp.ne.s32.totalorder %s252, %s253
    %p264 = scmp.eq.s32.totalorder %s24, 0
    %p265 = por %p263, %p264
    %p266 = scmp.ne.s32.totalorder %s252, %s253
    %p267 = scmp.eq.s32.totalorder %s25, 1
    %p268 = por %p266, %p267
    %p270 = scmp.ne.s32.totalorder %s253, %s269
    %p271 = scmp.eq.s32.totalorder %s25, 0
    %p272 = por %p270, %p271
    %s273 = ssub.s32 %s27, %s34
    %p274 = scmp.eq.s32.totalorder %s273, 0
    %s276 = sadd.s32 %s275, 1
    %s277 = scalar_select %p274, %s275, %s276
    %p280 = pneg %p274
    %p281 = scmp.eq.s32.totalorder %s19, 1
    %p282 = por %p280, %p281
    %p283 = scmp.ne.s32.totalorder %s275, %s278
    %p284 = scmp.eq.s32.totalorder %s19, 0
    %p285 = por %p283, %p284
    %p286 = scmp.ne.s32.totalorder %s275, %s278
    %p287 = scmp.eq.s32.totalorder %s24, 1
    %p288 = por %p286, %p287
    %p289 = scmp.ne.s32.totalorder %s278, %s279
    %p290 = scmp.eq.s32.totalorder %s24, 0
    %p291 = por %p289, %p290
    %p292 = scmp.ne.s32.totalorder %s278, %s279
    %p293 = scmp.eq.s32.totalorder %s25, 1
    %p294 = por %p292, %p293
    %p296 = scmp.ne.s32.totalorder %s279, %s295
    %p297 = scmp.eq.s32.totalorder %s25, 0
    %p298 = por %p296, %p297
    %s299 = ssub.s32 %s27, %s34
    %p300 = scmp.eq.s32.totalorder %s299, 0
    %s302 = sadd.s32 %s301, 1
    %s303 = scalar_select %p300, %s301, %s302
    %p306 = pneg %p300
    %p307 = scmp.eq.s32.totalorder %s19, 1
    %p308 = por %p306, %p307
    %p309 = scmp.ne.s32.totalorder %s301, %s304
    %p310 = scmp.eq.s32.totalorder %s19, 0
    %p311 = por %p309, %p310
    %p312 = scmp.ne.s32.totalorder %s301, %s304
    %p313 = scmp.eq.s32.totalorder %s24, 1
    %p314 = por %p312, %p313
    %p315 = scmp.ne.s32.totalorder %s304, %s305
    %p316 = scmp.eq.s32.totalorder %s24, 0
    %p317 = por %p315, %p316
    %p318 = scmp.ne.s32.totalorder %s304, %s305
    %p319 = scmp.eq.s32.totalorder %s25, 1
    %p320 = por %p318, %p319
    %p322 = scmp.ne.s32.totalorder %s305, %s321
    %p323 = scmp.eq.s32.totalorder %s25, 0
    %p324 = por %p322, %p323
    %s325 = ssub.s32 %s27, %s34
    %p326 = scmp.eq.s32.totalorder %s325, 0
    %s328 = sadd.s32 %s327, 1
    %s329 = scalar_select %p326, %s327, %s328
    %p332 = pneg %p326
    %p333 = scmp.eq.s32.totalorder %s19, 1
    %p334 = por %p332, %p333
    %p335 = scmp.ne.s32.totalorder %s327, %s330
    %p336 = scmp.eq.s32.totalorder %s19, 0
    %p337 = por %p335, %p336
    %p338 = scmp.ne.s32.totalorder %s327, %s330
    %p339 = scmp.eq.s32.totalorder %s24, 1
    %p340 = por %p338, %p339
    %p341 = scmp.ne.s32.totalorder %s330, %s331
    %p342 = scmp.eq.s32.totalorder %s24, 0
    %p343 = por %p341, %p342
    %p344 = scmp.ne.s32.totalorder %s330, %s331
    %p345 = scmp.eq.s32.totalorder %s25, 1
    %p346 = por %p344, %p345
    %p348 = scmp.ne.s32.totalorder %s331, %s347
    %p349 = scmp.eq.s32.totalorder %s25, 0
    %p350 = por %p348, %p349
    %s351 = ssub.s32 %s27, %s34
    %p352 = scmp.eq.s32.totalorder %s351, 0
    %s354 = sadd.s32 %s353, 1
    %s355 = scalar_select %p352, %s353, %s354
    %p358 = pneg %p352
    %p359 = scmp.eq.s32.totalorder %s19, 1
    %p360 = por %p358, %p359
    %p361 = scmp.ne.s32.totalorder %s353, %s356
    %p362 = scmp.eq.s32.totalorder %s19, 0
    %p363 = por %p361, %p362
    %p364 = scmp.ne.s32.totalorder %s353, %s356
    %p365 = scmp.eq.s32.totalorder %s24, 1
    %p366 = por %p364, %p365
    %p367 = scmp.ne.s32.totalorder %s356, %s357
    %p368 = scmp.eq.s32.totalorder %s24, 0
    %p369 = por %p367, %p368
    %p370 = scmp.ne.s32.totalorder %s356, %s357
    %p371 = scmp.eq.s32.totalorder %s25, 1
    %p372 = por %p370, %p371
    %p374 = scmp.ne.s32.totalorder %s357, %s373
    %p375 = scmp.eq.s32.totalorder %s25, 0
    %p376 = por %p374, %p375
    %s377 = ssub.s32 %s26, %s38
    %p378 = scmp.eq.s32.totalorder %s377, 0
    %s380 = sadd.s32 %s379, 1
    %s381 = scalar_select %p378, %s379, %s380
    %p384 = pneg %p378
    %p385 = scmp.eq.s32.totalorder %s19, 1
    %p386 = por %p384, %p385
    %p387 = scmp.ne.s32.totalorder %s379, %s382
    %p388 = scmp.eq.s32.totalorder %s19, 0
    %p389 = por %p387, %p388
    %p390 = scmp.ne.s32.totalorder %s379, %s382
    %p391 = scmp.eq.s32.totalorder %s24, 1
    %p392 = por %p390, %p391
    %p393 = scmp.ne.s32.totalorder %s382, %s383
    %p394 = scmp.eq.s32.totalorder %s24, 0
    %p395 = por %p393, %p394
    %p396 = scmp.ne.s32.totalorder %s382, %s383
    %p397 = scmp.eq.s32.totalorder %s25, 1
    %p398 = por %p396, %p397
    %p400 = scmp.ne.s32.totalorder %s383, %s399
    %p401 = scmp.eq.s32.totalorder %s25, 0
    %p402 = por %p400, %p401
    %p403 = scmp.le.s32.totalorder 1, %s19
    %p404 = scmp.lt.s32.totalorder %s19, 3
    %p405 = pnand %p403, %p404
    %p406 = pneg %p405
    // Predicated region
    $region9: #{itra_forward.5} parent=5 // pred_check
      _
    $region10: #{itra_forward.5} parent=5 // pred_check_branch
      %408 = sbr.rel (%p405) target = $region12
    $region11: #{itra_forward.5} parent=5 // pred_region
      %s409 = ssub.s32 %s19, 1
      // Predicated region
      $region13: #{itra_forward.5} parent=11 // pred_check
        %p410 = pneg %p57
      $region14: #{itra_forward.5} parent=11 // pred_check_branch
        %412 = sbr.rel (%p410) target = $region16
      $region15: #{itra_forward.5} parent=11 // pred_region
        %s413 = smul.u32 2, %s28
        %p414 = scmp.lt.s32.totalorder %s413, 1
        %s415 = scalar_select %p414, %s413, 1
        %s416 = smul.addr %s415, 8
        %s417 = scalar_lea.vmem %s0, %s416
        %s418 = smul.u32 2, %s28
      $region16: #{itra_forward.5} parent=11 // pred_fallthru
        _
    $region12: #{itra_forward.5} parent=5 // pred_fallthru
      _
    %p419 = scmp.lt.s32.totalorder %s19, 2
    // Predicated region
    $region17: #{itra_forward.5} parent=5 // pred_check
      %p420 = pneg %p419
    $region18: #{itra_forward.5} parent=5 // pred_check_branch
      %422 = sbr.rel (%p420) target = $region20
    $region19: #{itra_forward.5} parent=5 // pred_region
      // Predicated region
      $region21: #{itra_forward.5} parent=19 // pred_check
        %p423 = pneg %p77
      $region22: #{itra_forward.5} parent=19 // pred_check_branch
        %425 = sbr.rel (%p423) target = $region24
      $region23: #{itra_forward.5} parent=19 // pred_region
        %p426 = scmp.lt.s32.totalorder %s27, 1
        %s427 = scalar_select %p426, %s27, 1
        %s428 = scalar_lea.vmem %s1, %s427
      $region24: #{itra_forward.5} parent=19 // pred_fallthru
        _
      // Predicated region
      $region25: #{itra_forward.5} parent=19 // pred_check
        %p429 = pneg %p103
      $region26: #{itra_forward.5} parent=19 // pred_check_branch
        %431 = sbr.rel (%p429) target = $region28
      $region27: #{itra_forward.5} parent=19 // pred_region
        %p432 = scmp.lt.s32.totalorder %s27, 1
        %s433 = scalar_select %p432, %s27, 1
        %s434 = scalar_lea.vmem %s2, %s433
      $region28: #{itra_forward.5} parent=19 // pred_fallthru
        _
      // Predicated region
      $region29: #{itra_forward.5} parent=19 // pred_check
        %p435 = pneg %p129
      $region30: #{itra_forward.5} parent=19 // pred_check_branch
        %437 = sbr.rel (%p435) target = $region32
      $region31: #{itra_forward.5} parent=19 // pred_region
        %p438 = scmp.lt.s32.totalorder %s27, 1
        %s439 = scalar_select %p438, %s27, 1
        %s440 = smul.addr %s439, 4
        %s441 = smul.addr %s440, 4
        %s442 = scalar_lea.vmem %s3, %s441
      $region32: #{itra_forward.5} parent=19 // pred_fallthru
        _
      // Predicated region
      $region33: #{itra_forward.5} parent=19 // pred_check
        %p443 = pneg %p155
      $region34: #{itra_forward.5} parent=19 // pred_check_branch
        %445 = sbr.rel (%p443) target = $region36
      $region35: #{itra_forward.5} parent=19 // pred_region
        %p446 = scmp.lt.s32.totalorder %s27, 1
        %s447 = scalar_select %p446, %s27, 1
        %s448 = scalar_lea.vmem %s4, %s447
      $region36: #{itra_forward.5} parent=19 // pred_fallthru
        _
      // Predicated region
      $region37: #{itra_forward.5} parent=19 // pred_check
        %p449 = pneg %p181
      $region38: #{itra_forward.5} parent=19 // pred_check_branch
        %451 = sbr.rel (%p449) target = $region40
      $region39: #{itra_forward.5} parent=19 // pred_region
        %p452 = scmp.lt.s32.totalorder %s27, 1
        %s453 = scalar_select %p452, %s27, 1
        %s454 = smul.addr %s453, 4
        %s455 = smul.addr %s454, 4
        %s456 = scalar_lea.vmem %s5, %s455
      $region40: #{itra_forward.5} parent=19 // pred_fallthru
        _
      // Predicated region
      $region41: #{itra_forward.5} parent=19 // pred_check
        %p457 = pneg %p207
      $region42: #{itra_forward.5} parent=19 // pred_check_branch
        %459 = sbr.rel (%p457) target = $region44
      $region43: #{itra_forward.5} parent=19 // pred_region
        %p460 = scmp.lt.s32.totalorder %s27, 1
        %s461 = scalar_select %p460, %s27, 1
        %s462 = scalar_lea.vmem %s6, %s461
      $region44: #{itra_forward.5} parent=19 // pred_fallthru
        _
      // Predicated region
      $region45: #{itra_forward.5} parent=19 // pred_check
        %p463 = pneg %p233
      $region46: #{itra_forward.5} parent=19 // pred_check_branch
        %465 = sbr.rel (%p463) target = $region48
      $region47: #{itra_forward.5} parent=19 // pred_region
        %p466 = scmp.lt.s32.totalorder %s27, 1
        %s467 = scalar_select %p466, %s27, 1
        %s468 = scalar_lea.vmem %s7, %s467
      $region48: #{itra_forward.5} parent=19 // pred_fallthru
        _
      // Predicated region
      $region49: #{itra_forward.5} parent=19 // pred_check
        %p469 = pneg %p259
      $region50: #{itra_forward.5} parent=19 // pred_check_branch
        %471 = sbr.rel (%p469) target = $region52
      $region51: #{itra_forward.5} parent=19 // pred_region
        %p472 = scmp.lt.s32.totalorder %s27, 1
        %s473 = scalar_select %p472, %s27, 1
        %s474 = scalar_lea.vmem %s8, %s473
      $region52: #{itra_forward.5} parent=19 // pred_fallthru
        _
      // Predicated region
      $region53: #{itra_forward.5} parent=19 // pred_check
        %p475 = pneg %p285
      $region54: #{itra_forward.5} parent=19 // pred_check_branch
        %477 = sbr.rel (%p475) target = $region56
      $region55: #{itra_forward.5} parent=19 // pred_region
        %p478 = scmp.lt.s32.totalorder %s27, 1
        %s479 = scalar_select %p478, %s27, 1
        %s480 = smul.addr %s479, 4
        %s481 = smul.addr %s480, 4
        %s482 = scalar_lea.vmem %s9, %s481
      $region56: #{itra_forward.5} parent=19 // pred_fallthru
        _
      // Predicated region
      $region57: #{itra_forward.5} parent=19 // pred_check
        %p483 = pneg %p311
      $region58: #{itra_forward.5} parent=19 // pred_check_branch
        %485 = sbr.rel (%p483) target = $region60
      $region59: #{itra_forward.5} parent=19 // pred_region
        %p486 = scmp.lt.s32.totalorder %s27, 1
        %s487 = scalar_select %p486, %s27, 1
        %s488 = scalar_lea.vmem %s10, %s487
      $region60: #{itra_forward.5} parent=19 // pred_fallthru
        _
      // Predicated region
      $region61: #{itra_forward.5} parent=19 // pred_check
        %p489 = pneg %p337
      $region62: #{itra_forward.5} parent=19 // pred_check_branch
        %491 = sbr.rel (%p489) target = $region64
      $region63: #{itra_forward.5} parent=19 // pred_region
        %p492 = scmp.lt.s32.totalorder %s27, 1
        %s493 = scalar_select %p492, %s27, 1
        %s494 = smul.addr %s493, 16
        %s495 = smul.addr %s494, 4
        %s496 = scalar_lea.vmem %s11, %s495
      $region64: #{itra_forward.5} parent=19 // pred_fallthru
        _
      // Predicated region
      $region65: #{itra_forward.5} parent=19 // pred_check
        %p497 = pneg %p363
      $region66: #{itra_forward.5} parent=19 // pred_check_branch
        %499 = sbr.rel (%p497) target = $region68
      $region67: #{itra_forward.5} parent=19 // pred_region
        %p500 = scmp.lt.s32.totalorder %s27, 1
        %s501 = scalar_select %p500, %s27, 1
        %s502 = scalar_lea.vmem %s12, %s501
      $region68: #{itra_forward.5} parent=19 // pred_fallthru
        _
    $region20: #{itra_forward.5} parent=5 // pred_fallthru
      _
    %p503 = scmp.le.s32.totalorder 1, %s19
    %p504 = scmp.lt.s32.totalorder %s19, 3
    %p505 = pnand %p503, %p504
    %p506 = pneg %p505
    // Predicated region
    $region69: #{itra_forward.5} parent=5 // pred_check
      _
    $region70: #{itra_forward.5} parent=5 // pred_check_branch
      %508 = sbr.rel (%p505) target = $region72
    $region71: #{itra_forward.5} parent=5 // pred_region
      %s509 = ssub.s32 %s19, 1
      %s510 = smul.u32 2, %s28
      %p511 = scmp.lt.s32.totalorder %s510, 1
      %s512 = scalar_select %p511, %s510, 1
      %s513 = smul.addr %s512, 8
      %s514 = scalar_lea.vmem %s0, %s513
      %p515 = pneg %p57
      %p516 = pneg %p54
      %p517 = scmp.lt.s32.totalorder %s29, 1
      %s518 = scalar_select %p517, %s29, 1
      %s519 = scalar_lea.vmem %s1, %s518
      %p520 = pneg %p83
      %p521 = pneg %p80
      %p522 = scmp.lt.s32.totalorder %s29, 1
      %s523 = scalar_select %p522, %s29, 1
      %s524 = scalar_lea.vmem %s2, %s523
      %p525 = pneg %p109
      %p526 = pneg %p106
      %p527 = scmp.lt.s32.totalorder %s29, 1
      %s528 = scalar_select %p527, %s29, 1
      %s529 = smul.addr %s528, 4
      %s530 = smul.addr %s529, 4
      %s531 = scalar_lea.vmem %s3, %s530
      %p532 = pneg %p135
      %p533 = pneg %p132
      %p534 = scmp.lt.s32.totalorder %s29, 1
      %s535 = scalar_select %p534, %s29, 1
      %s536 = scalar_lea.vmem %s4, %s535
      %p537 = pneg %p161
      %p538 = pneg %p158
      %p539 = scmp.lt.s32.totalorder %s29, 1
      %s540 = scalar_select %p539, %s29, 1
      %s541 = smul.addr %s540, 4
      %s542 = smul.addr %s541, 4
      %s543 = scalar_lea.vmem %s5, %s542
      %p544 = pneg %p187
      %p545 = pneg %p184
      %p546 = scmp.lt.s32.totalorder %s29, 1
      %s547 = scalar_select %p546, %s29, 1
      %s548 = scalar_lea.vmem %s6, %s547
      %p549 = pneg %p213
      %p550 = pneg %p210
      %p551 = scmp.lt.s32.totalorder %s29, 1
      %s552 = scalar_select %p551, %s29, 1
      %s553 = scalar_lea.vmem %s7, %s552
      %p554 = pneg %p239
      %p555 = pneg %p236
      %p556 = scmp.lt.s32.totalorder %s29, 1
      %s557 = scalar_select %p556, %s29, 1
      %s558 = scalar_lea.vmem %s8, %s557
      %p559 = pneg %p265
      %p560 = pneg %p262
      %p561 = scmp.lt.s32.totalorder %s29, 1
      %s562 = scalar_select %p561, %s29, 1
      %s563 = smul.addr %s562, 4
      %s564 = smul.addr %s563, 4
      %s565 = scalar_lea.vmem %s9, %s564
      %p566 = pneg %p291
      %p567 = pneg %p288
      %p568 = scmp.lt.s32.totalorder %s29, 1
      %s569 = scalar_select %p568, %s29, 1
      %s570 = scalar_lea.vmem %s10, %s569
      %p571 = pneg %p317
      %p572 = pneg %p314
      %p573 = scmp.lt.s32.totalorder %s29, 1
      %s574 = scalar_select %p573, %s29, 1
      %s575 = smul.addr %s574, 16
      %s576 = smul.addr %s575, 4
      %s577 = scalar_lea.vmem %s11, %s576
      %p578 = pneg %p343
      %p579 = pneg %p340
      %p580 = scmp.lt.s32.totalorder %s29, 1
      %s581 = scalar_select %p580, %s29, 1
      %s582 = scalar_lea.vmem %s12, %s581
      %p583 = pneg %p369
      %p584 = pneg %p366
      %p585 = pneg %p395
      %p586 = pneg %p392
      %s587 = smul.u32 2, %s28
      %p588 = scmp.lt.s32.totalorder %s587, 1
      %s589 = scalar_select %p588, %s587, 1
      %s590 = smul.addr %s589, 8
      %s591 = scalar_lea.vmem %s13, %s590
      %s592 = smul.u32 2, %s28
      %p593 = scmp.lt.s32.totalorder %s592, 1
      %s594 = scalar_select %p593, %s592, 1
      %s595 = smul.addr %s594, 8
      %s596 = scalar_lea.vmem %s0, %s595
      %s597 = smul.u32 2, %s28
      %p598 = scmp.lt.s32.totalorder %s29, 1
      %s599 = scalar_select %p598, %s29, 1
      %s600 = scalar_lea.vmem %s1, %s599
      %p601 = scmp.lt.s32.totalorder %s29, 1
      %s602 = scalar_select %p601, %s29, 1
      %s603 = scalar_lea.vmem %s2, %s602
      %p604 = scmp.lt.s32.totalorder %s29, 1
      %s605 = scalar_select %p604, %s29, 1
      %s606 = smul.addr %s605, 4
      %s607 = smul.addr %s606, 4
      %s608 = scalar_lea.vmem %s3, %s607
      %p609 = scmp.lt.s32.totalorder %s29, 1
      %s610 = scalar_select %p609, %s29, 1
      %s611 = scalar_lea.vmem %s4, %s610
      %p612 = scmp.lt.s32.totalorder %s29, 1
      %s613 = scalar_select %p612, %s29, 1
      %s614 = smul.addr %s613, 4
      %s615 = smul.addr %s614, 4
      %s616 = scalar_lea.vmem %s5, %s615
      %p617 = scmp.lt.s32.totalorder %s29, 1
      %s618 = scalar_select %p617, %s29, 1
      %s619 = scalar_lea.vmem %s6, %s618
      %p620 = scmp.lt.s32.totalorder %s29, 1
      %s621 = scalar_select %p620, %s29, 1
      %s622 = scalar_lea.vmem %s7, %s621
      %p623 = scmp.lt.s32.totalorder %s29, 1
      %s624 = scalar_select %p623, %s29, 1
      %s625 = scalar_lea.vmem %s8, %s624
      %p626 = scmp.lt.s32.totalorder %s29, 1
      %s627 = scalar_select %p626, %s29, 1
      %s628 = smul.addr %s627, 4
      %s629 = smul.addr %s628, 4
      %s630 = scalar_lea.vmem %s9, %s629
      %p631 = scmp.lt.s32.totalorder %s29, 1
      %s632 = scalar_select %p631, %s29, 1
      %s633 = scalar_lea.vmem %s10, %s632
      %p634 = scmp.lt.s32.totalorder %s29, 1
      %s635 = scalar_select %p634, %s29, 1
      %s636 = smul.addr %s635, 16
      %s637 = smul.addr %s636, 4
      %s638 = scalar_lea.vmem %s11, %s637
      %p639 = scmp.lt.s32.totalorder %s29, 1
      %s640 = scalar_select %p639, %s29, 1
      %s641 = scalar_lea.vmem %s12, %s640
      %s642 = smul.u32 2, %s28
      %p643 = scmp.lt.s32.totalorder %s642, 1
      %s644 = scalar_select %p643, %s642, 1
      %s645 = smul.addr %s644, 8
      %s646 = scalar_lea.vmem %s13, %s645
      %s647 = smul.u32 2, %s28
      %p649 = scmp.eq.s32.totalorder %s29, 0
      // Predicated region
      $region73: #{itra_forward.5} parent=71 // pred_check
        %p650 = pneg %p649
      $region74: #{itra_forward.5} parent=71 // pred_check_branch
        %652 = sbr.rel (%p650) target = $region76
      $region75: #{itra_forward.5} parent=71 // pred_region
        %v653 = vld [vmem:[%s596] sm:$0xff]
        %v654 = vld [vmem:[%s596 + $0x8] sm:$0xff]
        %vm655 = vcmask 261120
        %656 = vst.msk [vmem:[%s646] sm:$0xff] %vm655, %v653
        %657 = vst.msk [vmem:[%s646 + $0x8] sm:$0xff] %vm655, %v654
      $region76: #{itra_forward.5} parent=71 // pred_fallthru
        _
      %v658 = vld [vmem:[%s646] sm:$0xff]
      %v659 = vld [vmem:[%s646 + $0x8] sm:$0xff]
      %v660 = vld [vmem:[%s600] sm:$0x1]
      %v661 = vld [vmem:[%s603] sm:$0x1]
      %vm662 = vcmask 261120
      %v663 = vsel %vm662, %v658, 0.0
      %664 = vadd.xlane.f32.xlu0 %v663
      %v665 = vpop.xlane.xlu0 %664
      %v666 = vsel %vm662, %v659, 0.0
      %667 = vadd.xlane.f32.xlu0 %v666
      %v668 = vpop.xlane.xlu0 %667
      %v669 = vrcp.pop 32.0
      %v670 = vmul.f32 32.0, %v669
      %v671 = vsub.f32 1.0, %v670
      %v672 = vmul.f32 %v669, %v671
      %v673 = vadd.f32 %v669, %v672
      %vm674 = vweird.f32 %v669
      %v675 = vsel %vm674, %v669, %v673
      %v676 = vmul.f32 %v665, %v675
      %v677 = vmul.f32 %v668, %v675
      %v678 = vsub.f32 %v658, %v676
      %v679 = vsub.f32 %v659, %v677
      %v680 = vmul.f32 %v678, %v678
      %v681 = vmul.f32 %v679, %v679
      %v682 = vsel %vm662, %v680, 0.0
      %683 = vadd.xlane.f32.xlu0 %v682
      %v684 = vpop.xlane.xlu0 %683
      %v685 = vsel %vm662, %v681, 0.0
      %686 = vadd.xlane.f32.xlu0 %v685
      %v687 = vpop.xlane.xlu0 %686
      %v688 = vmul.f32 %v684, %v675
      %v689 = vmul.f32 %v687, %v675
      %v690 = vadd.f32 %v688, 1e-05
      %v691 = vadd.f32 %v689, 1e-05
      %v692 = vrsqrt.pop %v690
      %v693 = vmul.f32 %v692, %v690
      %v694 = vmul.f32 %v693, %v692
      %v695 = vmul.f32 0.5, %v694
      %v696 = vsub.f32 1.5, %v695
      %v697 = vmul.f32 %v692, %v696
      %vm698 = vweird.f32 %v690
      %vm699 = vweird.f32 %v692
      %vm700 = vmor %vm698, %vm699
      %v701 = vsel %vm700, %v692, %v697
      %v702 = vrsqrt.pop %v691
      %v703 = vmul.f32 %v702, %v691
      %v704 = vmul.f32 %v703, %v702
      %v705 = vmul.f32 0.5, %v704
      %v706 = vsub.f32 1.5, %v705
      %v707 = vmul.f32 %v702, %v706
      %vm708 = vweird.f32 %v691
      %vm709 = vweird.f32 %v702
      %vm710 = vmor %vm708, %vm709
      %v711 = vsel %vm710, %v702, %v707
      %v712 = vmul.f32 %v678, %v701
      %v713 = vmul.f32 %v679, %v711
      %v715 = vperm.slane %v660, 0
      %v717 = vmul.f32 %v712, %v715
      %v718 = vmul.f32 %v713, %v715
      %v720 = vperm.slane %v661, 0
      %v722 = vadd.f32 %v717, %v720
      %v723 = vadd.f32 %v718, %v720
      %v724 = vpack.c.bf16 %v723, %v722
      %v725 = vld [vmem:[%s608] sm:$0xf]
      %v726 = vld [vmem:[%s608 + $0x4] sm:$0xf]
      %v727 = vld [vmem:[%s608 + $0x8] sm:$0xf]
      %v728 = vld [vmem:[%s608 + $0xc] sm:$0xf]
      %v729 = vld [vmem:[%s611] sm:$0x1]
      %v731 = vperm.slane %v729, 0
      %v737 = vunpack.c.l.b16 %v725
      %v738 = vunpack.c.l.b16 %v726
      %v739 = vunpack.c.l.b16 %v727
      %v740 = vunpack.c.l.b16 %v728
      %v741 = vpack.c.b16 %v738, %v737
      %v742 = vpack.c.b16 %v740, %v739
      %v746 = vsel %vm662, %v724, 0
      %748 = vmatpush.bf16.msra.mxu0 0
      %749 = vmatpush.bf16.msra.mxu0 0
      %750 = vmatpush.bf16.msra.mxu0 0
      %751 = vmatpush.bf16.msra.mxu0 0
      %752 = vmatpush.bf16.msra.mxu0 0
      %753 = vmatpush.bf16.msra.mxu0 0
      %754 = vmatpush.bf16.msra.mxu0 %v742
      %755 = vmatpush.bf16.msra.mxu0 %v741
      %756 = vmatmul.bf16.gmra.mxu0 %v746
      %v757 = vpop.f32.mrf.mxu0
      %v758 = vadd.f32 %v731, %v757
      %v759 = vpop.f32.mrf.mxu0
      %v760 = vadd.f32 %v731, %v759
      %761 = vdwg.mxu0
      %v762 = vmul.f32 %v758, 0.25
      %v763 = vmul.f32 %v760, 0.25
      %v764 = vpack.c.bf16 %v762, %v762
      %v765 = vpack.c.bf16 %v763, %v763
      %v766 = vpack.c.bf16 %v758, %v758
      %v767 = vpack.c.bf16 %v760, %v760
      %v768 = vlaneseq
      %v769 = vshrl.u32 %v768, 7
      %v770 = vlaneseq
      %v771 = vand.u32 %v770, 127
      %vm772 = vcmp.lt.s32.totalorder %v771, 8
      %vm773 = vcmp.le.s32.totalorder %v771, %v769
      %vm774 = vmand %vm772, %vm773
      %v775 = vsel %vm774, 0.0, -1e+09
      %v777 = vunpack.c.l.b16 %v766
      %v778 = vpack.c.b16 %v777, %v777
      %779 = vrot.lane.b32.xlu0 %v778, 96
      %v780 = vpop.permute.xlu0 %779
      %vm781 = vcmask 130048
      %v783 = vsel %vm781, %v764, 0
      %v786 = vsel %vm781, %v780, 0
      %788 = vmatpush.bf16.xpose.msra.mxu0 0
      %789 = vmatpush.bf16.xpose.msra.mxu0 0
      %790 = vmatpush.bf16.xpose.msra.mxu0 0
      %791 = vmatpush.bf16.xpose.msra.mxu0 0
      %792 = vmatpush.bf16.xpose.msra.mxu0 0
      %793 = vmatpush.bf16.xpose.msra.mxu0 0
      %794 = vmatpush.bf16.xpose.msra.mxu0 0
      %795 = vmatpush.bf16.xpose.msra.mxu0 %v786
      %796 = vmatmul.bf16.gmra.mxu0 %v783
      %v797 = vpop.f32.mrf.mxu0
      %v798 = vadd.f32 %v775, %v797
      %v799 = vpop.f32.mrf.mxu0
      %800 = vdwg.mxu0
      %v802 = vunpack.c.l.b16 %v767
      %v803 = vpack.c.b16 %v802, %v802
      %804 = vrot.lane.b32.xlu0 %v803, 96
      %v805 = vpop.permute.xlu0 %804
      %v807 = vsel %vm781, %v765, 0
      %v810 = vsel %vm781, %v805, 0
      %812 = vmatpush.bf16.xpose.msra.mxu0 0
      %813 = vmatpush.bf16.xpose.msra.mxu0 0
      %814 = vmatpush.bf16.xpose.msra.mxu0 0
      %815 = vmatpush.bf16.xpose.msra.mxu0 0
      %816 = vmatpush.bf16.xpose.msra.mxu0 0
      %817 = vmatpush.bf16.xpose.msra.mxu0 0
      %818 = vmatpush.bf16.xpose.msra.mxu0 0
      %819 = vmatpush.bf16.xpose.msra.mxu0 %v810
      %820 = vmatmul.bf16.gmra.mxu0 %v807
      %v821 = vpop.f32.mrf.mxu0
      %v822 = vadd.f32 %v775, %v821
      %v823 = vpop.f32.mrf.mxu0
      %824 = vdwg.mxu0
      %vm825 = vcmask 64512
      %v826 = vsel %vm825, %v798, -inf
      %827 = vmax.xlane.f32.xlu0 %v826
      %v828 = vpop.xlane.xlu0 %827
      %v829 = vsel %vm825, %v822, -inf
      %830 = vmax.xlane.f32.xlu0 %v829
      %v831 = vpop.xlane.xlu0 %830
      %v832 = vsub.f32 %v798, %v828
      %v833 = vsub.f32 %v822, %v831
      %v834 = vmul.f32 %v832, 1.442695
      %v835 = vpow.pop %v834
      %v836 = vmul.f32 %v833, 1.442695
      %v837 = vpow.pop %v836
      %v838 = vsel %vm825, %v835, 0.0
      %839 = vadd.xlane.f32.xlu0 %v838
      %v840 = vpop.xlane.xlu0 %839
      %v841 = vsel %vm825, %v837, 0.0
      %842 = vadd.xlane.f32.xlu0 %v841
      %v843 = vpop.xlane.xlu0 %842
      %v844 = vrcp.pop %v840
      %v845 = vmul.f32 %v840, %v844
      %v846 = vsub.f32 1.0, %v845
      %v847 = vmul.f32 %v844, %v846
      %v848 = vadd.f32 %v844, %v847
      %vm849 = vweird.f32 %v840
      %vm850 = vweird.f32 %v844
      %vm851 = vmor %vm849, %vm850
      %v852 = vsel %vm851, %v844, %v848
      %v853 = vand.u32 2147483647, %v840
      %vm854 = vcmp.eq.f32.partialorder %v853, 8.507059e+37
      %v855 = vand.u32 %v840, 2147483648
      %v856 = vor.u32 1.1754944e-38, %v855
      %v857 = vsel %vm854, %v856, %v852
      %v858 = vmul.f32 %v835, %v857
      %v859 = vrcp.pop %v843
      %v860 = vmul.f32 %v843, %v859
      %v861 = vsub.f32 1.0, %v860
      %v862 = vmul.f32 %v859, %v861
      %v863 = vadd.f32 %v859, %v862
      %vm864 = vweird.f32 %v843
      %vm865 = vweird.f32 %v859
      %vm866 = vmor %vm864, %vm865
      %v867 = vsel %vm866, %v859, %v863
      %v868 = vand.u32 2147483647, %v843
      %vm869 = vcmp.eq.f32.partialorder %v868, 8.507059e+37
      %v870 = vand.u32 %v843, 2147483648
      %v871 = vor.u32 1.1754944e-38, %v870
      %v872 = vsel %vm869, %v871, %v867
      %v873 = vmul.f32 %v837, %v872
      %v874 = vpack.c.bf16 %v858, %v858
      %v875 = vpack.c.bf16 %v873, %v873
      %876 = vrot.lane.b32.xlu0 %v778, 64
      %v877 = vpop.permute.xlu0 %876
      %v879 = vsel %vm825, %v874, 0
      %vm881 = vcmask 1043456
      %v883 = vsel %vm881, %v877, 0
      %885 = vmatpush.bf16.msra.mxu0 0
      %886 = vmatpush.bf16.msra.mxu0 0
      %887 = vmatpush.bf16.msra.mxu0 0
      %888 = vmatpush.bf16.msra.mxu0 0
      %889 = vmatpush.bf16.msra.mxu0 0
      %890 = vmatpush.bf16.msra.mxu0 0
      %891 = vmatpush.bf16.msra.mxu0 0
      %892 = vmatpush.bf16.msra.mxu0 %v883
      %893 = vmatmul.bf16.gmra.mxu0 %v879
      %v894 = vpop.f32.mrf.mxu0
      %v895 = vadd.f32 0.0, %v894
      %v896 = vpop.f32.mrf.mxu0
      %897 = vdwg.mxu0
      %898 = vrot.lane.b32.xlu0 %v803, 64
      %v899 = vpop.permute.xlu0 %898
      %v901 = vsel %vm825, %v875, 0
      %v904 = vsel %vm881, %v899, 0
      %906 = vmatpush.bf16.msra.mxu0 0
      %907 = vmatpush.bf16.msra.mxu0 0
      %908 = vmatpush.bf16.msra.mxu0 0
      %909 = vmatpush.bf16.msra.mxu0 0
      %910 = vmatpush.bf16.msra.mxu0 0
      %911 = vmatpush.bf16.msra.mxu0 0
      %912 = vmatpush.bf16.msra.mxu0 0
      %913 = vmatpush.bf16.msra.mxu0 %v904
      %914 = vmatmul.bf16.gmra.mxu0 %v901
      %v915 = vpop.f32.mrf.mxu0
      %v916 = vadd.f32 0.0, %v915
      %v917 = vpop.f32.mrf.mxu0
      %918 = vdwg.mxu0
      %v920 = vunpack.c.l.b16 %v764
      %v921 = vpack.c.b16 %v920, %v920
      %922 = vrot.lane.b32.xlu0 %v921, 112
      %v923 = vpop.permute.xlu0 %922
      %924 = vrot.lane.b32.xlu0 %v778, 80
      %v925 = vpop.permute.xlu0 %924
      %v927 = vsel %vm781, %v923, 0
      %v930 = vsel %vm781, %v925, 0
      %932 = vmatpush.bf16.xpose.msra.mxu0 0
      %933 = vmatpush.bf16.xpose.msra.mxu0 0
      %934 = vmatpush.bf16.xpose.msra.mxu0 0
      %935 = vmatpush.bf16.xpose.msra.mxu0 0
      %936 = vmatpush.bf16.xpose.msra.mxu0 0
      %937 = vmatpush.bf16.xpose.msra.mxu0 0
      %938 = vmatpush.bf16.xpose.msra.mxu0 0
      %939 = vmatpush.bf16.xpose.msra.mxu0 %v930
      %940 = vmatmul.bf16.gmra.mxu0 %v927
      %v941 = vpop.f32.mrf.mxu0
      %v942 = vadd.f32 %v775, %v941
      %v943 = vpop.f32.mrf.mxu0
      %944 = vdwg.mxu0
      %v946 = vunpack.c.l.b16 %v765
      %v947 = vpack.c.b16 %v946, %v946
      %948 = vrot.lane.b32.xlu0 %v947, 112
      %v949 = vpop.permute.xlu0 %948
      %950 = vrot.lane.b32.xlu0 %v803, 80
      %v951 = vpop.permute.xlu0 %950
      %v953 = vsel %vm781, %v949, 0
      %v956 = vsel %vm781, %v951, 0
      %958 = vmatpush.bf16.xpose.msra.mxu0 0
      %959 = vmatpush.bf16.xpose.msra.mxu0 0
      %960 = vmatpush.bf16.xpose.msra.mxu0 0
      %961 = vmatpush.bf16.xpose.msra.mxu0 0
      %962 = vmatpush.bf16.xpose.msra.mxu0 0
      %963 = vmatpush.bf16.xpose.msra.mxu0 0
      %964 = vmatpush.bf16.xpose.msra.mxu0 0
      %965 = vmatpush.bf16.xpose.msra.mxu0 %v956
      %966 = vmatmul.bf16.gmra.mxu0 %v953
      %v967 = vpop.f32.mrf.mxu0
      %v968 = vadd.f32 %v775, %v967
      %v969 = vpop.f32.mrf.mxu0
      %970 = vdwg.mxu0
      %v971 = vsel %vm825, %v942, -inf
      %972 = vmax.xlane.f32.xlu0 %v971
      %v973 = vpop.xlane.xlu0 %972
      %v974 = vsel %vm825, %v968, -inf
      %975 = vmax.xlane.f32.xlu0 %v974
      %v976 = vpop.xlane.xlu0 %975
      %v977 = vsub.f32 %v942, %v973
      %v978 = vsub.f32 %v968, %v976
      %v979 = vmul.f32 %v977, 1.442695
      %v980 = vpow.pop %v979
      %v981 = vmul.f32 %v978, 1.442695
      %v982 = vpow.pop %v981
      %v983 = vsel %vm825, %v980, 0.0
      %984 = vadd.xlane.f32.xlu0 %v983
      %v985 = vpop.xlane.xlu0 %984
      %v986 = vsel %vm825, %v982, 0.0
      %987 = vadd.xlane.f32.xlu0 %v986
      %v988 = vpop.xlane.xlu0 %987
      %v989 = vrcp.pop %v985
      %v990 = vmul.f32 %v985, %v989
      %v991 = vsub.f32 1.0, %v990
      %v992 = vmul.f32 %v989, %v991
      %v993 = vadd.f32 %v989, %v992
      %vm994 = vweird.f32 %v985
      %vm995 = vweird.f32 %v989
      %vm996 = vmor %vm994, %vm995
      %v997 = vsel %vm996, %v989, %v993
      %v998 = vand.u32 2147483647, %v985
      %vm999 = vcmp.eq.f32.partialorder %v998, 8.507059e+37
      %v1000 = vand.u32 %v985, 2147483648
      %v1001 = vor.u32 1.1754944e-38, %v1000
      %v1002 = vsel %vm999, %v1001, %v997
      %v1003 = vmul.f32 %v980, %v1002
      %v1004 = vrcp.pop %v988
      %v1005 = vmul.f32 %v988, %v1004
      %v1006 = vsub.f32 1.0, %v1005
      %v1007 = vmul.f32 %v1004, %v1006
      %v1008 = vadd.f32 %v1004, %v1007
      %vm1009 = vweird.f32 %v988
      %vm1010 = vweird.f32 %v1004
      %vm1011 = vmor %vm1009, %vm1010
      %v1012 = vsel %vm1011, %v1004, %v1008
      %v1013 = vand.u32 2147483647, %v988
      %vm1014 = vcmp.eq.f32.partialorder %v1013, 8.507059e+37
      %v1015 = vand.u32 %v988, 2147483648
      %v1016 = vor.u32 1.1754944e-38, %v1015
      %v1017 = vsel %vm1014, %v1016, %v1012
      %v1018 = vmul.f32 %v982, %v1017
      %v1019 = vpack.c.bf16 %v1003, %v1003
      %v1020 = vpack.c.bf16 %v1018, %v1018
      %1021 = vrot.lane.b32.xlu0 %v778, 48
      %v1022 = vpop.permute.xlu0 %1021
      %v1024 = vsel %vm825, %v1019, 0
      %v1027 = vsel %vm881, %v1022, 0
      %1029 = vmatpush.bf16.msra.mxu0 0
      %1030 = vmatpush.bf16.msra.mxu0 0
      %1031 = vmatpush.bf16.msra.mxu0 0
      %1032 = vmatpush.bf16.msra.mxu0 0
      %1033 = vmatpush.bf16.msra.mxu0 0
      %1034 = vmatpush.bf16.msra.mxu0 0
      %1035 = vmatpush.bf16.msra.mxu0 0
      %1036 = vmatpush.bf16.msra.mxu0 %v1027
      %1037 = vmatmul.bf16.gmra.mxu0 %v1024
      %v1038 = vpop.f32.mrf.mxu0
      %v1039 = vadd.f32 0.0, %v1038
      %v1040 = vpop.f32.mrf.mxu0
      %1041 = vdwg.mxu0
      %1042 = vrot.lane.b32.xlu0 %v803, 48
      %v1043 = vpop.permute.xlu0 %1042
      %v1045 = vsel %vm825, %v1020, 0
      %v1048 = vsel %vm881, %v1043, 0
      %1050 = vmatpush.bf16.msra.mxu0 0
      %1051 = vmatpush.bf16.msra.mxu0 0
      %1052 = vmatpush.bf16.msra.mxu0 0
      %1053 = vmatpush.bf16.msra.mxu0 0
      %1054 = vmatpush.bf16.msra.mxu0 0
      %1055 = vmatpush.bf16.msra.mxu0 0
      %1056 = vmatpush.bf16.msra.mxu0 0
      %1057 = vmatpush.bf16.msra.mxu0 %v1048
      %1058 = vmatmul.bf16.gmra.mxu0 %v1045
      %v1059 = vpop.f32.mrf.mxu0
      %v1060 = vadd.f32 0.0, %v1059
      %v1061 = vpop.f32.mrf.mxu0
      %1062 = vdwg.mxu0
      %1065 = vrot.lane.b32.xlu0 %v1039, 16
      %v1066 = vpop.permute.xlu0 %1065
      %1067 = vrot.lane.b32.xlu0 %v1060, 16
      %v1068 = vpop.permute.xlu0 %1067
      %v1071 = vsel %vm781, %v895, %v1066
      %v1072 = vsel %vm781, %v916, %v1068
      %v1073 = vpack.c.bf16 %v1072, %v1071
      %v1074 = vld [vmem:[%s616] sm:$0xf]
      %v1075 = vld [vmem:[%s616 + $0x4] sm:$0xf]
      %v1076 = vld [vmem:[%s616 + $0x8] sm:$0xf]
      %v1077 = vld [vmem:[%s616 + $0xc] sm:$0xf]
      %v1078 = vld [vmem:[%s619] sm:$0x1]
      %v1080 = vperm.slane %v1078, 0
      %v1086 = vunpack.c.l.b16 %v1074
      %v1087 = vunpack.c.l.b16 %v1075
      %v1088 = vunpack.c.l.b16 %v1076
      %v1089 = vunpack.c.l.b16 %v1077
      %v1090 = vpack.c.b16 %v1087, %v1086
      %v1091 = vpack.c.b16 %v1089, %v1088
      %v1095 = vsel %vm662, %v1073, 0
      %1097 = vmatpush.bf16.msra.mxu0 0
      %1098 = vmatpush.bf16.msra.mxu0 0
      %1099 = vmatpush.bf16.msra.mxu0 0
      %1100 = vmatpush.bf16.msra.mxu0 0
      %1101 = vmatpush.bf16.msra.mxu0 0
      %1102 = vmatpush.bf16.msra.mxu0 0
      %1103 = vmatpush.bf16.msra.mxu0 %v1091
      %1104 = vmatpush.bf16.msra.mxu0 %v1090
      %1105 = vmatmul.bf16.gmra.mxu0 %v1095
      %v1106 = vpop.f32.mrf.mxu0
      %v1107 = vadd.f32 %v1080, %v1106
      %v1108 = vpop.f32.mrf.mxu0
      %v1109 = vadd.f32 %v1080, %v1108
      %1110 = vdwg.mxu0
      %v1111 = vadd.f32 %v658, %v1107
      %v1112 = vadd.f32 %v659, %v1109
      %v1113 = vld [vmem:[%s622] sm:$0x1]
      %v1114 = vld [vmem:[%s625] sm:$0x1]
      %v1115 = vsel %vm662, %v1111, 0.0
      %1116 = vadd.xlane.f32.xlu0 %v1115
      %v1117 = vpop.xlane.xlu0 %1116
      %v1118 = vsel %vm662, %v1112, 0.0
      %1119 = vadd.xlane.f32.xlu0 %v1118
      %v1120 = vpop.xlane.xlu0 %1119
      %v1121 = vmul.f32 %v1117, %v675
      %v1122 = vmul.f32 %v1120, %v675
      %v1123 = vsub.f32 %v1111, %v1121
      %v1124 = vsub.f32 %v1112, %v1122
      %v1125 = vmul.f32 %v1123, %v1123
      %v1126 = vmul.f32 %v1124, %v1124
      %v1127 = vsel %vm662, %v1125, 0.0
      %1128 = vadd.xlane.f32.xlu0 %v1127
      %v1129 = vpop.xlane.xlu0 %1128
      %v1130 = vsel %vm662, %v1126, 0.0
      %1131 = vadd.xlane.f32.xlu0 %v1130
      %v1132 = vpop.xlane.xlu0 %1131
      %v1133 = vmul.f32 %v1129, %v675
      %v1134 = vmul.f32 %v1132, %v675
      %v1135 = vadd.f32 %v1133, 1e-05
      %v1136 = vadd.f32 %v1134, 1e-05
      %v1137 = vrsqrt.pop %v1135
      %v1138 = vmul.f32 %v1137, %v1135
      %v1139 = vmul.f32 %v1138, %v1137
      %v1140 = vmul.f32 0.5, %v1139
      %v1141 = vsub.f32 1.5, %v1140
      %v1142 = vmul.f32 %v1137, %v1141
      %vm1143 = vweird.f32 %v1135
      %vm1144 = vweird.f32 %v1137
      %vm1145 = vmor %vm1143, %vm1144
      %v1146 = vsel %vm1145, %v1137, %v1142
      %v1147 = vrsqrt.pop %v1136
      %v1148 = vmul.f32 %v1147, %v1136
      %v1149 = vmul.f32 %v1148, %v1147
      %v1150 = vmul.f32 0.5, %v1149
      %v1151 = vsub.f32 1.5, %v1150
      %v1152 = vmul.f32 %v1147, %v1151
      %vm1153 = vweird.f32 %v1136
      %vm1154 = vweird.f32 %v1147
      %vm1155 = vmor %vm1153, %vm1154
      %v1156 = vsel %vm1155, %v1147, %v1152
      %v1157 = vmul.f32 %v1123, %v1146
      %v1158 = vmul.f32 %v1124, %v1156
      %v1160 = vperm.slane %v1113, 0
      %v1162 = vmul.f32 %v1157, %v1160
      %v1163 = vmul.f32 %v1158, %v1160
      %v1165 = vperm.slane %v1114, 0
      %v1167 = vadd.f32 %v1162, %v1165
      %v1168 = vadd.f32 %v1163, %v1165
      %v1169 = vpack.c.bf16 %v1168, %v1167
      %v1170 = vld [vmem:[%s630] sm:$0xf]
      %v1171 = vld [vmem:[%s630 + $0x4] sm:$0xf]
      %v1172 = vld [vmem:[%s630 + $0x8] sm:$0xf]
      %v1173 = vld [vmem:[%s630 + $0xc] sm:$0xf]
      %v1174 = vld [vmem:[%s633] sm:$0x1]
      %v1176 = vperm.slane %v1174, 0
      %v1182 = vunpack.c.l.b16 %v1170
      %v1183 = vunpack.c.l.b16 %v1171
      %v1184 = vunpack.c.l.b16 %v1172
      %v1185 = vunpack.c.l.b16 %v1173
      %v1186 = vpack.c.b16 %v1183, %v1182
      %v1187 = vpack.c.b16 %v1185, %v1184
      %v1191 = vsel %vm662, %v1169, 0
      %1193 = vmatpush.bf16.msra.mxu0 0
      %1194 = vmatpush.bf16.msra.mxu0 0
      %1195 = vmatpush.bf16.msra.mxu0 0
      %1196 = vmatpush.bf16.msra.mxu0 0
      %1197 = vmatpush.bf16.msra.mxu0 0
      %1198 = vmatpush.bf16.msra.mxu0 0
      %1199 = vmatpush.bf16.msra.mxu0 %v1187
      %1200 = vmatpush.bf16.msra.mxu0 %v1186
      %1201 = vmatmul.bf16.gmra.mxu0 %v1191
      %v1202 = vpop.f32.mrf.mxu0
      %v1203 = vadd.f32 %v1176, %v1202
      %v1204 = vpop.f32.mrf.mxu0
      %v1205 = vadd.f32 %v1176, %v1204
      %1206 = vdwg.mxu0
      %v1207 = vmul.f32 %v1203, %v1203
      %v1208 = vmul.f32 %v1205, %v1205
      %v1209 = vmul.f32 %v1203, %v1207
      %v1210 = vmul.f32 %v1205, %v1208
      %v1211 = vmul.f32 %v1209, 0.044715
      %v1212 = vmul.f32 %v1210, 0.044715
      %v1213 = vadd.f32 %v1203, %v1211
      %v1214 = vadd.f32 %v1205, %v1212
      %v1215 = vmul.f32 %v1213, 0.7978846
      %v1216 = vmul.f32 %v1214, 0.7978846
      %v1217 = vtanh.pop %v1215
      %v1218 = vtanh.pop %v1216
      %v1219 = vadd.f32 %v1217, 1.0
      %v1220 = vadd.f32 %v1218, 1.0
      %v1221 = vmul.f32 %v1219, 0.5
      %v1222 = vmul.f32 %v1220, 0.5
      %v1223 = vmul.f32 %v1203, %v1221
      %v1224 = vmul.f32 %v1205, %v1222
      %v1225 = vpack.c.bf16 %v1224, %v1223
      %v1226 = vld [vmem:[%s638] sm:$0xf]
      %v1227 = vld [vmem:[%s638 + $0x4] sm:$0xf]
      %v1228 = vld [vmem:[%s638 + $0x8] sm:$0xf]
      %v1229 = vld [vmem:[%s638 + $0xc] sm:$0xf]
      %v1230 = vld [vmem:[%s638 + $0x10] sm:$0xf]
      %v1231 = vld [vmem:[%s638 + $0x14] sm:$0xf]
      %v1232 = vld [vmem:[%s638 + $0x18] sm:$0xf]
      %v1233 = vld [vmem:[%s638 + $0x1c] sm:$0xf]
      %v1234 = vld [vmem:[%s638 + $0x20] sm:$0xf]
      %v1235 = vld [vmem:[%s638 + $0x24] sm:$0xf]
      %v1236 = vld [vmem:[%s638 + $0x28] sm:$0xf]
      %v1237 = vld [vmem:[%s638 + $0x2c] sm:$0xf]
      %v1238 = vld [vmem:[%s638 + $0x30] sm:$0xf]
      %v1239 = vld [vmem:[%s638 + $0x34] sm:$0xf]
      %v1240 = vld [vmem:[%s638 + $0x38] sm:$0xf]
      %v1241 = vld [vmem:[%s638 + $0x3c] sm:$0xf]
      %v1242 = vld [vmem:[%s641] sm:$0x1]
      %v1244 = vperm.slane %v1242, 0
      %v1262 = vunpack.c.l.b16 %v1226
      %v1263 = vunpack.c.l.b16 %v1227
      %v1264 = vunpack.c.l.b16 %v1228
      %v1265 = vunpack.c.l.b16 %v1229
      %v1266 = vunpack.c.l.b16 %v1230
      %v1267 = vunpack.c.l.b16 %v1231
      %v1268 = vunpack.c.l.b16 %v1232
      %v1269 = vunpack.c.l.b16 %v1233
      %v1270 = vunpack.c.l.b16 %v1234
      %v1271 = vunpack.c.l.b16 %v1235
      %v1272 = vunpack.c.l.b16 %v1236
      %v1273 = vunpack.c.l.b16 %v1237
      %v1274 = vunpack.c.l.b16 %v1238
      %v1275 = vunpack.c.l.b16 %v1239
      %v1276 = vunpack.c.l.b16 %v1240
      %v1277 = vunpack.c.l.b16 %v1241
      %v1278 = vpack.c.b16 %v1263, %v1262
      %v1279 = vpack.c.b16 %v1265, %v1264
      %v1280 = vpack.c.b16 %v1267, %v1266
      %v1281 = vpack.c.b16 %v1269, %v1268
      %v1282 = vpack.c.b16 %v1271, %v1270
      %v1283 = vpack.c.b16 %v1273, %v1272
      %v1284 = vpack.c.b16 %v1275, %v1274
      %v1285 = vpack.c.b16 %v1277, %v1276
      %1294 = vmatpush.bf16.msra.mxu0 %v1285
      %1295 = vmatpush.bf16.msra.mxu0 %v1284
      %1296 = vmatpush.bf16.msra.mxu0 %v1283
      %1297 = vmatpush.bf16.msra.mxu0 %v1282
      %1298 = vmatpush.bf16.msra.mxu0 %v1281
      %1299 = vmatpush.bf16.msra.mxu0 %v1280
      %1300 = vmatpush.bf16.msra.mxu0 %v1279
      %1301 = vmatpush.bf16.msra.mxu0 %v1278
      %1302 = vmatmul.bf16.gmra.mxu0 %v1225
      %v1303 = vpop.f32.mrf.mxu0
      %v1304 = vadd.f32 %v1244, %v1303
      %v1305 = vpop.f32.mrf.mxu0
      %v1306 = vadd.f32 %v1244, %v1305
      %1307 = vdwg.mxu0
      %v1308 = vadd.f32 %v1111, %v1304
      %v1309 = vadd.f32 %v1112, %v1306
      %1310 = vst.msk [vmem:[%s646] sm:$0xff] %vm662, %v1308
      %1311 = vst.msk [vmem:[%s646 + $0x8] sm:$0xff] %vm662, %v1309
      %s1312 = smul.u32 2, %s28
      %p1313 = scmp.lt.s32.totalorder %s1312, 1
      %s1314 = scalar_select %p1313, %s1312, 1
      %s1315 = smul.addr %s1314, 8
      %s1316 = scalar_lea.vmem %s13, %s1315
      // Predicated region
      $region77: #{itra_forward.5} parent=71 // pred_check
        %p1317 = pneg %p392
      $region78: #{itra_forward.5} parent=71 // pred_check_branch
        %1319 = sbr.rel (%p1317) target = $region80
      $region79: #{itra_forward.5} parent=71 // pred_region
        %s1320 = smul.u32 2, %s28
      $region80: #{itra_forward.5} parent=71 // pred_fallthru
        _
      // Predicated region
      $region81: #{itra_forward.5} parent=71 // pred_check
        %p1321 = pneg %p392
      $region82: #{itra_forward.5} parent=71 // pred_check_branch
        %1323 = sbr.rel (%p1321) target = $region84
      $region83: #{itra_forward.5} parent=71 // pred_region
        %s1324 = smul.u32 2, %s28
        %p1325 = scmp.lt.s32.totalorder %s1324, 1
        %s1326 = scalar_select %p1325, %s1324, 1
        %s1327 = smul.addr %s1326, 8
        %s1328 = scalar_lea.vmem %s13, %s1327
      $region84: #{itra_forward.5} parent=71 // pred_fallthru
        _
    $region72: #{itra_forward.5} parent=5 // pred_fallthru
      _
    %p1329 = scmp.le.s32.totalorder 2, %s19
    // Predicated region
    $region85: #{itra_forward.5} parent=5 // pred_check
      %p1330 = pneg %p1329
    $region86: #{itra_forward.5} parent=5 // pred_check_branch
      %1332 = sbr.rel (%p1330) target = $region88
    $region87: #{itra_forward.5} parent=5 // pred_region
      %s1333 = ssub.s32 %s19, 2
    $region88: #{itra_forward.5} parent=5 // pred_fallthru
      _
  $region6: #{itra_forward.5} parent=0 // loop_footer
    %s23 = sadd.s32 1, %s19
  $region7: #{itra_forward.5} parent=0 // loop_footer_branch
    %18 = sbr.rel target = $region3
  $region8: #{itra_forward.5} parent=0 // loop_exit
    _

</llo_original>
